<compile_context>
chip_gen: v7x
topology: tpu7x:2x2x1
jax: 0.10.0
libtpu: 0.0.40
codegen_flags: <defaults>
</compile_context>

<pallas_src>
import functools

import jax
import jax.numpy as jnp
from jax.experimental import pallas as pl
from jax.experimental.pallas import tpu as pltpu


# ------------------------------ Pallas kernel -------------------------------
# Per grid step (BT images), all rows ordered (spatial row major, image minor):
#   x:        (32*BT, 128) bf16   lane = ci*32 + w (zero-padded 96..127)
#   conv1 out (28*BT, 168) f32    lane = co*28 + ow   -> pool -> (14*BT, 84)
#   conv2 out (10*BT, 160) f32    lane = co*10 + ow   -> pool -> ( 5*BT, 80)
#   fc1 (BT,120) -> fc2 (BT,84) -> fc3 (BT, NPAD=128)

def _lenet_kernel(x_ref,
                  m1_ref, cb1_ref, ge1_ref, go1_ref,
                  m2_ref, cb2_ref, ge2_ref, go2_ref,
                  fw1_ref, fb1_ref, fw2_ref, fb2_ref, fw3_ref, fb3_ref,
                  o_ref, *, bt):
    f32 = jnp.float32
    bf16 = jnp.bfloat16
    dot = functools.partial(jnp.dot, preferred_element_type=f32)

    x = x_ref[0]                                              # (32*bt, 128) bf16

    # ---- conv1 + bias + ReLU: 5 sublane-aligned banded matmuls, M = 28*bt ----
    acc1 = dot(x[0:28 * bt, :], m1_ref[0])
    for i in range(1, 5):
        acc1 = acc1 + dot(x[i * bt:(i + 28) * bt, :], m1_ref[i])
    y1 = jnp.maximum(acc1 + cb1_ref[...], 0.0)                # (28*bt, 168) f32

    # ---- 2x2 max pool: rows = aligned bt-block pair max (VPU), cols = 0/1 matmuls ----
    y1 = y1.reshape(14, 2 * bt, 168)
    yr1 = jnp.maximum(y1[:, :bt, :], y1[:, bt:, :]).reshape(14 * bt, 168)
    yr1 = yr1.astype(bf16)
    x2 = jnp.maximum(dot(yr1, ge1_ref[...]),
                     dot(yr1, go1_ref[...])).astype(bf16)     # (14*bt, 84)

    # ---- conv2 + bias + ReLU ----
    acc2 = dot(x2[0:10 * bt, :], m2_ref[0])
    for i in range(1, 5):
        acc2 = acc2 + dot(x2[i * bt:(i + 10) * bt, :], m2_ref[i])
    y2 = jnp.maximum(acc2 + cb2_ref[...], 0.0)                # (10*bt, 160) f32

    # ---- 2x2 max pool ----
    y2 = y2.reshape(5, 2 * bt, 160)
    yr2 = jnp.maximum(y2[:, :bt, :], y2[:, bt:, :]).reshape(5 * bt, 160)
    yr2 = yr2.astype(bf16)
    x3 = jnp.maximum(dot(yr2, ge2_ref[...]),
                     dot(yr2, go2_ref[...])).astype(bf16)     # (5*bt, 80)

    # ---- fc1 + ReLU: contract the 5 pooled row-blocks with pre-permuted weights ----
    h = dot(x3[0:bt, :], fw1_ref[0])
    for r in range(1, 5):
        h = h + dot(x3[r * bt:(r + 1) * bt, :], fw1_ref[r])
    h = jnp.maximum(h + fb1_ref[...], 0.0).astype(bf16)       # (bt, 120)

    # ---- fc2 + ReLU, fc3 (output lane-padded to npad) ----
    h = jnp.maximum(dot(h, fw2_ref[...]) + fb2_ref[...], 0.0).astype(bf16)  # (bt, 84)
    o_ref[0] = dot(h, fw3_ref[...]) + fb3_ref[...]            # (bt, npad) f32


# --------------------------- wrapper-side packing ----------------------------

def _conv_toeplitz(w, in_w):
    """Conv weight (Cout,Cin,kh,kw) -> (kh, Cin*in_w, Cout*out_w) band matrices.

    M[i, ci*in_w + w_, co*out_w + ow] = w[co, ci, i, w_ - ow]  (0 <= w_-ow < kw)
    """
    cout, cin, kh, kw = w.shape
    out_w = in_w - kw + 1
    wi = jnp.arange(in_w)
    owi = jnp.arange(out_w)
    ji = jnp.arange(kw)
    sel = (wi[None, :, None] == owi[None, None, :] + ji[:, None, None])
    sel = sel.astype(w.dtype)                                 # (kw, in_w, out_w)
    m = jnp.einsum('ocij,jwv->icwov', w, sel)                 # (kh,Cin,in_w,Cout,out_w)
    return m.reshape(kh, cin * in_w, cout * out_w)


def _pool_col_select(n_in, parity, dtype):
    # (n_in, n_in//2): G[2t+parity, t] = 1 (valid lane pooling since out_w is even)
    r = jnp.arange(n_in)[:, None]
    c = jnp.arange(n_in // 2)[None, :]
    return (r == 2 * c + parity).astype(dtype)


def prepare_kernel_params(params, num_classes):
    """Pack PyTorch-layout params into kernel-ready (bf16 matmul) operands."""
    f32, bf16 = jnp.float32, jnp.bfloat16
    npad = max(128, ((num_classes + 127) // 128) * 128)

    m1 = _conv_toeplitz(params["conv1_w"], 32)                      # (5, 96, 168)
    m1 = jnp.pad(m1, ((0, 0), (0, 128 - 96), (0, 0))).astype(bf16)  # K padded to 128
    cb1 = jnp.repeat(params["conv1_b"], 28)[None, :].astype(f32)    # (1, 168)
    m2 = _conv_toeplitz(params["conv2_w"], 14).astype(bf16)         # (5, 84, 160)
    cb2 = jnp.repeat(params["conv2_b"], 10)[None, :].astype(f32)    # (1, 160)

    ge1 = _pool_col_select(168, 0, bf16)
    go1 = _pool_col_select(168, 1, bf16)                            # (168, 84)
    ge2 = _pool_col_select(160, 0, bf16)
    go2 = _pool_col_select(160, 1, bf16)                            # (160, 80)

    # fc1 weight is stored (400, 120) with row = co*25 + qr*5 + qc (torch flatten).
    # Re-order to (qr, co*5 + qc, n) to match the pooled (5*BT, 80) activation layout.
    fw1 = (params["fc1_w"].reshape(16, 5, 5, -1)
           .transpose(1, 0, 2, 3).reshape(5, 80, -1).astype(bf16))  # (5, 80, 120)
    fb1 = params["fc1_b"][None, :].astype(f32)                      # (1, 120)
    fw2 = params["fc2_w"].astype(bf16)                              # (120, 84)
    fb2 = params["fc2_b"][None, :].astype(f32)                      # (1, 84)
    fw3 = (jnp.zeros((84, npad), f32)
           .at[:, :num_classes].set(params["fc3_w"]).astype(bf16))  # (84, npad)
    fb3 = jnp.zeros((1, npad), f32).at[0, :num_classes].set(params["fc3_b"])

    return (m1, cb1, ge1, go1, m2, cb2, ge2, go2,
            fw1, fb1, fw2, fb2, fw3, fb3)


# --------------------------------- forward -----------------------------------

def lenet_forward(weights, x, num_classes, batch_tile=16):
    """x: (B, 3, 32, 32) NCHW f32 -> logits (B, num_classes)."""
    B = x.shape[0]
    npad = weights[-1].shape[1]
    bt = batch_tile
    assert bt % 8 == 0, "batch_tile must be a multiple of 8 (16+ recommended for bf16)"

    nt = -(-B // bt)          # grid steps
    Bp = nt * bt              # batch padded up to a multiple of the tile

    # NCHW -> (B, 32, 96): rows in sublanes, channels concatenated along lanes.
    x_t = jnp.transpose(x, (0, 2, 1, 3)).reshape(B, 32, 3 * 32)
    # Pad batch to Bp and lanes to 128 (lane-dense vld, K=128 for conv1).
    x_t = jnp.pad(x_t, ((0, Bp - B), (0, 0), (0, 128 - 96)))
    # Pack each batch tile with rows ordered (h major, image minor): (nt, 32*bt, 128).
    x_pk = (x_t.reshape(nt, bt, 32, 128).transpose(0, 2, 1, 3)
            .reshape(nt, 32 * bt, 128).astype(jnp.bfloat16))

    in_specs = [pl.BlockSpec((1, 32 * bt, 128), lambda t: (t, 0, 0))]
    for wgt in weights:   # whole-array blocks, constant index_map -> VMEM-resident
        in_specs.append(pl.BlockSpec(wgt.shape, lambda t, _n=wgt.ndim: (0,) * _n))

    out = pl.pallas_call(
        functools.partial(_lenet_kernel, bt=bt),
        out_shape=jax.ShapeDtypeStruct((nt, bt, npad), jnp.float32),
        grid_spec=pltpu.PrefetchScalarGridSpec(
            num_scalar_prefetch=0,
            grid=(nt,),
            in_specs=in_specs,
            out_specs=pl.BlockSpec((1, bt, npad), lambda t: (t, 0, 0)),
        ),
        compiler_params=pltpu.CompilerParams(dimension_semantics=("parallel",)),
    )(x_pk, *weights)

    return out.reshape(Bp, npad)[:B, :num_classes]


# -------------------------------- parameters ---------------------------------

def _uniform(key, shape, bound):
    return jax.random.uniform(key, shape, jnp.float32, -bound, bound)


def init_params(num_classes, key):
    ks = jax.random.split(key, 10)

    def conv_init(kw_, kb_, cout, cin, k):
        bound = 1.0 / jnp.sqrt(cin * k * k)
        return _uniform(kw_, (cout, cin, k, k), bound), _uniform(kb_, (cout,), bound)

    def fc_init(kw_, kb_, fan_in, fan_out):
        bound = 1.0 / jnp.sqrt(fan_in)
        # stored as (fan_in, fan_out), i.e. PyTorch weight transposed
        return _uniform(kw_, (fan_in, fan_out), bound), _uniform(kb_, (fan_out,), bound)

    p = {}
    p["conv1_w"], p["conv1_b"] = conv_init(ks[0], ks[1], 6, 3, 5)
    p["conv2_w"], p["conv2_b"] = conv_init(ks[2], ks[3], 16, 6, 5)
    p["fc1_w"], p["fc1_b"] = fc_init(ks[4], ks[5], 16 * 5 * 5, 120)
    p["fc2_w"], p["fc2_b"] = fc_init(ks[6], ks[7], 120, 84)
    p["fc3_w"], p["fc3_b"] = fc_init(ks[8], ks[9], 84, num_classes)
    return p


# ------------------------- pure-JAX reference (check) -------------------------

def net_reference(params, x):
    dn = ("NCHW", "OIHW", "NCHW")
    hp = jax.lax.Precision.HIGHEST
    y = jax.lax.conv_general_dilated(x, params["conv1_w"], (1, 1), "VALID",
                                     dimension_numbers=dn, precision=hp)
    y = jnp.maximum(y + params["conv1_b"][None, :, None, None], 0.0)
    y = jax.lax.reduce_window(y, -jnp.inf, jax.lax.max, (1, 1, 2, 2), (1, 1, 2, 2), "VALID")
    y = jax.lax.conv_general_dilated(y, params["conv2_w"], (1, 1), "VALID",
                                     dimension_numbers=dn, precision=hp)
    y = jnp.maximum(y + params["conv2_b"][None, :, None, None], 0.0)
    y = jax.lax.reduce_window(y, -jnp.inf, jax.lax.max, (1, 1, 2, 2), (1, 1, 2, 2), "VALID")
    y = y.reshape(y.shape[0], -1)
    y = jnp.maximum(jnp.dot(y, params["fc1_w"], precision=hp) + params["fc1_b"], 0.0)
    y = jnp.maximum(jnp.dot(y, params["fc2_w"], precision=hp) + params["fc2_b"], 0.0)
    return jnp.dot(y, params["fc3_w"], precision=hp) + params["fc3_b"]


if __name__ == "__main__":
    num_classes = 10
    batch = 32            # 2 grid steps of 16 images -> both v7x TCs get work
    batch_tile = 16

    key = jax.random.PRNGKey(0)
    k_params, k_input = jax.random.split(key)
    params = init_params(num_classes, k_params)
    # fc1 expects 16*5*5 features -> input spatial must be 32x32 (LeNet/CIFAR style)
    x = jax.random.normal(k_input, (batch, 3, 32, 32), dtype=jnp.float32)

    weights = prepare_kernel_params(params, num_classes)   # packed once, outside jit
    fwd = jax.jit(functools.partial(lenet_forward, num_classes=num_classes,
                                    batch_tile=batch_tile))
    out = fwd(weights, x)
    jax.block_until_ready(out)
    assert out.shape == (batch, num_classes)

    ref = net_reference(params, x)
    # bf16 matmul operands (f32 accumulate) vs HIGHEST-precision f32 reference.
    err = float(jnp.max(jnp.abs(out - ref)))
    assert jnp.allclose(out, ref, atol=5e-2, rtol=5e-2), err
    print("KERNEL_OK")
</pallas_src>

<mosaic_0001>
module attributes {stable_mosaic.version = 11 : i64} {
  func.func @_lenet_kernel(%arg0: i32, %arg1: memref<1x512x128xbf16, #tpu.memory_space<vmem>>, %arg2: memref<5x128x168xbf16, #tpu.memory_space<vmem>>, %arg3: memref<1x168xf32, #tpu.memory_space<vmem>>, %arg4: memref<168x84xbf16, #tpu.memory_space<vmem>>, %arg5: memref<168x84xbf16, #tpu.memory_space<vmem>>, %arg6: memref<5x84x160xbf16, #tpu.memory_space<vmem>>, %arg7: memref<1x160xf32, #tpu.memory_space<vmem>>, %arg8: memref<160x80xbf16, #tpu.memory_space<vmem>>, %arg9: memref<160x80xbf16, #tpu.memory_space<vmem>>, %arg10: memref<5x80x120xbf16, #tpu.memory_space<vmem>>, %arg11: memref<1x120xf32, #tpu.memory_space<vmem>>, %arg12: memref<120x84xbf16, #tpu.memory_space<vmem>>, %arg13: memref<1x84xf32, #tpu.memory_space<vmem>>, %arg14: memref<84x128xbf16, #tpu.memory_space<vmem>>, %arg15: memref<1x128xf32, #tpu.memory_space<vmem>>, %arg16: memref<1x16x128xf32, #tpu.memory_space<vmem>>) attributes {dimension_semantics = [#tpu.dimension_semantics<parallel>], iteration_bounds = array<i64: 2>, scalar_prefetch = 0 : i64, scratch_operands = 0 : i64, tpu.core_type = #tpu.core_type<tc>, window_params = [{transform_indices = @transform_0, window_bounds = array<i64: 1, 512, 128>}, {pipeline_mode = #tpu.pipeline_mode<synchronous>, transform_indices = @transform_1, window_bounds = array<i64: 5, 128, 168>}, {pipeline_mode = #tpu.pipeline_mode<synchronous>, transform_indices = @transform_2, window_bounds = array<i64: 1, 168>}, {pipeline_mode = #tpu.pipeline_mode<synchronous>, transform_indices = @transform_3, window_bounds = array<i64: 168, 84>}, {pipeline_mode = #tpu.pipeline_mode<synchronous>, transform_indices = @transform_4, window_bounds = array<i64: 168, 84>}, {pipeline_mode = #tpu.pipeline_mode<synchronous>, transform_indices = @transform_5, window_bounds = array<i64: 5, 84, 160>}, {pipeline_mode = #tpu.pipeline_mode<synchronous>, transform_indices = @transform_6, window_bounds = array<i64: 1, 160>}, {pipeline_mode = #tpu.pipeline_mode<synchronous>, transform_indices = @transform_7, window_bounds = array<i64: 160, 80>}, {pipeline_mode = #tpu.pipeline_mode<synchronous>, transform_indices = @transform_8, window_bounds = array<i64: 160, 80>}, {pipeline_mode = #tpu.pipeline_mode<synchronous>, transform_indices = @transform_9, window_bounds = array<i64: 5, 80, 120>}, {pipeline_mode = #tpu.pipeline_mode<synchronous>, transform_indices = @transform_10, window_bounds = array<i64: 1, 120>}, {pipeline_mode = #tpu.pipeline_mode<synchronous>, transform_indices = @transform_11, window_bounds = array<i64: 120, 84>}, {pipeline_mode = #tpu.pipeline_mode<synchronous>, transform_indices = @transform_12, window_bounds = array<i64: 1, 84>}, {pipeline_mode = #tpu.pipeline_mode<synchronous>, transform_indices = @transform_13, window_bounds = array<i64: 84, 128>}, {pipeline_mode = #tpu.pipeline_mode<synchronous>, transform_indices = @transform_14, window_bounds = array<i64: 1, 128>}, {transform_indices = @transform_15, window_bounds = array<i64: 1, 16, 128>}]} {
    %c0 = arith.constant 0 : index
    %c0_0 = arith.constant 0 : index
    %c0_1 = arith.constant 0 : index
    %0 = vector.load %arg1[%c0, %c0_0, %c0_1] : memref<1x512x128xbf16, #tpu.memory_space<vmem>>, vector<1x512x128xbf16>
    %1 = vector.shape_cast %0 : vector<1x512x128xbf16> to vector<512x128xbf16>
    %2 = vector.extract_strided_slice %1 {offsets = [0, 0], sizes = [448, 128], strides = [1, 1]} : vector<512x128xbf16> to vector<448x128xbf16>
    %c0_2 = arith.constant 0 : index
    %c0_3 = arith.constant 0 : index
    %c0_4 = arith.constant 0 : index
    %3 = vector.load %arg2[%c0_2, %c0_3, %c0_4] : memref<5x128x168xbf16, #tpu.memory_space<vmem>>, vector<1x128x168xbf16>
    %4 = vector.shape_cast %3 : vector<1x128x168xbf16> to vector<128x168xbf16>
    %cst = arith.constant dense<0.000000e+00> : vector<448x168xf32>
    %5 = tpu.matmul %2, %4, %cst {dimension_numbers = #tpu.dot_dimension_numbers<[1], [0], [0], [1], [0, 0, 1, 1], [], []>} : vector<448x128xbf16>, vector<128x168xbf16>, vector<448x168xf32> -> vector<448x168xf32>
    %6 = vector.extract_strided_slice %1 {offsets = [16, 0], sizes = [448, 128], strides = [1, 1]} : vector<512x128xbf16> to vector<448x128xbf16>
    %c1 = arith.constant 1 : index
    %c0_5 = arith.constant 0 : index
    %c0_6 = arith.constant 0 : index
    %7 = vector.load %arg2[%c1, %c0_5, %c0_6] : memref<5x128x168xbf16, #tpu.memory_space<vmem>>, vector<1x128x168xbf16>
    %8 = vector.shape_cast %7 : vector<1x128x168xbf16> to vector<128x168xbf16>
    %cst_7 = arith.constant dense<0.000000e+00> : vector<448x168xf32>
    %9 = tpu.matmul %6, %8, %cst_7 {dimension_numbers = #tpu.dot_dimension_numbers<[1], [0], [0], [1], [0, 0, 1, 1], [], []>} : vector<448x128xbf16>, vector<128x168xbf16>, vector<448x168xf32> -> vector<448x168xf32>
    %10 = arith.addf %5, %9 : vector<448x168xf32>
    %11 = vector.extract_strided_slice %1 {offsets = [32, 0], sizes = [448, 128], strides = [1, 1]} : vector<512x128xbf16> to vector<448x128xbf16>
    %c2 = arith.constant 2 : index
    %c0_8 = arith.constant 0 : index
    %c0_9 = arith.constant 0 : index
    %12 = vector.load %arg2[%c2, %c0_8, %c0_9] : memref<5x128x168xbf16, #tpu.memory_space<vmem>>, vector<1x128x168xbf16>
    %13 = vector.shape_cast %12 : vector<1x128x168xbf16> to vector<128x168xbf16>
    %cst_10 = arith.constant dense<0.000000e+00> : vector<448x168xf32>
    %14 = tpu.matmul %11, %13, %cst_10 {dimension_numbers = #tpu.dot_dimension_numbers<[1], [0], [0], [1], [0, 0, 1, 1], [], []>} : vector<448x128xbf16>, vector<128x168xbf16>, vector<448x168xf32> -> vector<448x168xf32>
    %15 = arith.addf %10, %14 : vector<448x168xf32>
    %16 = vector.extract_strided_slice %1 {offsets = [48, 0], sizes = [448, 128], strides = [1, 1]} : vector<512x128xbf16> to vector<448x128xbf16>
    %c3 = arith.constant 3 : index
    %c0_11 = arith.constant 0 : index
    %c0_12 = arith.constant 0 : index
    %17 = vector.load %arg2[%c3, %c0_11, %c0_12] : memref<5x128x168xbf16, #tpu.memory_space<vmem>>, vector<1x128x168xbf16>
    %18 = vector.shape_cast %17 : vector<1x128x168xbf16> to vector<128x168xbf16>
    %cst_13 = arith.constant dense<0.000000e+00> : vector<448x168xf32>
    %19 = tpu.matmul %16, %18, %cst_13 {dimension_numbers = #tpu.dot_dimension_numbers<[1], [0], [0], [1], [0, 0, 1, 1], [], []>} : vector<448x128xbf16>, vector<128x168xbf16>, vector<448x168xf32> -> vector<448x168xf32>
    %20 = arith.addf %15, %19 : vector<448x168xf32>
    %21 = vector.extract_strided_slice %1 {offsets = [64, 0], sizes = [448, 128], strides = [1, 1]} : vector<512x128xbf16> to vector<448x128xbf16>
    %c4 = arith.constant 4 : index
    %c0_14 = arith.constant 0 : index
    %c0_15 = arith.constant 0 : index
    %22 = vector.load %arg2[%c4, %c0_14, %c0_15] : memref<5x128x168xbf16, #tpu.memory_space<vmem>>, vector<1x128x168xbf16>
    %23 = vector.shape_cast %22 : vector<1x128x168xbf16> to vector<128x168xbf16>
    %cst_16 = arith.constant dense<0.000000e+00> : vector<448x168xf32>
    %24 = tpu.matmul %21, %23, %cst_16 {dimension_numbers = #tpu.dot_dimension_numbers<[1], [0], [0], [1], [0, 0, 1, 1], [], []>} : vector<448x128xbf16>, vector<128x168xbf16>, vector<448x168xf32> -> vector<448x168xf32>
    %25 = arith.addf %20, %24 : vector<448x168xf32>
    %c0_17 = arith.constant 0 : index
    %c0_18 = arith.constant 0 : index
    %26 = vector.load %arg3[%c0_17, %c0_18] : memref<1x168xf32, #tpu.memory_space<vmem>>, vector<1x168xf32>
    %27 = vector.broadcast %26 : vector<1x168xf32> to vector<448x168xf32>
    %28 = arith.addf %25, %27 : vector<448x168xf32>
    %cst_19 = arith.constant 0.000000e+00 : f32
    %29 = vector.broadcast %cst_19 : f32 to vector<448x168xf32>
    %30 = arith.maximumf %28, %29 : vector<448x168xf32>
    %31 = vector.shape_cast %30 : vector<448x168xf32> to vector<14x32x168xf32>
    %32 = vector.extract_strided_slice %31 {offsets = [0, 0, 0], sizes = [14, 16, 168], strides = [1, 1, 1]} : vector<14x32x168xf32> to vector<14x16x168xf32>
    %33 = vector.extract_strided_slice %31 {offsets = [0, 16, 0], sizes = [14, 16, 168], strides = [1, 1, 1]} : vector<14x32x168xf32> to vector<14x16x168xf32>
    %34 = arith.maximumf %32, %33 : vector<14x16x168xf32>
    %35 = vector.shape_cast %34 : vector<14x16x168xf32> to vector<224x168xf32>
    %36 = arith.truncf %35 : vector<224x168xf32> to vector<224x168xbf16>
    %c0_20 = arith.constant 0 : index
    %c0_21 = arith.constant 0 : index
    %37 = vector.load %arg4[%c0_20, %c0_21] : memref<168x84xbf16, #tpu.memory_space<vmem>>, vector<168x84xbf16>
    %cst_22 = arith.constant dense<0.000000e+00> : vector<224x84xf32>
    %38 = tpu.matmul %36, %37, %cst_22 {dimension_numbers = #tpu.dot_dimension_numbers<[1], [0], [0], [1], [0, 0, 1, 1], [], []>} : vector<224x168xbf16>, vector<168x84xbf16>, vector<224x84xf32> -> vector<224x84xf32>
    %c0_23 = arith.constant 0 : index
    %c0_24 = arith.constant 0 : index
    %39 = vector.load %arg5[%c0_23, %c0_24] : memref<168x84xbf16, #tpu.memory_space<vmem>>, vector<168x84xbf16>
    %cst_25 = arith.constant dense<0.000000e+00> : vector<224x84xf32>
    %40 = tpu.matmul %36, %39, %cst_25 {dimension_numbers = #tpu.dot_dimension_numbers<[1], [0], [0], [1], [0, 0, 1, 1], [], []>} : vector<224x168xbf16>, vector<168x84xbf16>, vector<224x84xf32> -> vector<224x84xf32>
    %41 = arith.maximumf %38, %40 : vector<224x84xf32>
    %42 = arith.truncf %41 : vector<224x84xf32> to vector<224x84xbf16>
    %43 = vector.extract_strided_slice %42 {offsets = [0, 0], sizes = [160, 84], strides = [1, 1]} : vector<224x84xbf16> to vector<160x84xbf16>
    %c0_26 = arith.constant 0 : index
    %c0_27 = arith.constant 0 : index
    %c0_28 = arith.constant 0 : index
    %44 = vector.load %arg6[%c0_26, %c0_27, %c0_28] : memref<5x84x160xbf16, #tpu.memory_space<vmem>>, vector<1x84x160xbf16>
    %45 = vector.shape_cast %44 : vector<1x84x160xbf16> to vector<84x160xbf16>
    %cst_29 = arith.constant dense<0.000000e+00> : vector<160x160xf32>
    %46 = tpu.matmul %43, %45, %cst_29 {dimension_numbers = #tpu.dot_dimension_numbers<[1], [0], [0], [1], [0, 0, 1, 1], [], []>} : vector<160x84xbf16>, vector<84x160xbf16>, vector<160x160xf32> -> vector<160x160xf32>
    %47 = vector.extract_strided_slice %42 {offsets = [16, 0], sizes = [160, 84], strides = [1, 1]} : vector<224x84xbf16> to vector<160x84xbf16>
    %c1_30 = arith.constant 1 : index
    %c0_31 = arith.constant 0 : index
    %c0_32 = arith.constant 0 : index
    %48 = vector.load %arg6[%c1_30, %c0_31, %c0_32] : memref<5x84x160xbf16, #tpu.memory_space<vmem>>, vector<1x84x160xbf16>
    %49 = vector.shape_cast %48 : vector<1x84x160xbf16> to vector<84x160xbf16>
    %cst_33 = arith.constant dense<0.000000e+00> : vector<160x160xf32>
    %50 = tpu.matmul %47, %49, %cst_33 {dimension_numbers = #tpu.dot_dimension_numbers<[1], [0], [0], [1], [0, 0, 1, 1], [], []>} : vector<160x84xbf16>, vector<84x160xbf16>, vector<160x160xf32> -> vector<160x160xf32>
    %51 = arith.addf %46, %50 : vector<160x160xf32>
    %52 = vector.extract_strided_slice %42 {offsets = [32, 0], sizes = [160, 84], strides = [1, 1]} : vector<224x84xbf16> to vector<160x84xbf16>
    %c2_34 = arith.constant 2 : index
    %c0_35 = arith.constant 0 : index
    %c0_36 = arith.constant 0 : index
    %53 = vector.load %arg6[%c2_34, %c0_35, %c0_36] : memref<5x84x160xbf16, #tpu.memory_space<vmem>>, vector<1x84x160xbf16>
    %54 = vector.shape_cast %53 : vector<1x84x160xbf16> to vector<84x160xbf16>
    %cst_37 = arith.constant dense<0.000000e+00> : vector<160x160xf32>
    %55 = tpu.matmul %52, %54, %cst_37 {dimension_numbers = #tpu.dot_dimension_numbers<[1], [0], [0], [1], [0, 0, 1, 1], [], []>} : vector<160x84xbf16>, vector<84x160xbf16>, vector<160x160xf32> -> vector<160x160xf32>
    %56 = arith.addf %51, %55 : vector<160x160xf32>
    %57 = vector.extract_strided_slice %42 {offsets = [48, 0], sizes = [160, 84], strides = [1, 1]} : vector<224x84xbf16> to vector<160x84xbf16>
    %c3_38 = arith.constant 3 : index
    %c0_39 = arith.constant 0 : index
    %c0_40 = arith.constant 0 : index
    %58 = vector.load %arg6[%c3_38, %c0_39, %c0_40] : memref<5x84x160xbf16, #tpu.memory_space<vmem>>, vector<1x84x160xbf16>
    %59 = vector.shape_cast %58 : vector<1x84x160xbf16> to vector<84x160xbf16>
    %cst_41 = arith.constant dense<0.000000e+00> : vector<160x160xf32>
    %60 = tpu.matmul %57, %59, %cst_41 {dimension_numbers = #tpu.dot_dimension_numbers<[1], [0], [0], [1], [0, 0, 1, 1], [], []>} : vector<160x84xbf16>, vector<84x160xbf16>, vector<160x160xf32> -> vector<160x160xf32>
    %61 = arith.addf %56, %60 : vector<160x160xf32>
    %62 = vector.extract_strided_slice %42 {offsets = [64, 0], sizes = [160, 84], strides = [1, 1]} : vector<224x84xbf16> to vector<160x84xbf16>
    %c4_42 = arith.constant 4 : index
    %c0_43 = arith.constant 0 : index
    %c0_44 = arith.constant 0 : index
    %63 = vector.load %arg6[%c4_42, %c0_43, %c0_44] : memref<5x84x160xbf16, #tpu.memory_space<vmem>>, vector<1x84x160xbf16>
    %64 = vector.shape_cast %63 : vector<1x84x160xbf16> to vector<84x160xbf16>
    %cst_45 = arith.constant dense<0.000000e+00> : vector<160x160xf32>
    %65 = tpu.matmul %62, %64, %cst_45 {dimension_numbers = #tpu.dot_dimension_numbers<[1], [0], [0], [1], [0, 0, 1, 1], [], []>} : vector<160x84xbf16>, vector<84x160xbf16>, vector<160x160xf32> -> vector<160x160xf32>
    %66 = arith.addf %61, %65 : vector<160x160xf32>
    %c0_46 = arith.constant 0 : index
    %c0_47 = arith.constant 0 : index
    %67 = vector.load %arg7[%c0_46, %c0_47] : memref<1x160xf32, #tpu.memory_space<vmem>>, vector<1x160xf32>
    %68 = vector.broadcast %67 : vector<1x160xf32> to vector<160x160xf32>
    %69 = arith.addf %66, %68 : vector<160x160xf32>
    %cst_48 = arith.constant 0.000000e+00 : f32
    %70 = vector.broadcast %cst_48 : f32 to vector<160x160xf32>
    %71 = arith.maximumf %69, %70 : vector<160x160xf32>
    %72 = vector.shape_cast %71 : vector<160x160xf32> to vector<5x32x160xf32>
    %73 = vector.extract_strided_slice %72 {offsets = [0, 0, 0], sizes = [5, 16, 160], strides = [1, 1, 1]} : vector<5x32x160xf32> to vector<5x16x160xf32>
    %74 = vector.extract_strided_slice %72 {offsets = [0, 16, 0], sizes = [5, 16, 160], strides = [1, 1, 1]} : vector<5x32x160xf32> to vector<5x16x160xf32>
    %75 = arith.maximumf %73, %74 : vector<5x16x160xf32>
    %76 = vector.shape_cast %75 : vector<5x16x160xf32> to vector<80x160xf32>
    %77 = arith.truncf %76 : vector<80x160xf32> to vector<80x160xbf16>
    %c0_49 = arith.constant 0 : index
    %c0_50 = arith.constant 0 : index
    %78 = vector.load %arg8[%c0_49, %c0_50] : memref<160x80xbf16, #tpu.memory_space<vmem>>, vector<160x80xbf16>
    %cst_51 = arith.constant dense<0.000000e+00> : vector<80x80xf32>
    %79 = tpu.matmul %77, %78, %cst_51 {dimension_numbers = #tpu.dot_dimension_numbers<[1], [0], [0], [1], [0, 0, 1, 1], [], []>} : vector<80x160xbf16>, vector<160x80xbf16>, vector<80x80xf32> -> vector<80x80xf32>
    %c0_52 = arith.constant 0 : index
    %c0_53 = arith.constant 0 : index
    %80 = vector.load %arg9[%c0_52, %c0_53] : memref<160x80xbf16, #tpu.memory_space<vmem>>, vector<160x80xbf16>
    %cst_54 = arith.constant dense<0.000000e+00> : vector<80x80xf32>
    %81 = tpu.matmul %77, %80, %cst_54 {dimension_numbers = #tpu.dot_dimension_numbers<[1], [0], [0], [1], [0, 0, 1, 1], [], []>} : vector<80x160xbf16>, vector<160x80xbf16>, vector<80x80xf32> -> vector<80x80xf32>
    %82 = arith.maximumf %79, %81 : vector<80x80xf32>
    %83 = arith.truncf %82 : vector<80x80xf32> to vector<80x80xbf16>
    %84 = vector.extract_strided_slice %83 {offsets = [0, 0], sizes = [16, 80], strides = [1, 1]} : vector<80x80xbf16> to vector<16x80xbf16>
    %c0_55 = arith.constant 0 : index
    %c0_56 = arith.constant 0 : index
    %c0_57 = arith.constant 0 : index
    %85 = vector.load %arg10[%c0_55, %c0_56, %c0_57] : memref<5x80x120xbf16, #tpu.memory_space<vmem>>, vector<1x80x120xbf16>
    %86 = vector.shape_cast %85 : vector<1x80x120xbf16> to vector<80x120xbf16>
    %cst_58 = arith.constant dense<0.000000e+00> : vector<16x120xf32>
    %87 = tpu.matmul %84, %86, %cst_58 {dimension_numbers = #tpu.dot_dimension_numbers<[1], [0], [0], [1], [0, 0, 1, 1], [], []>} : vector<16x80xbf16>, vector<80x120xbf16>, vector<16x120xf32> -> vector<16x120xf32>
    %88 = vector.extract_strided_slice %83 {offsets = [16, 0], sizes = [16, 80], strides = [1, 1]} : vector<80x80xbf16> to vector<16x80xbf16>
    %c1_59 = arith.constant 1 : index
    %c0_60 = arith.constant 0 : index
    %c0_61 = arith.constant 0 : index
    %89 = vector.load %arg10[%c1_59, %c0_60, %c0_61] : memref<5x80x120xbf16, #tpu.memory_space<vmem>>, vector<1x80x120xbf16>
    %90 = vector.shape_cast %89 : vector<1x80x120xbf16> to vector<80x120xbf16>
    %cst_62 = arith.constant dense<0.000000e+00> : vector<16x120xf32>
    %91 = tpu.matmul %88, %90, %cst_62 {dimension_numbers = #tpu.dot_dimension_numbers<[1], [0], [0], [1], [0, 0, 1, 1], [], []>} : vector<16x80xbf16>, vector<80x120xbf16>, vector<16x120xf32> -> vector<16x120xf32>
    %92 = arith.addf %87, %91 : vector<16x120xf32>
    %93 = vector.extract_strided_slice %83 {offsets = [32, 0], sizes = [16, 80], strides = [1, 1]} : vector<80x80xbf16> to vector<16x80xbf16>
    %c2_63 = arith.constant 2 : index
    %c0_64 = arith.constant 0 : index
    %c0_65 = arith.constant 0 : index
    %94 = vector.load %arg10[%c2_63, %c0_64, %c0_65] : memref<5x80x120xbf16, #tpu.memory_space<vmem>>, vector<1x80x120xbf16>
    %95 = vector.shape_cast %94 : vector<1x80x120xbf16> to vector<80x120xbf16>
    %cst_66 = arith.constant dense<0.000000e+00> : vector<16x120xf32>
    %96 = tpu.matmul %93, %95, %cst_66 {dimension_numbers = #tpu.dot_dimension_numbers<[1], [0], [0], [1], [0, 0, 1, 1], [], []>} : vector<16x80xbf16>, vector<80x120xbf16>, vector<16x120xf32> -> vector<16x120xf32>
    %97 = arith.addf %92, %96 : vector<16x120xf32>
    %98 = vector.extract_strided_slice %83 {offsets = [48, 0], sizes = [16, 80], strides = [1, 1]} : vector<80x80xbf16> to vector<16x80xbf16>
    %c3_67 = arith.constant 3 : index
    %c0_68 = arith.constant 0 : index
    %c0_69 = arith.constant 0 : index
    %99 = vector.load %arg10[%c3_67, %c0_68, %c0_69] : memref<5x80x120xbf16, #tpu.memory_space<vmem>>, vector<1x80x120xbf16>
    %100 = vector.shape_cast %99 : vector<1x80x120xbf16> to vector<80x120xbf16>
    %cst_70 = arith.constant dense<0.000000e+00> : vector<16x120xf32>
    %101 = tpu.matmul %98, %100, %cst_70 {dimension_numbers = #tpu.dot_dimension_numbers<[1], [0], [0], [1], [0, 0, 1, 1], [], []>} : vector<16x80xbf16>, vector<80x120xbf16>, vector<16x120xf32> -> vector<16x120xf32>
    %102 = arith.addf %97, %101 : vector<16x120xf32>
    %103 = vector.extract_strided_slice %83 {offsets = [64, 0], sizes = [16, 80], strides = [1, 1]} : vector<80x80xbf16> to vector<16x80xbf16>
    %c4_71 = arith.constant 4 : index
    %c0_72 = arith.constant 0 : index
    %c0_73 = arith.constant 0 : index
    %104 = vector.load %arg10[%c4_71, %c0_72, %c0_73] : memref<5x80x120xbf16, #tpu.memory_space<vmem>>, vector<1x80x120xbf16>
    %105 = vector.shape_cast %104 : vector<1x80x120xbf16> to vector<80x120xbf16>
    %cst_74 = arith.constant dense<0.000000e+00> : vector<16x120xf32>
    %106 = tpu.matmul %103, %105, %cst_74 {dimension_numbers = #tpu.dot_dimension_numbers<[1], [0], [0], [1], [0, 0, 1, 1], [], []>} : vector<16x80xbf16>, vector<80x120xbf16>, vector<16x120xf32> -> vector<16x120xf32>
    %107 = arith.addf %102, %106 : vector<16x120xf32>
    %c0_75 = arith.constant 0 : index
    %c0_76 = arith.constant 0 : index
    %108 = vector.load %arg11[%c0_75, %c0_76] : memref<1x120xf32, #tpu.memory_space<vmem>>, vector<1x120xf32>
    %109 = vector.broadcast %108 : vector<1x120xf32> to vector<16x120xf32>
    %110 = arith.addf %107, %109 : vector<16x120xf32>
    %cst_77 = arith.constant 0.000000e+00 : f32
    %111 = vector.broadcast %cst_77 : f32 to vector<16x120xf32>
    %112 = arith.maximumf %110, %111 : vector<16x120xf32>
    %113 = arith.truncf %112 : vector<16x120xf32> to vector<16x120xbf16>
    %c0_78 = arith.constant 0 : index
    %c0_79 = arith.constant 0 : index
    %114 = vector.load %arg12[%c0_78, %c0_79] : memref<120x84xbf16, #tpu.memory_space<vmem>>, vector<120x84xbf16>
    %cst_80 = arith.constant dense<0.000000e+00> : vector<16x84xf32>
    %115 = tpu.matmul %113, %114, %cst_80 {dimension_numbers = #tpu.dot_dimension_numbers<[1], [0], [0], [1], [0, 0, 1, 1], [], []>} : vector<16x120xbf16>, vector<120x84xbf16>, vector<16x84xf32> -> vector<16x84xf32>
    %c0_81 = arith.constant 0 : index
    %c0_82 = arith.constant 0 : index
    %116 = vector.load %arg13[%c0_81, %c0_82] : memref<1x84xf32, #tpu.memory_space<vmem>>, vector<1x84xf32>
    %117 = vector.broadcast %116 : vector<1x84xf32> to vector<16x84xf32>
    %118 = arith.addf %115, %117 : vector<16x84xf32>
    %cst_83 = arith.constant 0.000000e+00 : f32
    %119 = vector.broadcast %cst_83 : f32 to vector<16x84xf32>
    %120 = arith.maximumf %118, %119 : vector<16x84xf32>
    %121 = arith.truncf %120 : vector<16x84xf32> to vector<16x84xbf16>
    %c0_84 = arith.constant 0 : index
    %c0_85 = arith.constant 0 : index
    %122 = vector.load %arg14[%c0_84, %c0_85] : memref<84x128xbf16, #tpu.memory_space<vmem>>, vector<84x128xbf16>
    %cst_86 = arith.constant dense<0.000000e+00> : vector<16x128xf32>
    %123 = tpu.matmul %121, %122, %cst_86 {dimension_numbers = #tpu.dot_dimension_numbers<[1], [0], [0], [1], [0, 0, 1, 1], [], []>} : vector<16x84xbf16>, vector<84x128xbf16>, vector<16x128xf32> -> vector<16x128xf32>
    %c0_87 = arith.constant 0 : index
    %c0_88 = arith.constant 0 : index
    %124 = vector.load %arg15[%c0_87, %c0_88] : memref<1x128xf32, #tpu.memory_space<vmem>>, vector<1x128xf32>
    %125 = vector.broadcast %124 : vector<1x128xf32> to vector<16x128xf32>
    %126 = arith.addf %123, %125 : vector<16x128xf32>
    %c0_89 = arith.constant 0 : index
    %c0_90 = arith.constant 0 : index
    %c0_91 = arith.constant 0 : index
    %127 = vector.load %arg16[%c0_89, %c0_90, %c0_91] : memref<1x16x128xf32, #tpu.memory_space<vmem>>, vector<1x16x128xf32>
    %128 = vector.shape_cast %127 : vector<1x16x128xf32> to vector<16x128xf32>
    %129 = vector.shape_cast %126 : vector<16x128xf32> to vector<1x16x128xf32>
    tpu.vector_store %arg16[%c0_89, %c0_90, %c0_91], %129 {strides = array<i32>} : memref<1x16x128xf32, #tpu.memory_space<vmem>>, vector<1x16x128xf32>,
    return
  }
  func.func @transform_0(%arg0: i32) -> (i32, i32, i32) {
    %c0_i32 = arith.constant 0 : i32
    %c0_i32_0 = arith.constant 0 : i32
    %c0_i32_1 = arith.constant 0 : i32
    return %arg0, %c0_i32, %c0_i32_0 : i32, i32, i32
  }
  func.func @transform_1(%arg0: i32) -> (i32, i32, i32) {
    %c0_i32 = arith.constant 0 : i32
    %c0_i32_0 = arith.constant 0 : i32
    %c0_i32_1 = arith.constant 0 : i32
    %c0_i32_2 = arith.constant 0 : i32
    return %c0_i32, %c0_i32_0, %c0_i32_1 : i32, i32, i32
  }
  func.func @transform_2(%arg0: i32) -> (i32, i32) {
    %c0_i32 = arith.constant 0 : i32
    %c0_i32_0 = arith.constant 0 : i32
    %c0_i32_1 = arith.constant 0 : i32
    return %c0_i32, %c0_i32_0 : i32, i32
  }
  func.func @transform_3(%arg0: i32) -> (i32, i32) {
    %c0_i32 = arith.constant 0 : i32
    %c0_i32_0 = arith.constant 0 : i32
    %c0_i32_1 = arith.constant 0 : i32
    return %c0_i32, %c0_i32_0 : i32, i32
  }
  func.func @transform_4(%arg0: i32) -> (i32, i32) {
    %c0_i32 = arith.constant 0 : i32
    %c0_i32_0 = arith.constant 0 : i32
    %c0_i32_1 = arith.constant 0 : i32
    return %c0_i32, %c0_i32_0 : i32, i32
  }
  func.func @transform_5(%arg0: i32) -> (i32, i32, i32) {
    %c0_i32 = arith.constant 0 : i32
    %c0_i32_0 = arith.constant 0 : i32
    %c0_i32_1 = arith.constant 0 : i32
    %c0_i32_2 = arith.constant 0 : i32
    return %c0_i32, %c0_i32_0, %c0_i32_1 : i32, i32, i32
  }
  func.func @transform_6(%arg0: i32) -> (i32, i32) {
    %c0_i32 = arith.constant 0 : i32
    %c0_i32_0 = arith.constant 0 : i32
    %c0_i32_1 = arith.constant 0 : i32
    return %c0_i32, %c0_i32_0 : i32, i32
  }
  func.func @transform_7(%arg0: i32) -> (i32, i32) {
    %c0_i32 = arith.constant 0 : i32
    %c0_i32_0 = arith.constant 0 : i32
    %c0_i32_1 = arith.constant 0 : i32
    return %c0_i32, %c0_i32_0 : i32, i32
  }
  func.func @transform_8(%arg0: i32) -> (i32, i32) {
    %c0_i32 = arith.constant 0 : i32
    %c0_i32_0 = arith.constant 0 : i32
    %c0_i32_1 = arith.constant 0 : i32
    return %c0_i32, %c0_i32_0 : i32, i32
  }
  func.func @transform_9(%arg0: i32) -> (i32, i32, i32) {
    %c0_i32 = arith.constant 0 : i32
    %c0_i32_0 = arith.constant 0 : i32
    %c0_i32_1 = arith.constant 0 : i32
    %c0_i32_2 = arith.constant 0 : i32
    return %c0_i32, %c0_i32_0, %c0_i32_1 : i32, i32, i32
  }
  func.func @transform_10(%arg0: i32) -> (i32, i32) {
    %c0_i32 = arith.constant 0 : i32
    %c0_i32_0 = arith.constant 0 : i32
    %c0_i32_1 = arith.constant 0 : i32
    return %c0_i32, %c0_i32_0 : i32, i32
  }
  func.func @transform_11(%arg0: i32) -> (i32, i32) {
    %c0_i32 = arith.constant 0 : i32
    %c0_i32_0 = arith.constant 0 : i32
    %c0_i32_1 = arith.constant 0 : i32
    return %c0_i32, %c0_i32_0 : i32, i32
  }
  func.func @transform_12(%arg0: i32) -> (i32, i32) {
    %c0_i32 = arith.constant 0 : i32
    %c0_i32_0 = arith.constant 0 : i32
    %c0_i32_1 = arith.constant 0 : i32
    return %c0_i32, %c0_i32_0 : i32, i32
  }
  func.func @transform_13(%arg0: i32) -> (i32, i32) {
    %c0_i32 = arith.constant 0 : i32
    %c0_i32_0 = arith.constant 0 : i32
    %c0_i32_1 = arith.constant 0 : i32
    return %c0_i32, %c0_i32_0 : i32, i32
  }
  func.func @transform_14(%arg0: i32) -> (i32, i32) {
    %c0_i32 = arith.constant 0 : i32
    %c0_i32_0 = arith.constant 0 : i32
    %c0_i32_1 = arith.constant 0 : i32
    return %c0_i32, %c0_i32_0 : i32, i32
  }
  func.func @transform_15(%arg0: i32) -> (i32, i32, i32) {
    %c0_i32 = arith.constant 0 : i32
    %c0_i32_0 = arith.constant 0 : i32
    %c0_i32_1 = arith.constant 0 : i32
    return %arg0, %c0_i32, %c0_i32_0 : i32, i32, i32
  }
}

</mosaic_0001>

<llo_original>
// kernel: lenet_forward.1
$region0: #{lenet_forward.1}
  #allocation0 [shape = 'u32[]', space=smem, size = 0x4, offset = 0x4, fixed_abs, tag = 'smem constant byte address 0x4 - core index']
  #allocation1 [shape = 'u32[144,128]{1,0:T(1,128)}', space=vmem, size = 0x12000, scoped, tag = 'internal scratch']
  %s0 = inlined_call_operand.vmem [shape: bf16[2,512,128], index: 0, kind: input, shape index: {}]
  %s1 = inlined_call_operand.vmem [shape: bf16[5,128,168], index: 1, kind: input, shape index: {}]
  %s2 = inlined_call_operand.vmem [shape: f32[1,168], index: 2, kind: input, shape index: {}]
  %s3 = inlined_call_operand.vmem [shape: bf16[168,84], index: 3, kind: input, shape index: {}]
  %s4 = inlined_call_operand.vmem [shape: bf16[168,84], index: 4, kind: input, shape index: {}]
  %s5 = inlined_call_operand.vmem [shape: bf16[5,84,160], index: 5, kind: input, shape index: {}]
  %s6 = inlined_call_operand.vmem [shape: f32[1,160], index: 6, kind: input, shape index: {}]
  %s7 = inlined_call_operand.vmem [shape: bf16[160,80], index: 7, kind: input, shape index: {}]
  %s8 = inlined_call_operand.vmem [shape: bf16[160,80], index: 8, kind: input, shape index: {}]
  %s9 = inlined_call_operand.vmem [shape: bf16[5,80,120], index: 9, kind: input, shape index: {}]
  %s10 = inlined_call_operand.vmem [shape: f32[1,120], index: 10, kind: input, shape index: {}]
  %s11 = inlined_call_operand.vmem [shape: bf16[120,84], index: 11, kind: input, shape index: {}]
  %s12 = inlined_call_operand.vmem [shape: f32[1,84], index: 12, kind: input, shape index: {}]
  %s13 = inlined_call_operand.vmem [shape: bf16[84,128], index: 13, kind: input, shape index: {}]
  %s14 = inlined_call_operand.vmem [shape: f32[1,128], index: 14, kind: input, shape index: {}]
  %s15 = inlined_call_operand.vmem [shape: f32[2,16,128], index: 15, kind: output, shape index: {}]
  %s16 = sld [smem:[#allocation0]]
  $region93: #{lenet_forward.1} parent=0
    _
  %s18 = ssub.s32 1, %s16
  %s19 = scalar_select 0, %s18, %s16
  loop: start=0, step=1, limit=4
  $region2: #{lenet_forward.1} parent=0 // loop_pre_header
    _
  $region3: #{lenet_forward.1} parent=0 // loop_header
    %s21 = sphi 0, %s25
    %p22 = scmp.ge.s32.totalorder %s21, 4
    %s31 = sphi 0, %s33
    %s34 = sphi 0, %s31
    %s35 = sphi 0, %s34
    %s51 = sphi 0, %s35
    %s55 = sphi 0, %s55
    %s57 = sphi 0, %s55
    %s58 = sphi 0, %s57
    %s72 = sphi 0, %s58
    %s76 = sphi 0, %s76
    %s78 = sphi 0, %s76
    %s79 = sphi 0, %s78
    %s93 = sphi 0, %s79
    %s97 = sphi 0, %s97
    %s99 = sphi 0, %s97
    %s100 = sphi 0, %s99
    %s114 = sphi 0, %s100
    %s118 = sphi 0, %s118
    %s120 = sphi 0, %s118
    %s121 = sphi 0, %s120
    %s135 = sphi 0, %s121
    %s139 = sphi 0, %s139
    %s141 = sphi 0, %s139
    %s142 = sphi 0, %s141
    %s156 = sphi 0, %s142
    %s160 = sphi 0, %s160
    %s162 = sphi 0, %s160
    %s163 = sphi 0, %s162
    %s177 = sphi 0, %s163
    %s181 = sphi 0, %s181
    %s183 = sphi 0, %s181
    %s184 = sphi 0, %s183
    %s198 = sphi 0, %s184
    %s202 = sphi 0, %s202
    %s204 = sphi 0, %s202
    %s205 = sphi 0, %s204
    %s219 = sphi 0, %s205
    %s223 = sphi 0, %s223
    %s225 = sphi 0, %s223
    %s226 = sphi 0, %s225
    %s240 = sphi 0, %s226
    %s244 = sphi 0, %s244
    %s246 = sphi 0, %s244
    %s247 = sphi 0, %s246
    %s261 = sphi 0, %s247
    %s265 = sphi 0, %s265
    %s267 = sphi 0, %s265
    %s268 = sphi 0, %s267
    %s282 = sphi 0, %s268
    %s286 = sphi 0, %s286
    %s288 = sphi 0, %s286
    %s289 = sphi 0, %s288
    %s303 = sphi 0, %s289
    %s307 = sphi 0, %s307
    %s309 = sphi 0, %s307
    %s310 = sphi 0, %s309
    %s324 = sphi 0, %s310
    %s328 = sphi 0, %s328
    %s330 = sphi 0, %s328
    %s331 = sphi 0, %s330
    %s345 = sphi 0, %s331
    %s351 = sphi 0, %s353
    %s354 = sphi 0, %s351
    %s355 = sphi 0, %s354
    %s371 = sphi 0, %s355
  $region4: #{lenet_forward.1} parent=0 // loop_header_branch
    %24 = sbr.rel (%p22) target = $region8
  $region5: #{lenet_forward.1} parent=0 // loop_body
    %s26 = ssub.s32 %s21, 1
    %s27 = ssub.s32 %s21, 2
    %s28 = sadd.s32 %s21, 1
    %s29 = ssub.s32 %s21, %s28
    %p30 = scmp.eq.s32.totalorder %s29, 0
    %s32 = sadd.s32 %s31, 1
    %s33 = scalar_select %p30, %s31, %s32
    %p36 = pneg %p30
    %p37 = scmp.eq.s32.totalorder %s21, 1
    %p38 = por %p36, %p37
    %p39 = scmp.ne.s32.totalorder %s31, %s34
    %p40 = scmp.eq.s32.totalorder %s21, 0
    %p41 = por %p39, %p40
    %p42 = scmp.ne.s32.totalorder %s31, %s34
    %p43 = scmp.eq.s32.totalorder %s26, 1
    %p44 = por %p42, %p43
    %p45 = scmp.ne.s32.totalorder %s34, %s35
    %p46 = scmp.eq.s32.totalorder %s26, 0
    %p47 = por %p45, %p46
    %p48 = scmp.ne.s32.totalorder %s34, %s35
    %p49 = scmp.eq.s32.totalorder %s27, 1
    %p50 = por %p48, %p49
    %p52 = scmp.ne.s32.totalorder %s35, %s51
    %p53 = scmp.eq.s32.totalorder %s27, 0
    %p54 = por %p52, %p53
    %s56 = sadd.s32 %s55, 1
    %p59 = scmp.eq.s32.totalorder %s21, 1
    %p60 = scmp.ne.s32.totalorder %s55, %s57
    %p61 = scmp.eq.s32.totalorder %s21, 0
    %p62 = por %p60, %p61
    %p63 = scmp.ne.s32.totalorder %s55, %s57
    %p64 = scmp.eq.s32.totalorder %s26, 1
    %p65 = por %p63, %p64
    %p66 = scmp.ne.s32.totalorder %s57, %s58
    %p67 = scmp.eq.s32.totalorder %s26, 0
    %p68 = por %p66, %p67
    %p69 = scmp.ne.s32.totalorder %s57, %s58
    %p70 = scmp.eq.s32.totalorder %s27, 1
    %p71 = por %p69, %p70
    %p73 = scmp.ne.s32.totalorder %s58, %s72
    %p74 = scmp.eq.s32.totalorder %s27, 0
    %p75 = por %p73, %p74
    %s77 = sadd.s32 %s76, 1
    %p80 = scmp.eq.s32.totalorder %s21, 1
    %p81 = scmp.ne.s32.totalorder %s76, %s78
    %p82 = scmp.eq.s32.totalorder %s21, 0
    %p83 = por %p81, %p82
    %p84 = scmp.ne.s32.totalorder %s76, %s78
    %p85 = scmp.eq.s32.totalorder %s26, 1
    %p86 = por %p84, %p85
    %p87 = scmp.ne.s32.totalorder %s78, %s79
    %p88 = scmp.eq.s32.totalorder %s26, 0
    %p89 = por %p87, %p88
    %p90 = scmp.ne.s32.totalorder %s78, %s79
    %p91 = scmp.eq.s32.totalorder %s27, 1
    %p92 = por %p90, %p91
    %p94 = scmp.ne.s32.totalorder %s79, %s93
    %p95 = scmp.eq.s32.totalorder %s27, 0
    %p96 = por %p94, %p95
    %s98 = sadd.s32 %s97, 1
    %p101 = scmp.eq.s32.totalorder %s21, 1
    %p102 = scmp.ne.s32.totalorder %s97, %s99
    %p103 = scmp.eq.s32.totalorder %s21, 0
    %p104 = por %p102, %p103
    %p105 = scmp.ne.s32.totalorder %s97, %s99
    %p106 = scmp.eq.s32.totalorder %s26, 1
    %p107 = por %p105, %p106
    %p108 = scmp.ne.s32.totalorder %s99, %s100
    %p109 = scmp.eq.s32.totalorder %s26, 0
    %p110 = por %p108, %p109
    %p111 = scmp.ne.s32.totalorder %s99, %s100
    %p112 = scmp.eq.s32.totalorder %s27, 1
    %p113 = por %p111, %p112
    %p115 = scmp.ne.s32.totalorder %s100, %s114
    %p116 = scmp.eq.s32.totalorder %s27, 0
    %p117 = por %p115, %p116
    %s119 = sadd.s32 %s118, 1
    %p122 = scmp.eq.s32.totalorder %s21, 1
    %p123 = scmp.ne.s32.totalorder %s118, %s120
    %p124 = scmp.eq.s32.totalorder %s21, 0
    %p125 = por %p123, %p124
    %p126 = scmp.ne.s32.totalorder %s118, %s120
    %p127 = scmp.eq.s32.totalorder %s26, 1
    %p128 = por %p126, %p127
    %p129 = scmp.ne.s32.totalorder %s120, %s121
    %p130 = scmp.eq.s32.totalorder %s26, 0
    %p131 = por %p129, %p130
    %p132 = scmp.ne.s32.totalorder %s120, %s121
    %p133 = scmp.eq.s32.totalorder %s27, 1
    %p134 = por %p132, %p133
    %p136 = scmp.ne.s32.totalorder %s121, %s135
    %p137 = scmp.eq.s32.totalorder %s27, 0
    %p138 = por %p136, %p137
    %s140 = sadd.s32 %s139, 1
    %p143 = scmp.eq.s32.totalorder %s21, 1
    %p144 = scmp.ne.s32.totalorder %s139, %s141
    %p145 = scmp.eq.s32.totalorder %s21, 0
    %p146 = por %p144, %p145
    %p147 = scmp.ne.s32.totalorder %s139, %s141
    %p148 = scmp.eq.s32.totalorder %s26, 1
    %p149 = por %p147, %p148
    %p150 = scmp.ne.s32.totalorder %s141, %s142
    %p151 = scmp.eq.s32.totalorder %s26, 0
    %p152 = por %p150, %p151
    %p153 = scmp.ne.s32.totalorder %s141, %s142
    %p154 = scmp.eq.s32.totalorder %s27, 1
    %p155 = por %p153, %p154
    %p157 = scmp.ne.s32.totalorder %s142, %s156
    %p158 = scmp.eq.s32.totalorder %s27, 0
    %p159 = por %p157, %p158
    %s161 = sadd.s32 %s160, 1
    %p164 = scmp.eq.s32.totalorder %s21, 1
    %p165 = scmp.ne.s32.totalorder %s160, %s162
    %p166 = scmp.eq.s32.totalorder %s21, 0
    %p167 = por %p165, %p166
    %p168 = scmp.ne.s32.totalorder %s160, %s162
    %p169 = scmp.eq.s32.totalorder %s26, 1
    %p170 = por %p168, %p169
    %p171 = scmp.ne.s32.totalorder %s162, %s163
    %p172 = scmp.eq.s32.totalorder %s26, 0
    %p173 = por %p171, %p172
    %p174 = scmp.ne.s32.totalorder %s162, %s163
    %p175 = scmp.eq.s32.totalorder %s27, 1
    %p176 = por %p174, %p175
    %p178 = scmp.ne.s32.totalorder %s163, %s177
    %p179 = scmp.eq.s32.totalorder %s27, 0
    %p180 = por %p178, %p179
    %s182 = sadd.s32 %s181, 1
    %p185 = scmp.eq.s32.totalorder %s21, 1
    %p186 = scmp.ne.s32.totalorder %s181, %s183
    %p187 = scmp.eq.s32.totalorder %s21, 0
    %p188 = por %p186, %p187
    %p189 = scmp.ne.s32.totalorder %s181, %s183
    %p190 = scmp.eq.s32.totalorder %s26, 1
    %p191 = por %p189, %p190
    %p192 = scmp.ne.s32.totalorder %s183, %s184
    %p193 = scmp.eq.s32.totalorder %s26, 0
    %p194 = por %p192, %p193
    %p195 = scmp.ne.s32.totalorder %s183, %s184
    %p196 = scmp.eq.s32.totalorder %s27, 1
    %p197 = por %p195, %p196
    %p199 = scmp.ne.s32.totalorder %s184, %s198
    %p200 = scmp.eq.s32.totalorder %s27, 0
    %p201 = por %p199, %p200
    %s203 = sadd.s32 %s202, 1
    %p206 = scmp.eq.s32.totalorder %s21, 1
    %p207 = scmp.ne.s32.totalorder %s202, %s204
    %p208 = scmp.eq.s32.totalorder %s21, 0
    %p209 = por %p207, %p208
    %p210 = scmp.ne.s32.totalorder %s202, %s204
    %p211 = scmp.eq.s32.totalorder %s26, 1
    %p212 = por %p210, %p211
    %p213 = scmp.ne.s32.totalorder %s204, %s205
    %p214 = scmp.eq.s32.totalorder %s26, 0
    %p215 = por %p213, %p214
    %p216 = scmp.ne.s32.totalorder %s204, %s205
    %p217 = scmp.eq.s32.totalorder %s27, 1
    %p218 = por %p216, %p217
    %p220 = scmp.ne.s32.totalorder %s205, %s219
    %p221 = scmp.eq.s32.totalorder %s27, 0
    %p222 = por %p220, %p221
    %s224 = sadd.s32 %s223, 1
    %p227 = scmp.eq.s32.totalorder %s21, 1
    %p228 = scmp.ne.s32.totalorder %s223, %s225
    %p229 = scmp.eq.s32.totalorder %s21, 0
    %p230 = por %p228, %p229
    %p231 = scmp.ne.s32.totalorder %s223, %s225
    %p232 = scmp.eq.s32.totalorder %s26, 1
    %p233 = por %p231, %p232
    %p234 = scmp.ne.s32.totalorder %s225, %s226
    %p235 = scmp.eq.s32.totalorder %s26, 0
    %p236 = por %p234, %p235
    %p237 = scmp.ne.s32.totalorder %s225, %s226
    %p238 = scmp.eq.s32.totalorder %s27, 1
    %p239 = por %p237, %p238
    %p241 = scmp.ne.s32.totalorder %s226, %s240
    %p242 = scmp.eq.s32.totalorder %s27, 0
    %p243 = por %p241, %p242
    %s245 = sadd.s32 %s244, 1
    %p248 = scmp.eq.s32.totalorder %s21, 1
    %p249 = scmp.ne.s32.totalorder %s244, %s246
    %p250 = scmp.eq.s32.totalorder %s21, 0
    %p251 = por %p249, %p250
    %p252 = scmp.ne.s32.totalorder %s244, %s246
    %p253 = scmp.eq.s32.totalorder %s26, 1
    %p254 = por %p252, %p253
    %p255 = scmp.ne.s32.totalorder %s246, %s247
    %p256 = scmp.eq.s32.totalorder %s26, 0
    %p257 = por %p255, %p256
    %p258 = scmp.ne.s32.totalorder %s246, %s247
    %p259 = scmp.eq.s32.totalorder %s27, 1
    %p260 = por %p258, %p259
    %p262 = scmp.ne.s32.totalorder %s247, %s261
    %p263 = scmp.eq.s32.totalorder %s27, 0
    %p264 = por %p262, %p263
    %s266 = sadd.s32 %s265, 1
    %p269 = scmp.eq.s32.totalorder %s21, 1
    %p270 = scmp.ne.s32.totalorder %s265, %s267
    %p271 = scmp.eq.s32.totalorder %s21, 0
    %p272 = por %p270, %p271
    %p273 = scmp.ne.s32.totalorder %s265, %s267
    %p274 = scmp.eq.s32.totalorder %s26, 1
    %p275 = por %p273, %p274
    %p276 = scmp.ne.s32.totalorder %s267, %s268
    %p277 = scmp.eq.s32.totalorder %s26, 0
    %p278 = por %p276, %p277
    %p279 = scmp.ne.s32.totalorder %s267, %s268
    %p280 = scmp.eq.s32.totalorder %s27, 1
    %p281 = por %p279, %p280
    %p283 = scmp.ne.s32.totalorder %s268, %s282
    %p284 = scmp.eq.s32.totalorder %s27, 0
    %p285 = por %p283, %p284
    %s287 = sadd.s32 %s286, 1
    %p290 = scmp.eq.s32.totalorder %s21, 1
    %p291 = scmp.ne.s32.totalorder %s286, %s288
    %p292 = scmp.eq.s32.totalorder %s21, 0
    %p293 = por %p291, %p292
    %p294 = scmp.ne.s32.totalorder %s286, %s288
    %p295 = scmp.eq.s32.totalorder %s26, 1
    %p296 = por %p294, %p295
    %p297 = scmp.ne.s32.totalorder %s288, %s289
    %p298 = scmp.eq.s32.totalorder %s26, 0
    %p299 = por %p297, %p298
    %p300 = scmp.ne.s32.totalorder %s288, %s289
    %p301 = scmp.eq.s32.totalorder %s27, 1
    %p302 = por %p300, %p301
    %p304 = scmp.ne.s32.totalorder %s289, %s303
    %p305 = scmp.eq.s32.totalorder %s27, 0
    %p306 = por %p304, %p305
    %s308 = sadd.s32 %s307, 1
    %p311 = scmp.eq.s32.totalorder %s21, 1
    %p312 = scmp.ne.s32.totalorder %s307, %s309
    %p313 = scmp.eq.s32.totalorder %s21, 0
    %p314 = por %p312, %p313
    %p315 = scmp.ne.s32.totalorder %s307, %s309
    %p316 = scmp.eq.s32.totalorder %s26, 1
    %p317 = por %p315, %p316
    %p318 = scmp.ne.s32.totalorder %s309, %s310
    %p319 = scmp.eq.s32.totalorder %s26, 0
    %p320 = por %p318, %p319
    %p321 = scmp.ne.s32.totalorder %s309, %s310
    %p322 = scmp.eq.s32.totalorder %s27, 1
    %p323 = por %p321, %p322
    %p325 = scmp.ne.s32.totalorder %s310, %s324
    %p326 = scmp.eq.s32.totalorder %s27, 0
    %p327 = por %p325, %p326
    %s329 = sadd.s32 %s328, 1
    %p332 = scmp.eq.s32.totalorder %s21, 1
    %p333 = scmp.ne.s32.totalorder %s328, %s330
    %p334 = scmp.eq.s32.totalorder %s21, 0
    %p335 = por %p333, %p334
    %p336 = scmp.ne.s32.totalorder %s328, %s330
    %p337 = scmp.eq.s32.totalorder %s26, 1
    %p338 = por %p336, %p337
    %p339 = scmp.ne.s32.totalorder %s330, %s331
    %p340 = scmp.eq.s32.totalorder %s26, 0
    %p341 = por %p339, %p340
    %p342 = scmp.ne.s32.totalorder %s330, %s331
    %p343 = scmp.eq.s32.totalorder %s27, 1
    %p344 = por %p342, %p343
    %p346 = scmp.ne.s32.totalorder %s331, %s345
    %p347 = scmp.eq.s32.totalorder %s27, 0
    %p348 = por %p346, %p347
    %s349 = ssub.s32 %s21, %s28
    %p350 = scmp.eq.s32.totalorder %s349, 0
    %s352 = sadd.s32 %s351, 1
    %s353 = scalar_select %p350, %s351, %s352
    %p356 = pneg %p350
    %p357 = scmp.eq.s32.totalorder %s21, 1
    %p358 = por %p356, %p357
    %p359 = scmp.ne.s32.totalorder %s351, %s354
    %p360 = scmp.eq.s32.totalorder %s21, 0
    %p361 = por %p359, %p360
    %p362 = scmp.ne.s32.totalorder %s351, %s354
    %p363 = scmp.eq.s32.totalorder %s26, 1
    %p364 = por %p362, %p363
    %p365 = scmp.ne.s32.totalorder %s354, %s355
    %p366 = scmp.eq.s32.totalorder %s26, 0
    %p367 = por %p365, %p366
    %p368 = scmp.ne.s32.totalorder %s354, %s355
    %p369 = scmp.eq.s32.totalorder %s27, 1
    %p370 = por %p368, %p369
    %p372 = scmp.ne.s32.totalorder %s355, %s371
    %p373 = scmp.eq.s32.totalorder %s27, 0
    %p374 = por %p372, %p373
    %p375 = scmp.le.s32.totalorder 1, %s21
    %p376 = scmp.lt.s32.totalorder %s21, 3
    %p377 = pnand %p375, %p376
    %p378 = pneg %p377
    // Predicated region
    $region9: #{lenet_forward.1} parent=5 // pred_check
      _
    $region10: #{lenet_forward.1} parent=5 // pred_check_branch
      %380 = sbr.rel (%p377) target = $region12
    $region11: #{lenet_forward.1} parent=5 // pred_region
      %s381 = ssub.s32 %s21, 1
      // Predicated region
      $region13: #{lenet_forward.1} parent=11 // pred_check
        %p382 = pneg %p68
      $region14: #{lenet_forward.1} parent=11 // pred_check_branch
        %384 = sbr.rel (%p382) target = $region16
      $region15: #{lenet_forward.1} parent=11 // pred_region
        _
      $region16: #{lenet_forward.1} parent=11 // pred_fallthru
        _
      // Predicated region
      $region17: #{lenet_forward.1} parent=11 // pred_check
        %p385 = pneg %p89
      $region18: #{lenet_forward.1} parent=11 // pred_check_branch
        %387 = sbr.rel (%p385) target = $region20
      $region19: #{lenet_forward.1} parent=11 // pred_region
        _
      $region20: #{lenet_forward.1} parent=11 // pred_fallthru
        _
      // Predicated region
      $region21: #{lenet_forward.1} parent=11 // pred_check
        %p388 = pneg %p110
      $region22: #{lenet_forward.1} parent=11 // pred_check_branch
        %390 = sbr.rel (%p388) target = $region24
      $region23: #{lenet_forward.1} parent=11 // pred_region
        _
      $region24: #{lenet_forward.1} parent=11 // pred_fallthru
        _
      // Predicated region
      $region25: #{lenet_forward.1} parent=11 // pred_check
        %p391 = pneg %p131
      $region26: #{lenet_forward.1} parent=11 // pred_check_branch
        %393 = sbr.rel (%p391) target = $region28
      $region27: #{lenet_forward.1} parent=11 // pred_region
        _
      $region28: #{lenet_forward.1} parent=11 // pred_fallthru
        _
      // Predicated region
      $region29: #{lenet_forward.1} parent=11 // pred_check
        %p394 = pneg %p152
      $region30: #{lenet_forward.1} parent=11 // pred_check_branch
        %396 = sbr.rel (%p394) target = $region32
      $region31: #{lenet_forward.1} parent=11 // pred_region
        _
      $region32: #{lenet_forward.1} parent=11 // pred_fallthru
        _
      // Predicated region
      $region33: #{lenet_forward.1} parent=11 // pred_check
        %p397 = pneg %p173
      $region34: #{lenet_forward.1} parent=11 // pred_check_branch
        %399 = sbr.rel (%p397) target = $region36
      $region35: #{lenet_forward.1} parent=11 // pred_region
        _
      $region36: #{lenet_forward.1} parent=11 // pred_fallthru
        _
      // Predicated region
      $region37: #{lenet_forward.1} parent=11 // pred_check
        %p400 = pneg %p194
      $region38: #{lenet_forward.1} parent=11 // pred_check_branch
        %402 = sbr.rel (%p400) target = $region40
      $region39: #{lenet_forward.1} parent=11 // pred_region
        _
      $region40: #{lenet_forward.1} parent=11 // pred_fallthru
        _
      // Predicated region
      $region41: #{lenet_forward.1} parent=11 // pred_check
        %p403 = pneg %p215
      $region42: #{lenet_forward.1} parent=11 // pred_check_branch
        %405 = sbr.rel (%p403) target = $region44
      $region43: #{lenet_forward.1} parent=11 // pred_region
        _
      $region44: #{lenet_forward.1} parent=11 // pred_fallthru
        _
      // Predicated region
      $region45: #{lenet_forward.1} parent=11 // pred_check
        %p406 = pneg %p236
      $region46: #{lenet_forward.1} parent=11 // pred_check_branch
        %408 = sbr.rel (%p406) target = $region48
      $region47: #{lenet_forward.1} parent=11 // pred_region
        _
      $region48: #{lenet_forward.1} parent=11 // pred_fallthru
        _
      // Predicated region
      $region49: #{lenet_forward.1} parent=11 // pred_check
        %p409 = pneg %p257
      $region50: #{lenet_forward.1} parent=11 // pred_check_branch
        %411 = sbr.rel (%p409) target = $region52
      $region51: #{lenet_forward.1} parent=11 // pred_region
        _
      $region52: #{lenet_forward.1} parent=11 // pred_fallthru
        _
      // Predicated region
      $region53: #{lenet_forward.1} parent=11 // pred_check
        %p412 = pneg %p278
      $region54: #{lenet_forward.1} parent=11 // pred_check_branch
        %414 = sbr.rel (%p412) target = $region56
      $region55: #{lenet_forward.1} parent=11 // pred_region
        _
      $region56: #{lenet_forward.1} parent=11 // pred_fallthru
        _
      // Predicated region
      $region57: #{lenet_forward.1} parent=11 // pred_check
        %p415 = pneg %p299
      $region58: #{lenet_forward.1} parent=11 // pred_check_branch
        %417 = sbr.rel (%p415) target = $region60
      $region59: #{lenet_forward.1} parent=11 // pred_region
        _
      $region60: #{lenet_forward.1} parent=11 // pred_fallthru
        _
      // Predicated region
      $region61: #{lenet_forward.1} parent=11 // pred_check
        %p418 = pneg %p320
      $region62: #{lenet_forward.1} parent=11 // pred_check_branch
        %420 = sbr.rel (%p418) target = $region64
      $region63: #{lenet_forward.1} parent=11 // pred_region
        _
      $region64: #{lenet_forward.1} parent=11 // pred_fallthru
        _
      // Predicated region
      $region65: #{lenet_forward.1} parent=11 // pred_check
        %p421 = pneg %p341
      $region66: #{lenet_forward.1} parent=11 // pred_check_branch
        %423 = sbr.rel (%p421) target = $region68
      $region67: #{lenet_forward.1} parent=11 // pred_region
        _
      $region68: #{lenet_forward.1} parent=11 // pred_fallthru
        _
    $region12: #{lenet_forward.1} parent=5 // pred_fallthru
      _
    %p424 = scmp.lt.s32.totalorder %s21, 2
    // Predicated region
    $region69: #{lenet_forward.1} parent=5 // pred_check
      %p425 = pneg %p424
    $region70: #{lenet_forward.1} parent=5 // pred_check_branch
      %427 = sbr.rel (%p425) target = $region72
    $region71: #{lenet_forward.1} parent=5 // pred_region
      // Predicated region
      $region73: #{lenet_forward.1} parent=71 // pred_check
        %p428 = pneg %p41
      $region74: #{lenet_forward.1} parent=71 // pred_check_branch
        %430 = sbr.rel (%p428) target = $region76
      $region75: #{lenet_forward.1} parent=71 // pred_region
        %p431 = scmp.lt.s32.totalorder %s21, 1
        %s432 = scalar_select %p431, %s21, 1
        %s433 = smul.addr %s432, 64
        %s434 = smul.addr %s433, 4
        %s435 = scalar_lea.vmem %s0, %s434
      $region76: #{lenet_forward.1} parent=71 // pred_fallthru
        _
    $region72: #{lenet_forward.1} parent=5 // pred_fallthru
      _
    %p436 = scmp.le.s32.totalorder 1, %s21
    %p437 = scmp.lt.s32.totalorder %s21, 3
    %p438 = pnand %p436, %p437
    %p439 = pneg %p438
    // Predicated region
    $region77: #{lenet_forward.1} parent=5 // pred_check
      _
    $region78: #{lenet_forward.1} parent=5 // pred_check_branch
      %441 = sbr.rel (%p438) target = $region80
    $region79: #{lenet_forward.1} parent=5 // pred_region
      %s442 = ssub.s32 %s21, 1
      %p443 = scmp.lt.s32.totalorder %s26, 1
      %s444 = scalar_select %p443, %s26, 1
      %s445 = smul.addr %s444, 64
      %s446 = smul.addr %s445, 4
      %s447 = scalar_lea.vmem %s0, %s446
      %p448 = pneg %p47
      %p449 = pneg %p44
      %p450 = pneg %p68
      %p451 = pneg %p65
      %p452 = pneg %p89
      %p453 = pneg %p86
      %p454 = pneg %p110
      %p455 = pneg %p107
      %p456 = pneg %p131
      %p457 = pneg %p128
      %p458 = pneg %p152
      %p459 = pneg %p149
      %p460 = pneg %p173
      %p461 = pneg %p170
      %p462 = pneg %p194
      %p463 = pneg %p191
      %p464 = pneg %p215
      %p465 = pneg %p212
      %p466 = pneg %p236
      %p467 = pneg %p233
      %p468 = pneg %p257
      %p469 = pneg %p254
      %p470 = pneg %p278
      %p471 = pneg %p275
      %p472 = pneg %p299
      %p473 = pneg %p296
      %p474 = pneg %p320
      %p475 = pneg %p317
      %p476 = pneg %p341
      %p477 = pneg %p338
      %p478 = pneg %p367
      %p479 = pneg %p364
      %p480 = scmp.lt.s32.totalorder %s26, 1
      %s481 = scalar_select %p480, %s26, 1
      %s482 = smul.addr %s481, 2
      %s483 = smul.addr %s482, 8
      %s484 = scalar_lea.vmem %s15, %s483
      %p485 = scmp.lt.s32.totalorder %s26, 1
      %s486 = scalar_select %p485, %s26, 1
      %s487 = smul.addr %s486, 64
      %s488 = smul.addr %s487, 4
      %s489 = scalar_lea.vmem %s0, %s488
      %p490 = scmp.lt.s32.totalorder %s26, 1
      %s491 = scalar_select %p490, %s26, 1
      %s492 = smul.addr %s491, 2
      %s493 = smul.addr %s492, 8
      %s494 = scalar_lea.vmem %s15, %s493
      %v496 = vld [vmem:[%s489] sm:$0xf]
      %v497 = vld [vmem:[%s489 + $0x4] sm:$0xf]
      %v498 = vld [vmem:[%s489 + $0x8] sm:$0xf]
      %v499 = vld [vmem:[%s489 + $0xc] sm:$0xf]
      %v500 = vld [vmem:[%s489 + $0x10] sm:$0xf]
      %v501 = vld [vmem:[%s489 + $0x14] sm:$0xf]
      %v502 = vld [vmem:[%s489 + $0x18] sm:$0xf]
      %v503 = vld [vmem:[%s489 + $0x1c] sm:$0xf]
      %v504 = vld [vmem:[%s489 + $0x20] sm:$0xf]
      %v505 = vld [vmem:[%s489 + $0x24] sm:$0xf]
      %v506 = vld [vmem:[%s489 + $0x28] sm:$0xf]
      %v507 = vld [vmem:[%s489 + $0x2c] sm:$0xf]
      %v508 = vld [vmem:[%s489 + $0x30] sm:$0xf]
      %v509 = vld [vmem:[%s489 + $0x34] sm:$0xf]
      %v510 = vld [vmem:[%s489 + $0x38] sm:$0xf]
      %v511 = vld [vmem:[%s489 + $0x3c] sm:$0xf]
      %v512 = vld [vmem:[%s489 + $0x40] sm:$0xf]
      %v513 = vld [vmem:[%s489 + $0x44] sm:$0xf]
      %v514 = vld [vmem:[%s489 + $0x48] sm:$0xf]
      %v515 = vld [vmem:[%s489 + $0x4c] sm:$0xf]
      %v516 = vld [vmem:[%s489 + $0x50] sm:$0xf]
      %v517 = vld [vmem:[%s489 + $0x54] sm:$0xf]
      %v518 = vld [vmem:[%s489 + $0x58] sm:$0xf]
      %v519 = vld [vmem:[%s489 + $0x5c] sm:$0xf]
      %v520 = vld [vmem:[%s489 + $0x60] sm:$0xf]
      %v521 = vld [vmem:[%s489 + $0x64] sm:$0xf]
      %v522 = vld [vmem:[%s489 + $0x68] sm:$0xf]
      %v523 = vld [vmem:[%s489 + $0x6c] sm:$0xf]
      %v524 = vld [vmem:[%s489 + $0x70] sm:$0xf]
      %v525 = vld [vmem:[%s489 + $0x74] sm:$0xf]
      %v526 = vld [vmem:[%s489 + $0x78] sm:$0xf]
      %v527 = vld [vmem:[%s489 + $0x7c] sm:$0xf]
      %v528 = vld [vmem:[%s489 + $0x80] sm:$0xf]
      %v529 = vld [vmem:[%s489 + $0x84] sm:$0xf]
      %v530 = vld [vmem:[%s489 + $0x88] sm:$0xf]
      %v531 = vld [vmem:[%s489 + $0x8c] sm:$0xf]
      %v532 = vld [vmem:[%s489 + $0x90] sm:$0xf]
      %v533 = vld [vmem:[%s489 + $0x94] sm:$0xf]
      %v534 = vld [vmem:[%s489 + $0x98] sm:$0xf]
      %v535 = vld [vmem:[%s489 + $0x9c] sm:$0xf]
      %v536 = vld [vmem:[%s489 + $0xa0] sm:$0xf]
      %v537 = vld [vmem:[%s489 + $0xa4] sm:$0xf]
      %v538 = vld [vmem:[%s489 + $0xa8] sm:$0xf]
      %v539 = vld [vmem:[%s489 + $0xac] sm:$0xf]
      %v540 = vld [vmem:[%s489 + $0xb0] sm:$0xf]
      %v541 = vld [vmem:[%s489 + $0xb4] sm:$0xf]
      %v542 = vld [vmem:[%s489 + $0xb8] sm:$0xf]
      %v543 = vld [vmem:[%s489 + $0xbc] sm:$0xf]
      %v544 = vld [vmem:[%s489 + $0xc0] sm:$0xf]
      %v545 = vld [vmem:[%s489 + $0xc4] sm:$0xf]
      %v546 = vld [vmem:[%s489 + $0xc8] sm:$0xf]
      %v547 = vld [vmem:[%s489 + $0xcc] sm:$0xf]
      %v548 = vld [vmem:[%s489 + $0xd0] sm:$0xf]
      %v549 = vld [vmem:[%s489 + $0xd4] sm:$0xf]
      %v550 = vld [vmem:[%s489 + $0xd8] sm:$0xf]
      %v551 = vld [vmem:[%s489 + $0xdc] sm:$0xf]
      %v552 = vld [vmem:[%s489 + $0xe0] sm:$0xf]
      %v553 = vld [vmem:[%s489 + $0xe4] sm:$0xf]
      %v554 = vld [vmem:[%s489 + $0xe8] sm:$0xf]
      %v555 = vld [vmem:[%s489 + $0xec] sm:$0xf]
      %v556 = vld [vmem:[%s489 + $0xf0] sm:$0xf]
      %v557 = vld [vmem:[%s489 + $0xf4] sm:$0xf]
      %v558 = vld [vmem:[%s489 + $0xf8] sm:$0xf]
      %v559 = vld [vmem:[%s489 + $0xfc] sm:$0xf]
      %v560 = vld [vmem:[%s1] sm:$0xff]
      %v561 = vld [vmem:[%s1 + $0x8] sm:$0xff]
      %v562 = vld [vmem:[%s1 + $0x10] sm:$0xff]
      %v563 = vld [vmem:[%s1 + $0x18] sm:$0xff]
      %v564 = vld [vmem:[%s1 + $0x20] sm:$0xff]
      %v565 = vld [vmem:[%s1 + $0x28] sm:$0xff]
      %v566 = vld [vmem:[%s1 + $0x30] sm:$0xff]
      %v567 = vld [vmem:[%s1 + $0x38] sm:$0xff]
      %v568 = vld [vmem:[%s1 + $0x40] sm:$0xff]
      %v569 = vld [vmem:[%s1 + $0x48] sm:$0xff]
      %v570 = vld [vmem:[%s1 + $0x50] sm:$0xff]
      %v571 = vld [vmem:[%s1 + $0x58] sm:$0xff]
      %v572 = vld [vmem:[%s1 + $0x60] sm:$0xff]
      %v573 = vld [vmem:[%s1 + $0x68] sm:$0xff]
      %v574 = vld [vmem:[%s1 + $0x70] sm:$0xff]
      %v575 = vld [vmem:[%s1 + $0x78] sm:$0xff]
      %s576 = scalar_lea.vmem %s1, 128
      %v577 = vld [vmem:[%s576] sm:$0xff]
      %v578 = vld [vmem:[%s576 + $0x8] sm:$0xff]
      %v579 = vld [vmem:[%s576 + $0x10] sm:$0xff]
      %v580 = vld [vmem:[%s576 + $0x18] sm:$0xff]
      %v581 = vld [vmem:[%s576 + $0x20] sm:$0xff]
      %v582 = vld [vmem:[%s576 + $0x28] sm:$0xff]
      %v583 = vld [vmem:[%s576 + $0x30] sm:$0xff]
      %v584 = vld [vmem:[%s576 + $0x38] sm:$0xff]
      %v585 = vld [vmem:[%s576 + $0x40] sm:$0xff]
      %v586 = vld [vmem:[%s576 + $0x48] sm:$0xff]
      %v587 = vld [vmem:[%s576 + $0x50] sm:$0xff]
      %v588 = vld [vmem:[%s576 + $0x58] sm:$0xff]
      %v589 = vld [vmem:[%s576 + $0x60] sm:$0xff]
      %v590 = vld [vmem:[%s576 + $0x68] sm:$0xff]
      %v591 = vld [vmem:[%s576 + $0x70] sm:$0xff]
      %v592 = vld [vmem:[%s576 + $0x78] sm:$0xff]
      %v649 = vunpack.c.l.b16 %v498
      %v650 = vunpack.c.l.b16 %v499
      %v651 = vunpack.c.l.b16 %v500
      %v652 = vunpack.c.l.b16 %v501
      %v653 = vunpack.c.l.b16 %v502
      %v654 = vunpack.c.l.b16 %v503
      %v655 = vunpack.c.l.b16 %v504
      %v656 = vunpack.c.l.b16 %v505
      %v657 = vunpack.c.l.b16 %v506
      %v658 = vunpack.c.l.b16 %v507
      %v659 = vunpack.c.l.b16 %v508
      %v660 = vunpack.c.l.b16 %v509
      %v661 = vunpack.c.l.b16 %v510
      %v662 = vunpack.c.l.b16 %v511
      %v663 = vunpack.c.l.b16 %v512
      %v664 = vunpack.c.l.b16 %v513
      %v665 = vunpack.c.l.b16 %v514
      %v666 = vunpack.c.l.b16 %v515
      %v667 = vunpack.c.l.b16 %v516
      %v668 = vunpack.c.l.b16 %v517
      %v669 = vunpack.c.l.b16 %v518
      %v670 = vunpack.c.l.b16 %v519
      %v671 = vunpack.c.l.b16 %v520
      %v672 = vunpack.c.l.b16 %v521
      %v673 = vunpack.c.l.b16 %v522
      %v674 = vunpack.c.l.b16 %v523
      %v675 = vunpack.c.l.b16 %v524
      %v676 = vunpack.c.l.b16 %v525
      %v677 = vunpack.c.l.b16 %v526
      %v678 = vunpack.c.l.b16 %v527
      %v679 = vunpack.c.l.b16 %v528
      %v680 = vunpack.c.l.b16 %v529
      %v681 = vunpack.c.l.b16 %v530
      %v682 = vunpack.c.l.b16 %v531
      %v683 = vunpack.c.l.b16 %v532
      %v684 = vunpack.c.l.b16 %v533
      %v685 = vunpack.c.l.b16 %v534
      %v686 = vunpack.c.l.b16 %v535
      %v687 = vunpack.c.l.b16 %v536
      %v688 = vunpack.c.l.b16 %v537
      %v689 = vunpack.c.l.b16 %v538
      %v690 = vunpack.c.l.b16 %v539
      %v691 = vunpack.c.l.b16 %v540
      %v692 = vunpack.c.l.b16 %v541
      %v693 = vunpack.c.l.b16 %v542
      %v694 = vunpack.c.l.b16 %v543
      %v695 = vunpack.c.l.b16 %v544
      %v696 = vunpack.c.l.b16 %v545
      %v697 = vunpack.c.l.b16 %v546
      %v698 = vunpack.c.l.b16 %v547
      %v699 = vunpack.c.l.b16 %v548
      %v700 = vunpack.c.l.b16 %v549
      %v701 = vunpack.c.l.b16 %v550
      %v702 = vunpack.c.l.b16 %v551
      %v703 = vunpack.c.l.b16 %v552
      %v704 = vunpack.c.l.b16 %v553
      %v705 = vpack.c.b16 %v650, %v649
      %v706 = vpack.c.b16 %v652, %v651
      %v707 = vpack.c.b16 %v654, %v653
      %v708 = vpack.c.b16 %v656, %v655
      %v709 = vpack.c.b16 %v658, %v657
      %v710 = vpack.c.b16 %v660, %v659
      %v711 = vpack.c.b16 %v662, %v661
      %v712 = vpack.c.b16 %v664, %v663
      %v713 = vpack.c.b16 %v666, %v665
      %v714 = vpack.c.b16 %v668, %v667
      %v715 = vpack.c.b16 %v670, %v669
      %v716 = vpack.c.b16 %v672, %v671
      %v717 = vpack.c.b16 %v674, %v673
      %v718 = vpack.c.b16 %v676, %v675
      %v719 = vpack.c.b16 %v678, %v677
      %v720 = vpack.c.b16 %v680, %v679
      %v721 = vpack.c.b16 %v682, %v681
      %v722 = vpack.c.b16 %v684, %v683
      %v723 = vpack.c.b16 %v686, %v685
      %v724 = vpack.c.b16 %v688, %v687
      %v725 = vpack.c.b16 %v690, %v689
      %v726 = vpack.c.b16 %v692, %v691
      %v727 = vpack.c.b16 %v694, %v693
      %v728 = vpack.c.b16 %v696, %v695
      %v729 = vpack.c.b16 %v698, %v697
      %v730 = vpack.c.b16 %v700, %v699
      %v731 = vpack.c.b16 %v702, %v701
      %v732 = vpack.c.b16 %v704, %v703
      %v777 = vunpack.c.l.b16 %v577
      %v778 = vunpack.c.h.b16 %v577
      %v779 = vunpack.c.l.b16 %v578
      %v780 = vunpack.c.h.b16 %v578
      %v781 = vunpack.c.l.b16 %v579
      %v782 = vunpack.c.h.b16 %v579
      %v783 = vunpack.c.l.b16 %v580
      %v784 = vunpack.c.h.b16 %v580
      %v785 = vunpack.c.l.b16 %v581
      %v786 = vunpack.c.h.b16 %v581
      %v787 = vunpack.c.l.b16 %v582
      %v788 = vunpack.c.h.b16 %v582
      %v789 = vunpack.c.l.b16 %v583
      %v790 = vunpack.c.h.b16 %v583
      %v791 = vunpack.c.l.b16 %v584
      %v792 = vunpack.c.h.b16 %v584
      %v793 = vunpack.c.l.b16 %v585
      %v794 = vunpack.c.h.b16 %v585
      %v795 = vunpack.c.l.b16 %v586
      %v796 = vunpack.c.h.b16 %v586
      %v797 = vunpack.c.l.b16 %v587
      %v798 = vunpack.c.h.b16 %v587
      %v799 = vunpack.c.l.b16 %v588
      %v800 = vunpack.c.h.b16 %v588
      %v801 = vunpack.c.l.b16 %v589
      %v802 = vunpack.c.h.b16 %v589
      %v803 = vunpack.c.l.b16 %v590
      %v804 = vunpack.c.h.b16 %v590
      %v805 = vunpack.c.l.b16 %v591
      %v806 = vunpack.c.h.b16 %v591
      %v807 = vunpack.c.l.b16 %v592
      %v808 = vunpack.c.h.b16 %v592
      %v809 = vpack.c.b16 %v779, %v777
      %v810 = vpack.c.b16 %v780, %v778
      %v811 = vpack.c.b16 %v783, %v781
      %v812 = vpack.c.b16 %v784, %v782
      %v813 = vpack.c.b16 %v787, %v785
      %v814 = vpack.c.b16 %v788, %v786
      %v815 = vpack.c.b16 %v791, %v789
      %v816 = vpack.c.b16 %v792, %v790
      %v817 = vpack.c.b16 %v795, %v793
      %v818 = vpack.c.b16 %v796, %v794
      %v819 = vpack.c.b16 %v799, %v797
      %v820 = vpack.c.b16 %v800, %v798
      %v821 = vpack.c.b16 %v803, %v801
      %v822 = vpack.c.b16 %v804, %v802
      %v823 = vpack.c.b16 %v807, %v805
      %v824 = vpack.c.b16 %v808, %v806
      %841 = vmatprep.subr.bf16.mxu0 %v810
      %842 = vmatpush1.bf16.msra.mxu0 %v809
      %843 = vmatprep.subr.bf16.mxu0 %v812
      %844 = vmatpush1.bf16.msra.mxu0 %v811
      %845 = vmatprep.subr.bf16.mxu0 %v814
      %846 = vmatpush1.bf16.msra.mxu0 %v813
      %847 = vmatprep.subr.bf16.mxu0 %v816
      %848 = vmatpush1.bf16.msra.mxu0 %v815
      %849 = vmatprep.subr.bf16.mxu0 %v818
      %850 = vmatpush1.bf16.msra.mxu0 %v817
      %851 = vmatprep.subr.bf16.mxu0 %v820
      %852 = vmatpush1.bf16.msra.mxu0 %v819
      %853 = vmatprep.subr.bf16.mxu0 %v822
      %854 = vmatpush1.bf16.msra.mxu0 %v821
      %855 = vmatprep.subr.bf16.mxu0 %v824
      %856 = vmatpush1.bf16.msra.mxu0 %v823
      %857 = vmatprep.subr.bf16.mxu0 0
      %858 = vmatpush1.bf16.msra.mxu0 0
      %859 = vmatprep.subr.bf16.mxu0 0
      %860 = vmatpush1.bf16.msra.mxu0 0
      %861 = vmatprep.subr.bf16.mxu0 0
      %862 = vmatpush1.bf16.msra.mxu0 0
      %863 = vmatprep.subr.bf16.mxu0 0
      %864 = vmatpush1.bf16.msra.mxu0 0
      %865 = vmatprep.subr.bf16.mxu0 0
      %866 = vmatpush1.bf16.msra.mxu0 0
      %867 = vmatprep.subr.bf16.mxu0 0
      %868 = vmatpush1.bf16.msra.mxu0 0
      %869 = vmatprep.subr.bf16.mxu0 0
      %870 = vmatpush1.bf16.msra.mxu0 0
      %871 = vmatprep.subr.bf16.mxu0 0
      %872 = vmatpush1.bf16.msra.mxu0 0
      %873 = vmatprep.mubr.bf16.mxu0 0
      %874 = vmatmul.mubr.bf16.gmra.mrb[0].mxu0 %v705
      %v875 = vpop.f32.mrb[0].mxu0
      %v876 = vadd.f32 0.0, %v875
      %v877 = vpop.f32.mrb[0].mxu0
      %v878 = vadd.f32 0.0, %v877
      %v879 = vpop.f32.mrb[0].mxu0
      %v880 = vadd.f32 0.0, %v879
      %v881 = vpop.f32.mrb[0].mxu0
      %v882 = vadd.f32 0.0, %v881
      %883 = vmatprep.mubr.bf16.mxu0 0
      %884 = vmatmul.mubr.bf16.gmra.mrb[0].mxu0 %v706
      %v885 = vpop.f32.mrb[0].mxu0
      %v886 = vadd.f32 0.0, %v885
      %v887 = vpop.f32.mrb[0].mxu0
      %v888 = vadd.f32 0.0, %v887
      %v889 = vpop.f32.mrb[0].mxu0
      %v890 = vadd.f32 0.0, %v889
      %v891 = vpop.f32.mrb[0].mxu0
      %v892 = vadd.f32 0.0, %v891
      %893 = vmatprep.mubr.bf16.mxu0 0
      %894 = vmatmul.mubr.bf16.gmra.mrb[0].mxu0 %v707
      %v895 = vpop.f32.mrb[0].mxu0
      %v896 = vadd.f32 0.0, %v895
      %v897 = vpop.f32.mrb[0].mxu0
      %v898 = vadd.f32 0.0, %v897
      %v899 = vpop.f32.mrb[0].mxu0
      %v900 = vadd.f32 0.0, %v899
      %v901 = vpop.f32.mrb[0].mxu0
      %v902 = vadd.f32 0.0, %v901
      %903 = vmatprep.mubr.bf16.mxu0 0
      %904 = vmatmul.mubr.bf16.gmra.mrb[0].mxu0 %v708
      %v905 = vpop.f32.mrb[0].mxu0
      %v906 = vadd.f32 0.0, %v905
      %v907 = vpop.f32.mrb[0].mxu0
      %v908 = vadd.f32 0.0, %v907
      %v909 = vpop.f32.mrb[0].mxu0
      %v910 = vadd.f32 0.0, %v909
      %v911 = vpop.f32.mrb[0].mxu0
      %v912 = vadd.f32 0.0, %v911
      %913 = vmatprep.mubr.bf16.mxu0 0
      %914 = vmatmul.mubr.bf16.gmra.mrb[0].mxu0 %v709
      %v915 = vpop.f32.mrb[0].mxu0
      %v916 = vadd.f32 0.0, %v915
      %v917 = vpop.f32.mrb[0].mxu0
      %v918 = vadd.f32 0.0, %v917
      %v919 = vpop.f32.mrb[0].mxu0
      %v920 = vadd.f32 0.0, %v919
      %v921 = vpop.f32.mrb[0].mxu0
      %v922 = vadd.f32 0.0, %v921
      %923 = vmatprep.mubr.bf16.mxu0 0
      %924 = vmatmul.mubr.bf16.gmra.mrb[0].mxu0 %v710
      %v925 = vpop.f32.mrb[0].mxu0
      %v926 = vadd.f32 0.0, %v925
      %v927 = vpop.f32.mrb[0].mxu0
      %v928 = vadd.f32 0.0, %v927
      %v929 = vpop.f32.mrb[0].mxu0
      %v930 = vadd.f32 0.0, %v929
      %v931 = vpop.f32.mrb[0].mxu0
      %v932 = vadd.f32 0.0, %v931
      %933 = vmatprep.mubr.bf16.mxu0 0
      %934 = vmatmul.mubr.bf16.gmra.mrb[0].mxu0 %v711
      %v935 = vpop.f32.mrb[0].mxu0
      %v936 = vadd.f32 0.0, %v935
      %v937 = vpop.f32.mrb[0].mxu0
      %v938 = vadd.f32 0.0, %v937
      %v939 = vpop.f32.mrb[0].mxu0
      %v940 = vadd.f32 0.0, %v939
      %v941 = vpop.f32.mrb[0].mxu0
      %v942 = vadd.f32 0.0, %v941
      %943 = vmatprep.mubr.bf16.mxu0 0
      %944 = vmatmul.mubr.bf16.gmra.mrb[0].mxu0 %v712
      %v945 = vpop.f32.mrb[0].mxu0
      %v946 = vadd.f32 0.0, %v945
      %v947 = vpop.f32.mrb[0].mxu0
      %v948 = vadd.f32 0.0, %v947
      %v949 = vpop.f32.mrb[0].mxu0
      %v950 = vadd.f32 0.0, %v949
      %v951 = vpop.f32.mrb[0].mxu0
      %v952 = vadd.f32 0.0, %v951
      %953 = vmatprep.mubr.bf16.mxu0 0
      %954 = vmatmul.mubr.bf16.gmra.mrb[0].mxu0 %v713
      %v955 = vpop.f32.mrb[0].mxu0
      %v956 = vadd.f32 0.0, %v955
      %v957 = vpop.f32.mrb[0].mxu0
      %v958 = vadd.f32 0.0, %v957
      %v959 = vpop.f32.mrb[0].mxu0
      %v960 = vadd.f32 0.0, %v959
      %v961 = vpop.f32.mrb[0].mxu0
      %v962 = vadd.f32 0.0, %v961
      %963 = vmatprep.mubr.bf16.mxu0 0
      %964 = vmatmul.mubr.bf16.gmra.mrb[0].mxu0 %v714
      %v965 = vpop.f32.mrb[0].mxu0
      %v966 = vadd.f32 0.0, %v965
      %v967 = vpop.f32.mrb[0].mxu0
      %v968 = vadd.f32 0.0, %v967
      %v969 = vpop.f32.mrb[0].mxu0
      %v970 = vadd.f32 0.0, %v969
      %v971 = vpop.f32.mrb[0].mxu0
      %v972 = vadd.f32 0.0, %v971
      %973 = vmatprep.mubr.bf16.mxu0 0
      %974 = vmatmul.mubr.bf16.gmra.mrb[0].mxu0 %v715
      %v975 = vpop.f32.mrb[0].mxu0
      %v976 = vadd.f32 0.0, %v975
      %v977 = vpop.f32.mrb[0].mxu0
      %v978 = vadd.f32 0.0, %v977
      %v979 = vpop.f32.mrb[0].mxu0
      %v980 = vadd.f32 0.0, %v979
      %v981 = vpop.f32.mrb[0].mxu0
      %v982 = vadd.f32 0.0, %v981
      %983 = vmatprep.mubr.bf16.mxu0 0
      %984 = vmatmul.mubr.bf16.gmra.mrb[0].mxu0 %v716
      %v985 = vpop.f32.mrb[0].mxu0
      %v986 = vadd.f32 0.0, %v985
      %v987 = vpop.f32.mrb[0].mxu0
      %v988 = vadd.f32 0.0, %v987
      %v989 = vpop.f32.mrb[0].mxu0
      %v990 = vadd.f32 0.0, %v989
      %v991 = vpop.f32.mrb[0].mxu0
      %v992 = vadd.f32 0.0, %v991
      %993 = vmatprep.mubr.bf16.mxu0 0
      %994 = vmatmul.mubr.bf16.gmra.mrb[0].mxu0 %v717
      %v995 = vpop.f32.mrb[0].mxu0
      %v996 = vadd.f32 0.0, %v995
      %v997 = vpop.f32.mrb[0].mxu0
      %v998 = vadd.f32 0.0, %v997
      %v999 = vpop.f32.mrb[0].mxu0
      %v1000 = vadd.f32 0.0, %v999
      %v1001 = vpop.f32.mrb[0].mxu0
      %v1002 = vadd.f32 0.0, %v1001
      %1003 = vmatprep.mubr.bf16.mxu0 0
      %1004 = vmatmul.mubr.bf16.gmra.mrb[0].mxu0 %v718
      %v1005 = vpop.f32.mrb[0].mxu0
      %v1006 = vadd.f32 0.0, %v1005
      %v1007 = vpop.f32.mrb[0].mxu0
      %v1008 = vadd.f32 0.0, %v1007
      %v1009 = vpop.f32.mrb[0].mxu0
      %v1010 = vadd.f32 0.0, %v1009
      %v1011 = vpop.f32.mrb[0].mxu0
      %v1012 = vadd.f32 0.0, %v1011
      %1013 = vmatprep.mubr.bf16.mxu0 0
      %1014 = vmatmul.mubr.bf16.gmra.mrb[0].mxu0 %v719
      %v1015 = vpop.f32.mrb[0].mxu0
      %v1016 = vadd.f32 0.0, %v1015
      %v1017 = vpop.f32.mrb[0].mxu0
      %v1018 = vadd.f32 0.0, %v1017
      %v1019 = vpop.f32.mrb[0].mxu0
      %v1020 = vadd.f32 0.0, %v1019
      %v1021 = vpop.f32.mrb[0].mxu0
      %v1022 = vadd.f32 0.0, %v1021
      %1023 = vmatprep.mubr.bf16.mxu0 0
      %1024 = vmatmul.mubr.bf16.gmra.mrb[0].mxu0 %v720
      %v1025 = vpop.f32.mrb[0].mxu0
      %v1026 = vadd.f32 0.0, %v1025
      %v1027 = vpop.f32.mrb[0].mxu0
      %v1028 = vadd.f32 0.0, %v1027
      %v1029 = vpop.f32.mrb[0].mxu0
      %v1030 = vadd.f32 0.0, %v1029
      %v1031 = vpop.f32.mrb[0].mxu0
      %v1032 = vadd.f32 0.0, %v1031
      %1033 = vmatprep.mubr.bf16.mxu0 0
      %1034 = vmatmul.mubr.bf16.gmra.mrb[0].mxu0 %v721
      %v1035 = vpop.f32.mrb[0].mxu0
      %v1036 = vadd.f32 0.0, %v1035
      %v1037 = vpop.f32.mrb[0].mxu0
      %v1038 = vadd.f32 0.0, %v1037
      %v1039 = vpop.f32.mrb[0].mxu0
      %v1040 = vadd.f32 0.0, %v1039
      %v1041 = vpop.f32.mrb[0].mxu0
      %v1042 = vadd.f32 0.0, %v1041
      %1043 = vmatprep.mubr.bf16.mxu0 0
      %1044 = vmatmul.mubr.bf16.gmra.mrb[0].mxu0 %v722
      %v1045 = vpop.f32.mrb[0].mxu0
      %v1046 = vadd.f32 0.0, %v1045
      %v1047 = vpop.f32.mrb[0].mxu0
      %v1048 = vadd.f32 0.0, %v1047
      %v1049 = vpop.f32.mrb[0].mxu0
      %v1050 = vadd.f32 0.0, %v1049
      %v1051 = vpop.f32.mrb[0].mxu0
      %v1052 = vadd.f32 0.0, %v1051
      %1053 = vmatprep.mubr.bf16.mxu0 0
      %1054 = vmatmul.mubr.bf16.gmra.mrb[0].mxu0 %v723
      %v1055 = vpop.f32.mrb[0].mxu0
      %v1056 = vadd.f32 0.0, %v1055
      %v1057 = vpop.f32.mrb[0].mxu0
      %v1058 = vadd.f32 0.0, %v1057
      %v1059 = vpop.f32.mrb[0].mxu0
      %v1060 = vadd.f32 0.0, %v1059
      %v1061 = vpop.f32.mrb[0].mxu0
      %v1062 = vadd.f32 0.0, %v1061
      %1063 = vmatprep.mubr.bf16.mxu0 0
      %1064 = vmatmul.mubr.bf16.gmra.mrb[0].mxu0 %v724
      %v1065 = vpop.f32.mrb[0].mxu0
      %v1066 = vadd.f32 0.0, %v1065
      %v1067 = vpop.f32.mrb[0].mxu0
      %v1068 = vadd.f32 0.0, %v1067
      %v1069 = vpop.f32.mrb[0].mxu0
      %v1070 = vadd.f32 0.0, %v1069
      %v1071 = vpop.f32.mrb[0].mxu0
      %v1072 = vadd.f32 0.0, %v1071
      %1073 = vmatprep.mubr.bf16.mxu0 0
      %1074 = vmatmul.mubr.bf16.gmra.mrb[0].mxu0 %v725
      %v1075 = vpop.f32.mrb[0].mxu0
      %v1076 = vadd.f32 0.0, %v1075
      %v1077 = vpop.f32.mrb[0].mxu0
      %v1078 = vadd.f32 0.0, %v1077
      %v1079 = vpop.f32.mrb[0].mxu0
      %v1080 = vadd.f32 0.0, %v1079
      %v1081 = vpop.f32.mrb[0].mxu0
      %v1082 = vadd.f32 0.0, %v1081
      %1083 = vmatprep.mubr.bf16.mxu0 0
      %1084 = vmatmul.mubr.bf16.gmra.mrb[0].mxu0 %v726
      %v1085 = vpop.f32.mrb[0].mxu0
      %v1086 = vadd.f32 0.0, %v1085
      %v1087 = vpop.f32.mrb[0].mxu0
      %v1088 = vadd.f32 0.0, %v1087
      %v1089 = vpop.f32.mrb[0].mxu0
      %v1090 = vadd.f32 0.0, %v1089
      %v1091 = vpop.f32.mrb[0].mxu0
      %v1092 = vadd.f32 0.0, %v1091
      %1093 = vmatprep.mubr.bf16.mxu0 0
      %1094 = vmatmul.mubr.bf16.gmra.mrb[0].mxu0 %v727
      %v1095 = vpop.f32.mrb[0].mxu0
      %v1096 = vadd.f32 0.0, %v1095
      %v1097 = vpop.f32.mrb[0].mxu0
      %v1098 = vadd.f32 0.0, %v1097
      %v1099 = vpop.f32.mrb[0].mxu0
      %v1100 = vadd.f32 0.0, %v1099
      %v1101 = vpop.f32.mrb[0].mxu0
      %v1102 = vadd.f32 0.0, %v1101
      %1103 = vmatprep.mubr.bf16.mxu0 0
      %1104 = vmatmul.mubr.bf16.gmra.mrb[0].mxu0 %v728
      %v1105 = vpop.f32.mrb[0].mxu0
      %v1106 = vadd.f32 0.0, %v1105
      %v1107 = vpop.f32.mrb[0].mxu0
      %v1108 = vadd.f32 0.0, %v1107
      %v1109 = vpop.f32.mrb[0].mxu0
      %v1110 = vadd.f32 0.0, %v1109
      %v1111 = vpop.f32.mrb[0].mxu0
      %v1112 = vadd.f32 0.0, %v1111
      %1113 = vmatprep.mubr.bf16.mxu0 0
      %1114 = vmatmul.mubr.bf16.gmra.mrb[0].mxu0 %v729
      %v1115 = vpop.f32.mrb[0].mxu0
      %v1116 = vadd.f32 0.0, %v1115
      %v1117 = vpop.f32.mrb[0].mxu0
      %v1118 = vadd.f32 0.0, %v1117
      %v1119 = vpop.f32.mrb[0].mxu0
      %v1120 = vadd.f32 0.0, %v1119
      %v1121 = vpop.f32.mrb[0].mxu0
      %v1122 = vadd.f32 0.0, %v1121
      %1123 = vmatprep.mubr.bf16.mxu0 0
      %1124 = vmatmul.mubr.bf16.gmra.mrb[0].mxu0 %v730
      %v1125 = vpop.f32.mrb[0].mxu0
      %v1126 = vadd.f32 0.0, %v1125
      %v1127 = vpop.f32.mrb[0].mxu0
      %v1128 = vadd.f32 0.0, %v1127
      %v1129 = vpop.f32.mrb[0].mxu0
      %v1130 = vadd.f32 0.0, %v1129
      %v1131 = vpop.f32.mrb[0].mxu0
      %v1132 = vadd.f32 0.0, %v1131
      %1133 = vmatprep.mubr.bf16.mxu0 0
      %1134 = vmatmul.mubr.bf16.gmra.mrb[0].mxu0 %v731
      %v1135 = vpop.f32.mrb[0].mxu0
      %v1136 = vadd.f32 0.0, %v1135
      %v1137 = vpop.f32.mrb[0].mxu0
      %v1138 = vadd.f32 0.0, %v1137
      %v1139 = vpop.f32.mrb[0].mxu0
      %v1140 = vadd.f32 0.0, %v1139
      %v1141 = vpop.f32.mrb[0].mxu0
      %v1142 = vadd.f32 0.0, %v1141
      %1143 = vmatprep.mubr.bf16.mxu0 0
      %1144 = vmatmul.mubr.bf16.gmra.mrb[0].mxu0 %v732
      %v1145 = vpop.f32.mrb[0].mxu0
      %v1146 = vadd.f32 0.0, %v1145
      %v1147 = vpop.f32.mrb[0].mxu0
      %v1148 = vadd.f32 0.0, %v1147
      %v1149 = vpop.f32.mrb[0].mxu0
      %v1150 = vadd.f32 0.0, %v1149
      %v1151 = vpop.f32.mrb[0].mxu0
      %v1152 = vadd.f32 0.0, %v1151
      %1153 = vdwg.mxu0
      %v1156 = vunpack.c.l.b16 %v496
      %v1157 = vunpack.c.l.b16 %v497
      %v1158 = vpack.c.b16 %v1157, %v1156
      %v1176 = vunpack.c.l.b16 %v560
      %v1177 = vunpack.c.h.b16 %v560
      %v1178 = vunpack.c.l.b16 %v561
      %v1179 = vunpack.c.h.b16 %v561
      %v1180 = vunpack.c.l.b16 %v562
      %v1181 = vunpack.c.h.b16 %v562
      %v1182 = vunpack.c.l.b16 %v563
      %v1183 = vunpack.c.h.b16 %v563
      %v1184 = vunpack.c.l.b16 %v564
      %v1185 = vunpack.c.h.b16 %v564
      %v1186 = vunpack.c.l.b16 %v565
      %v1187 = vunpack.c.h.b16 %v565
      %v1188 = vunpack.c.l.b16 %v566
      %v1189 = vunpack.c.h.b16 %v566
      %v1190 = vunpack.c.l.b16 %v567
      %v1191 = vunpack.c.h.b16 %v567
      %v1192 = vunpack.c.l.b16 %v568
      %v1193 = vunpack.c.h.b16 %v568
      %v1194 = vunpack.c.l.b16 %v569
      %v1195 = vunpack.c.h.b16 %v569
      %v1196 = vunpack.c.l.b16 %v570
      %v1197 = vunpack.c.h.b16 %v570
      %v1198 = vunpack.c.l.b16 %v571
      %v1199 = vunpack.c.h.b16 %v571
      %v1200 = vunpack.c.l.b16 %v572
      %v1201 = vunpack.c.h.b16 %v572
      %v1202 = vunpack.c.l.b16 %v573
      %v1203 = vunpack.c.h.b16 %v573
      %v1204 = vunpack.c.l.b16 %v574
      %v1205 = vunpack.c.h.b16 %v574
      %v1206 = vunpack.c.l.b16 %v575
      %v1207 = vunpack.c.h.b16 %v575
      %v1208 = vpack.c.b16 %v1178, %v1176
      %v1209 = vpack.c.b16 %v1179, %v1177
      %v1210 = vpack.c.b16 %v1182, %v1180
      %v1211 = vpack.c.b16 %v1183, %v1181
      %v1212 = vpack.c.b16 %v1186, %v1184
      %v1213 = vpack.c.b16 %v1187, %v1185
      %v1214 = vpack.c.b16 %v1190, %v1188
      %v1215 = vpack.c.b16 %v1191, %v1189
      %v1216 = vpack.c.b16 %v1194, %v1192
      %v1217 = vpack.c.b16 %v1195, %v1193
      %v1218 = vpack.c.b16 %v1198, %v1196
      %v1219 = vpack.c.b16 %v1199, %v1197
      %v1220 = vpack.c.b16 %v1202, %v1200
      %v1221 = vpack.c.b16 %v1203, %v1201
      %v1222 = vpack.c.b16 %v1206, %v1204
      %v1223 = vpack.c.b16 %v1207, %v1205
      %1240 = vmatprep.subr.bf16.mxu0 %v1209
      %1241 = vmatpush1.bf16.msra.mxu0 %v1208
      %1242 = vmatprep.subr.bf16.mxu0 %v1211
      %1243 = vmatpush1.bf16.msra.mxu0 %v1210
      %1244 = vmatprep.subr.bf16.mxu0 %v1213
      %1245 = vmatpush1.bf16.msra.mxu0 %v1212
      %1246 = vmatprep.subr.bf16.mxu0 %v1215
      %1247 = vmatpush1.bf16.msra.mxu0 %v1214
      %1248 = vmatprep.subr.bf16.mxu0 %v1217
      %1249 = vmatpush1.bf16.msra.mxu0 %v1216
      %1250 = vmatprep.subr.bf16.mxu0 %v1219
      %1251 = vmatpush1.bf16.msra.mxu0 %v1218
      %1252 = vmatprep.subr.bf16.mxu0 %v1221
      %1253 = vmatpush1.bf16.msra.mxu0 %v1220
      %1254 = vmatprep.subr.bf16.mxu0 %v1223
      %1255 = vmatpush1.bf16.msra.mxu0 %v1222
      %1256 = vmatprep.subr.bf16.mxu0 0
      %1257 = vmatpush1.bf16.msra.mxu0 0
      %1258 = vmatprep.subr.bf16.mxu0 0
      %1259 = vmatpush1.bf16.msra.mxu0 0
      %1260 = vmatprep.subr.bf16.mxu0 0
      %1261 = vmatpush1.bf16.msra.mxu0 0
      %1262 = vmatprep.subr.bf16.mxu0 0
      %1263 = vmatpush1.bf16.msra.mxu0 0
      %1264 = vmatprep.subr.bf16.mxu0 0
      %1265 = vmatpush1.bf16.msra.mxu0 0
      %1266 = vmatprep.subr.bf16.mxu0 0
      %1267 = vmatpush1.bf16.msra.mxu0 0
      %1268 = vmatprep.subr.bf16.mxu0 0
      %1269 = vmatpush1.bf16.msra.mxu0 0
      %1270 = vmatprep.subr.bf16.mxu0 0
      %1271 = vmatpush1.bf16.msra.mxu0 0
      %1272 = vmatprep.mubr.bf16.mxu0 0
      %1273 = vmatmul.mubr.bf16.gmra.mrb[0].mxu0 %v1158
      %v1274 = vpop.f32.mrb[0].mxu0
      %v1275 = vadd.f32 %v876, %v1274
      %v1276 = vpop.f32.mrb[0].mxu0
      %v1277 = vadd.f32 %v878, %v1276
      %v1278 = vpop.f32.mrb[0].mxu0
      %v1279 = vadd.f32 %v880, %v1278
      %v1280 = vpop.f32.mrb[0].mxu0
      %v1281 = vadd.f32 %v882, %v1280
      %1282 = vmatprep.mubr.bf16.mxu0 0
      %1283 = vmatmul.mubr.bf16.gmra.mrb[0].mxu0 %v705
      %v1284 = vpop.f32.mrb[0].mxu0
      %v1285 = vadd.f32 %v886, %v1284
      %v1286 = vpop.f32.mrb[0].mxu0
      %v1287 = vadd.f32 %v888, %v1286
      %v1288 = vpop.f32.mrb[0].mxu0
      %v1289 = vadd.f32 %v890, %v1288
      %v1290 = vpop.f32.mrb[0].mxu0
      %v1291 = vadd.f32 %v892, %v1290
      %1292 = vmatprep.mubr.bf16.mxu0 0
      %1293 = vmatmul.mubr.bf16.gmra.mrb[0].mxu0 %v706
      %v1294 = vpop.f32.mrb[0].mxu0
      %v1295 = vadd.f32 %v896, %v1294
      %v1296 = vpop.f32.mrb[0].mxu0
      %v1297 = vadd.f32 %v898, %v1296
      %v1298 = vpop.f32.mrb[0].mxu0
      %v1299 = vadd.f32 %v900, %v1298
      %v1300 = vpop.f32.mrb[0].mxu0
      %v1301 = vadd.f32 %v902, %v1300
      %1302 = vmatprep.mubr.bf16.mxu0 0
      %1303 = vmatmul.mubr.bf16.gmra.mrb[0].mxu0 %v707
      %v1304 = vpop.f32.mrb[0].mxu0
      %v1305 = vadd.f32 %v906, %v1304
      %v1306 = vpop.f32.mrb[0].mxu0
      %v1307 = vadd.f32 %v908, %v1306
      %v1308 = vpop.f32.mrb[0].mxu0
      %v1309 = vadd.f32 %v910, %v1308
      %v1310 = vpop.f32.mrb[0].mxu0
      %v1311 = vadd.f32 %v912, %v1310
      %1312 = vmatprep.mubr.bf16.mxu0 0
      %1313 = vmatmul.mubr.bf16.gmra.mrb[0].mxu0 %v708
      %v1314 = vpop.f32.mrb[0].mxu0
      %v1315 = vadd.f32 %v916, %v1314
      %v1316 = vpop.f32.mrb[0].mxu0
      %v1317 = vadd.f32 %v918, %v1316
      %v1318 = vpop.f32.mrb[0].mxu0
      %v1319 = vadd.f32 %v920, %v1318
      %v1320 = vpop.f32.mrb[0].mxu0
      %v1321 = vadd.f32 %v922, %v1320
      %1322 = vmatprep.mubr.bf16.mxu0 0
      %1323 = vmatmul.mubr.bf16.gmra.mrb[0].mxu0 %v709
      %v1324 = vpop.f32.mrb[0].mxu0
      %v1325 = vadd.f32 %v926, %v1324
      %v1326 = vpop.f32.mrb[0].mxu0
      %v1327 = vadd.f32 %v928, %v1326
      %v1328 = vpop.f32.mrb[0].mxu0
      %v1329 = vadd.f32 %v930, %v1328
      %v1330 = vpop.f32.mrb[0].mxu0
      %v1331 = vadd.f32 %v932, %v1330
      %1332 = vmatprep.mubr.bf16.mxu0 0
      %1333 = vmatmul.mubr.bf16.gmra.mrb[0].mxu0 %v710
      %v1334 = vpop.f32.mrb[0].mxu0
      %v1335 = vadd.f32 %v936, %v1334
      %v1336 = vpop.f32.mrb[0].mxu0
      %v1337 = vadd.f32 %v938, %v1336
      %v1338 = vpop.f32.mrb[0].mxu0
      %v1339 = vadd.f32 %v940, %v1338
      %v1340 = vpop.f32.mrb[0].mxu0
      %v1341 = vadd.f32 %v942, %v1340
      %1342 = vmatprep.mubr.bf16.mxu0 0
      %1343 = vmatmul.mubr.bf16.gmra.mrb[0].mxu0 %v711
      %v1344 = vpop.f32.mrb[0].mxu0
      %v1345 = vadd.f32 %v946, %v1344
      %v1346 = vpop.f32.mrb[0].mxu0
      %v1347 = vadd.f32 %v948, %v1346
      %v1348 = vpop.f32.mrb[0].mxu0
      %v1349 = vadd.f32 %v950, %v1348
      %v1350 = vpop.f32.mrb[0].mxu0
      %v1351 = vadd.f32 %v952, %v1350
      %1352 = vmatprep.mubr.bf16.mxu0 0
      %1353 = vmatmul.mubr.bf16.gmra.mrb[0].mxu0 %v712
      %v1354 = vpop.f32.mrb[0].mxu0
      %v1355 = vadd.f32 %v956, %v1354
      %v1356 = vpop.f32.mrb[0].mxu0
      %v1357 = vadd.f32 %v958, %v1356
      %v1358 = vpop.f32.mrb[0].mxu0
      %v1359 = vadd.f32 %v960, %v1358
      %v1360 = vpop.f32.mrb[0].mxu0
      %v1361 = vadd.f32 %v962, %v1360
      %1362 = vmatprep.mubr.bf16.mxu0 0
      %1363 = vmatmul.mubr.bf16.gmra.mrb[0].mxu0 %v713
      %v1364 = vpop.f32.mrb[0].mxu0
      %v1365 = vadd.f32 %v966, %v1364
      %v1366 = vpop.f32.mrb[0].mxu0
      %v1367 = vadd.f32 %v968, %v1366
      %v1368 = vpop.f32.mrb[0].mxu0
      %v1369 = vadd.f32 %v970, %v1368
      %v1370 = vpop.f32.mrb[0].mxu0
      %v1371 = vadd.f32 %v972, %v1370
      %1372 = vmatprep.mubr.bf16.mxu0 0
      %1373 = vmatmul.mubr.bf16.gmra.mrb[0].mxu0 %v714
      %v1374 = vpop.f32.mrb[0].mxu0
      %v1375 = vadd.f32 %v976, %v1374
      %v1376 = vpop.f32.mrb[0].mxu0
      %v1377 = vadd.f32 %v978, %v1376
      %v1378 = vpop.f32.mrb[0].mxu0
      %v1379 = vadd.f32 %v980, %v1378
      %v1380 = vpop.f32.mrb[0].mxu0
      %v1381 = vadd.f32 %v982, %v1380
      %1382 = vmatprep.mubr.bf16.mxu0 0
      %1383 = vmatmul.mubr.bf16.gmra.mrb[0].mxu0 %v715
      %v1384 = vpop.f32.mrb[0].mxu0
      %v1385 = vadd.f32 %v986, %v1384
      %v1386 = vpop.f32.mrb[0].mxu0
      %v1387 = vadd.f32 %v988, %v1386
      %v1388 = vpop.f32.mrb[0].mxu0
      %v1389 = vadd.f32 %v990, %v1388
      %v1390 = vpop.f32.mrb[0].mxu0
      %v1391 = vadd.f32 %v992, %v1390
      %1392 = vmatprep.mubr.bf16.mxu0 0
      %1393 = vmatmul.mubr.bf16.gmra.mrb[0].mxu0 %v716
      %v1394 = vpop.f32.mrb[0].mxu0
      %v1395 = vadd.f32 %v996, %v1394
      %v1396 = vpop.f32.mrb[0].mxu0
      %v1397 = vadd.f32 %v998, %v1396
      %v1398 = vpop.f32.mrb[0].mxu0
      %v1399 = vadd.f32 %v1000, %v1398
      %v1400 = vpop.f32.mrb[0].mxu0
      %v1401 = vadd.f32 %v1002, %v1400
      %1402 = vmatprep.mubr.bf16.mxu0 0
      %1403 = vmatmul.mubr.bf16.gmra.mrb[0].mxu0 %v717
      %v1404 = vpop.f32.mrb[0].mxu0
      %v1405 = vadd.f32 %v1006, %v1404
      %v1406 = vpop.f32.mrb[0].mxu0
      %v1407 = vadd.f32 %v1008, %v1406
      %v1408 = vpop.f32.mrb[0].mxu0
      %v1409 = vadd.f32 %v1010, %v1408
      %v1410 = vpop.f32.mrb[0].mxu0
      %v1411 = vadd.f32 %v1012, %v1410
      %1412 = vmatprep.mubr.bf16.mxu0 0
      %1413 = vmatmul.mubr.bf16.gmra.mrb[0].mxu0 %v718
      %v1414 = vpop.f32.mrb[0].mxu0
      %v1415 = vadd.f32 %v1016, %v1414
      %v1416 = vpop.f32.mrb[0].mxu0
      %v1417 = vadd.f32 %v1018, %v1416
      %v1418 = vpop.f32.mrb[0].mxu0
      %v1419 = vadd.f32 %v1020, %v1418
      %v1420 = vpop.f32.mrb[0].mxu0
      %v1421 = vadd.f32 %v1022, %v1420
      %1422 = vmatprep.mubr.bf16.mxu0 0
      %1423 = vmatmul.mubr.bf16.gmra.mrb[0].mxu0 %v719
      %v1424 = vpop.f32.mrb[0].mxu0
      %v1425 = vadd.f32 %v1026, %v1424
      %v1426 = vpop.f32.mrb[0].mxu0
      %v1427 = vadd.f32 %v1028, %v1426
      %v1428 = vpop.f32.mrb[0].mxu0
      %v1429 = vadd.f32 %v1030, %v1428
      %v1430 = vpop.f32.mrb[0].mxu0
      %v1431 = vadd.f32 %v1032, %v1430
      %1432 = vmatprep.mubr.bf16.mxu0 0
      %1433 = vmatmul.mubr.bf16.gmra.mrb[0].mxu0 %v720
      %v1434 = vpop.f32.mrb[0].mxu0
      %v1435 = vadd.f32 %v1036, %v1434
      %v1436 = vpop.f32.mrb[0].mxu0
      %v1437 = vadd.f32 %v1038, %v1436
      %v1438 = vpop.f32.mrb[0].mxu0
      %v1439 = vadd.f32 %v1040, %v1438
      %v1440 = vpop.f32.mrb[0].mxu0
      %v1441 = vadd.f32 %v1042, %v1440
      %1442 = vmatprep.mubr.bf16.mxu0 0
      %1443 = vmatmul.mubr.bf16.gmra.mrb[0].mxu0 %v721
      %v1444 = vpop.f32.mrb[0].mxu0
      %v1445 = vadd.f32 %v1046, %v1444
      %v1446 = vpop.f32.mrb[0].mxu0
      %v1447 = vadd.f32 %v1048, %v1446
      %v1448 = vpop.f32.mrb[0].mxu0
      %v1449 = vadd.f32 %v1050, %v1448
      %v1450 = vpop.f32.mrb[0].mxu0
      %v1451 = vadd.f32 %v1052, %v1450
      %1452 = vmatprep.mubr.bf16.mxu0 0
      %1453 = vmatmul.mubr.bf16.gmra.mrb[0].mxu0 %v722
      %v1454 = vpop.f32.mrb[0].mxu0
      %v1455 = vadd.f32 %v1056, %v1454
      %v1456 = vpop.f32.mrb[0].mxu0
      %v1457 = vadd.f32 %v1058, %v1456
      %v1458 = vpop.f32.mrb[0].mxu0
      %v1459 = vadd.f32 %v1060, %v1458
      %v1460 = vpop.f32.mrb[0].mxu0
      %v1461 = vadd.f32 %v1062, %v1460
      %1462 = vmatprep.mubr.bf16.mxu0 0
      %1463 = vmatmul.mubr.bf16.gmra.mrb[0].mxu0 %v723
      %v1464 = vpop.f32.mrb[0].mxu0
      %v1465 = vadd.f32 %v1066, %v1464
      %v1466 = vpop.f32.mrb[0].mxu0
      %v1467 = vadd.f32 %v1068, %v1466
      %v1468 = vpop.f32.mrb[0].mxu0
      %v1469 = vadd.f32 %v1070, %v1468
      %v1470 = vpop.f32.mrb[0].mxu0
      %v1471 = vadd.f32 %v1072, %v1470
      %1472 = vmatprep.mubr.bf16.mxu0 0
      %1473 = vmatmul.mubr.bf16.gmra.mrb[0].mxu0 %v724
      %v1474 = vpop.f32.mrb[0].mxu0
      %v1475 = vadd.f32 %v1076, %v1474
      %v1476 = vpop.f32.mrb[0].mxu0
      %v1477 = vadd.f32 %v1078, %v1476
      %v1478 = vpop.f32.mrb[0].mxu0
      %v1479 = vadd.f32 %v1080, %v1478
      %v1480 = vpop.f32.mrb[0].mxu0
      %v1481 = vadd.f32 %v1082, %v1480
      %1482 = vmatprep.mubr.bf16.mxu0 0
      %1483 = vmatmul.mubr.bf16.gmra.mrb[0].mxu0 %v725
      %v1484 = vpop.f32.mrb[0].mxu0
      %v1485 = vadd.f32 %v1086, %v1484
      %v1486 = vpop.f32.mrb[0].mxu0
      %v1487 = vadd.f32 %v1088, %v1486
      %v1488 = vpop.f32.mrb[0].mxu0
      %v1489 = vadd.f32 %v1090, %v1488
      %v1490 = vpop.f32.mrb[0].mxu0
      %v1491 = vadd.f32 %v1092, %v1490
      %1492 = vmatprep.mubr.bf16.mxu0 0
      %1493 = vmatmul.mubr.bf16.gmra.mrb[0].mxu0 %v726
      %v1494 = vpop.f32.mrb[0].mxu0
      %v1495 = vadd.f32 %v1096, %v1494
      %v1496 = vpop.f32.mrb[0].mxu0
      %v1497 = vadd.f32 %v1098, %v1496
      %v1498 = vpop.f32.mrb[0].mxu0
      %v1499 = vadd.f32 %v1100, %v1498
      %v1500 = vpop.f32.mrb[0].mxu0
      %v1501 = vadd.f32 %v1102, %v1500
      %1502 = vmatprep.mubr.bf16.mxu0 0
      %1503 = vmatmul.mubr.bf16.gmra.mrb[0].mxu0 %v727
      %v1504 = vpop.f32.mrb[0].mxu0
      %v1505 = vadd.f32 %v1106, %v1504
      %v1506 = vpop.f32.mrb[0].mxu0
      %v1507 = vadd.f32 %v1108, %v1506
      %v1508 = vpop.f32.mrb[0].mxu0
      %v1509 = vadd.f32 %v1110, %v1508
      %v1510 = vpop.f32.mrb[0].mxu0
      %v1511 = vadd.f32 %v1112, %v1510
      %1512 = vmatprep.mubr.bf16.mxu0 0
      %1513 = vmatmul.mubr.bf16.gmra.mrb[0].mxu0 %v728
      %v1514 = vpop.f32.mrb[0].mxu0
      %v1515 = vadd.f32 %v1116, %v1514
      %v1516 = vpop.f32.mrb[0].mxu0
      %v1517 = vadd.f32 %v1118, %v1516
      %v1518 = vpop.f32.mrb[0].mxu0
      %v1519 = vadd.f32 %v1120, %v1518
      %v1520 = vpop.f32.mrb[0].mxu0
      %v1521 = vadd.f32 %v1122, %v1520
      %1522 = vmatprep.mubr.bf16.mxu0 0
      %1523 = vmatmul.mubr.bf16.gmra.mrb[0].mxu0 %v729
      %v1524 = vpop.f32.mrb[0].mxu0
      %v1525 = vadd.f32 %v1126, %v1524
      %v1526 = vpop.f32.mrb[0].mxu0
      %v1527 = vadd.f32 %v1128, %v1526
      %v1528 = vpop.f32.mrb[0].mxu0
      %v1529 = vadd.f32 %v1130, %v1528
      %v1530 = vpop.f32.mrb[0].mxu0
      %v1531 = vadd.f32 %v1132, %v1530
      %1532 = vmatprep.mubr.bf16.mxu0 0
      %1533 = vmatmul.mubr.bf16.gmra.mrb[0].mxu0 %v730
      %v1534 = vpop.f32.mrb[0].mxu0
      %v1535 = vadd.f32 %v1136, %v1534
      %v1536 = vpop.f32.mrb[0].mxu0
      %v1537 = vadd.f32 %v1138, %v1536
      %v1538 = vpop.f32.mrb[0].mxu0
      %v1539 = vadd.f32 %v1140, %v1538
      %v1540 = vpop.f32.mrb[0].mxu0
      %v1541 = vadd.f32 %v1142, %v1540
      %1542 = vmatprep.mubr.bf16.mxu0 0
      %1543 = vmatmul.mubr.bf16.gmra.mrb[0].mxu0 %v731
      %v1544 = vpop.f32.mrb[0].mxu0
      %v1545 = vadd.f32 %v1146, %v1544
      %v1546 = vpop.f32.mrb[0].mxu0
      %v1547 = vadd.f32 %v1148, %v1546
      %v1548 = vpop.f32.mrb[0].mxu0
      %v1549 = vadd.f32 %v1150, %v1548
      %v1550 = vpop.f32.mrb[0].mxu0
      %v1551 = vadd.f32 %v1152, %v1550
      %1552 = vdwg.mxu0
      %s1553 = scalar_lea.vmem %s1, 256
      %v1554 = vld [vmem:[%s1553] sm:$0xff]
      %v1555 = vld [vmem:[%s1553 + $0x8] sm:$0xff]
      %v1556 = vld [vmem:[%s1553 + $0x10] sm:$0xff]
      %v1557 = vld [vmem:[%s1553 + $0x18] sm:$0xff]
      %v1558 = vld [vmem:[%s1553 + $0x20] sm:$0xff]
      %v1559 = vld [vmem:[%s1553 + $0x28] sm:$0xff]
      %v1560 = vld [vmem:[%s1553 + $0x30] sm:$0xff]
      %v1561 = vld [vmem:[%s1553 + $0x38] sm:$0xff]
      %v1562 = vld [vmem:[%s1553 + $0x40] sm:$0xff]
      %v1563 = vld [vmem:[%s1553 + $0x48] sm:$0xff]
      %v1564 = vld [vmem:[%s1553 + $0x50] sm:$0xff]
      %v1565 = vld [vmem:[%s1553 + $0x58] sm:$0xff]
      %v1566 = vld [vmem:[%s1553 + $0x60] sm:$0xff]
      %v1567 = vld [vmem:[%s1553 + $0x68] sm:$0xff]
      %v1568 = vld [vmem:[%s1553 + $0x70] sm:$0xff]
      %v1569 = vld [vmem:[%s1553 + $0x78] sm:$0xff]
      %v1572 = vunpack.c.l.b16 %v554
      %v1573 = vunpack.c.l.b16 %v555
      %v1574 = vpack.c.b16 %v1573, %v1572
      %v1592 = vunpack.c.l.b16 %v1554
      %v1593 = vunpack.c.h.b16 %v1554
      %v1594 = vunpack.c.l.b16 %v1555
      %v1595 = vunpack.c.h.b16 %v1555
      %v1596 = vunpack.c.l.b16 %v1556
      %v1597 = vunpack.c.h.b16 %v1556
      %v1598 = vunpack.c.l.b16 %v1557
      %v1599 = vunpack.c.h.b16 %v1557
      %v1600 = vunpack.c.l.b16 %v1558
      %v1601 = vunpack.c.h.b16 %v1558
      %v1602 = vunpack.c.l.b16 %v1559
      %v1603 = vunpack.c.h.b16 %v1559
      %v1604 = vunpack.c.l.b16 %v1560
      %v1605 = vunpack.c.h.b16 %v1560
      %v1606 = vunpack.c.l.b16 %v1561
      %v1607 = vunpack.c.h.b16 %v1561
      %v1608 = vunpack.c.l.b16 %v1562
      %v1609 = vunpack.c.h.b16 %v1562
      %v1610 = vunpack.c.l.b16 %v1563
      %v1611 = vunpack.c.h.b16 %v1563
      %v1612 = vunpack.c.l.b16 %v1564
      %v1613 = vunpack.c.h.b16 %v1564
      %v1614 = vunpack.c.l.b16 %v1565
      %v1615 = vunpack.c.h.b16 %v1565
      %v1616 = vunpack.c.l.b16 %v1566
      %v1617 = vunpack.c.h.b16 %v1566
      %v1618 = vunpack.c.l.b16 %v1567
      %v1619 = vunpack.c.h.b16 %v1567
      %v1620 = vunpack.c.l.b16 %v1568
      %v1621 = vunpack.c.h.b16 %v1568
      %v1622 = vunpack.c.l.b16 %v1569
      %v1623 = vunpack.c.h.b16 %v1569
      %v1624 = vpack.c.b16 %v1594, %v1592
      %v1625 = vpack.c.b16 %v1595, %v1593
      %v1626 = vpack.c.b16 %v1598, %v1596
      %v1627 = vpack.c.b16 %v1599, %v1597
      %v1628 = vpack.c.b16 %v1602, %v1600
      %v1629 = vpack.c.b16 %v1603, %v1601
      %v1630 = vpack.c.b16 %v1606, %v1604
      %v1631 = vpack.c.b16 %v1607, %v1605
      %v1632 = vpack.c.b16 %v1610, %v1608
      %v1633 = vpack.c.b16 %v1611, %v1609
      %v1634 = vpack.c.b16 %v1614, %v1612
      %v1635 = vpack.c.b16 %v1615, %v1613
      %v1636 = vpack.c.b16 %v1618, %v1616
      %v1637 = vpack.c.b16 %v1619, %v1617
      %v1638 = vpack.c.b16 %v1622, %v1620
      %v1639 = vpack.c.b16 %v1623, %v1621
      %1656 = vmatprep.subr.bf16.mxu0 %v1625
      %1657 = vmatpush1.bf16.msra.mxu0 %v1624
      %1658 = vmatprep.subr.bf16.mxu0 %v1627
      %1659 = vmatpush1.bf16.msra.mxu0 %v1626
      %1660 = vmatprep.subr.bf16.mxu0 %v1629
      %1661 = vmatpush1.bf16.msra.mxu0 %v1628
      %1662 = vmatprep.subr.bf16.mxu0 %v1631
      %1663 = vmatpush1.bf16.msra.mxu0 %v1630
      %1664 = vmatprep.subr.bf16.mxu0 %v1633
      %1665 = vmatpush1.bf16.msra.mxu0 %v1632
      %1666 = vmatprep.subr.bf16.mxu0 %v1635
      %1667 = vmatpush1.bf16.msra.mxu0 %v1634
      %1668 = vmatprep.subr.bf16.mxu0 %v1637
      %1669 = vmatpush1.bf16.msra.mxu0 %v1636
      %1670 = vmatprep.subr.bf16.mxu0 %v1639
      %1671 = vmatpush1.bf16.msra.mxu0 %v1638
      %1672 = vmatprep.subr.bf16.mxu0 0
      %1673 = vmatpush1.bf16.msra.mxu0 0
      %1674 = vmatprep.subr.bf16.mxu0 0
      %1675 = vmatpush1.bf16.msra.mxu0 0
      %1676 = vmatprep.subr.bf16.mxu0 0
      %1677 = vmatpush1.bf16.msra.mxu0 0
      %1678 = vmatprep.subr.bf16.mxu0 0
      %1679 = vmatpush1.bf16.msra.mxu0 0
      %1680 = vmatprep.subr.bf16.mxu0 0
      %1681 = vmatpush1.bf16.msra.mxu0 0
      %1682 = vmatprep.subr.bf16.mxu0 0
      %1683 = vmatpush1.bf16.msra.mxu0 0
      %1684 = vmatprep.subr.bf16.mxu0 0
      %1685 = vmatpush1.bf16.msra.mxu0 0
      %1686 = vmatprep.subr.bf16.mxu0 0
      %1687 = vmatpush1.bf16.msra.mxu0 0
      %1688 = vmatprep.mubr.bf16.mxu0 0
      %1689 = vmatmul.mubr.bf16.gmra.mrb[0].mxu0 %v706
      %v1690 = vpop.f32.mrb[0].mxu0
      %v1691 = vadd.f32 0.0, %v1690
      %v1692 = vpop.f32.mrb[0].mxu0
      %v1693 = vadd.f32 0.0, %v1692
      %v1694 = vpop.f32.mrb[0].mxu0
      %v1695 = vadd.f32 0.0, %v1694
      %v1696 = vpop.f32.mrb[0].mxu0
      %v1697 = vadd.f32 0.0, %v1696
      %1698 = vmatprep.mubr.bf16.mxu0 0
      %1699 = vmatmul.mubr.bf16.gmra.mrb[0].mxu0 %v707
      %v1700 = vpop.f32.mrb[0].mxu0
      %v1701 = vadd.f32 0.0, %v1700
      %v1702 = vpop.f32.mrb[0].mxu0
      %v1703 = vadd.f32 0.0, %v1702
      %v1704 = vpop.f32.mrb[0].mxu0
      %v1705 = vadd.f32 0.0, %v1704
      %v1706 = vpop.f32.mrb[0].mxu0
      %v1707 = vadd.f32 0.0, %v1706
      %1708 = vmatprep.mubr.bf16.mxu0 0
      %1709 = vmatmul.mubr.bf16.gmra.mrb[0].mxu0 %v708
      %v1710 = vpop.f32.mrb[0].mxu0
      %v1711 = vadd.f32 0.0, %v1710
      %v1712 = vpop.f32.mrb[0].mxu0
      %v1713 = vadd.f32 0.0, %v1712
      %v1714 = vpop.f32.mrb[0].mxu0
      %v1715 = vadd.f32 0.0, %v1714
      %v1716 = vpop.f32.mrb[0].mxu0
      %v1717 = vadd.f32 0.0, %v1716
      %1718 = vmatprep.mubr.bf16.mxu0 0
      %1719 = vmatmul.mubr.bf16.gmra.mrb[0].mxu0 %v709
      %v1720 = vpop.f32.mrb[0].mxu0
      %v1721 = vadd.f32 0.0, %v1720
      %v1722 = vpop.f32.mrb[0].mxu0
      %v1723 = vadd.f32 0.0, %v1722
      %v1724 = vpop.f32.mrb[0].mxu0
      %v1725 = vadd.f32 0.0, %v1724
      %v1726 = vpop.f32.mrb[0].mxu0
      %v1727 = vadd.f32 0.0, %v1726
      %1728 = vmatprep.mubr.bf16.mxu0 0
      %1729 = vmatmul.mubr.bf16.gmra.mrb[0].mxu0 %v710
      %v1730 = vpop.f32.mrb[0].mxu0
      %v1731 = vadd.f32 0.0, %v1730
      %v1732 = vpop.f32.mrb[0].mxu0
      %v1733 = vadd.f32 0.0, %v1732
      %v1734 = vpop.f32.mrb[0].mxu0
      %v1735 = vadd.f32 0.0, %v1734
      %v1736 = vpop.f32.mrb[0].mxu0
      %v1737 = vadd.f32 0.0, %v1736
      %1738 = vmatprep.mubr.bf16.mxu0 0
      %1739 = vmatmul.mubr.bf16.gmra.mrb[0].mxu0 %v711
      %v1740 = vpop.f32.mrb[0].mxu0
      %v1741 = vadd.f32 0.0, %v1740
      %v1742 = vpop.f32.mrb[0].mxu0
      %v1743 = vadd.f32 0.0, %v1742
      %v1744 = vpop.f32.mrb[0].mxu0
      %v1745 = vadd.f32 0.0, %v1744
      %v1746 = vpop.f32.mrb[0].mxu0
      %v1747 = vadd.f32 0.0, %v1746
      %1748 = vmatprep.mubr.bf16.mxu0 0
      %1749 = vmatmul.mubr.bf16.gmra.mrb[0].mxu0 %v712
      %v1750 = vpop.f32.mrb[0].mxu0
      %v1751 = vadd.f32 0.0, %v1750
      %v1752 = vpop.f32.mrb[0].mxu0
      %v1753 = vadd.f32 0.0, %v1752
      %v1754 = vpop.f32.mrb[0].mxu0
      %v1755 = vadd.f32 0.0, %v1754
      %v1756 = vpop.f32.mrb[0].mxu0
      %v1757 = vadd.f32 0.0, %v1756
      %1758 = vmatprep.mubr.bf16.mxu0 0
      %1759 = vmatmul.mubr.bf16.gmra.mrb[0].mxu0 %v713
      %v1760 = vpop.f32.mrb[0].mxu0
      %v1761 = vadd.f32 0.0, %v1760
      %v1762 = vpop.f32.mrb[0].mxu0
      %v1763 = vadd.f32 0.0, %v1762
      %v1764 = vpop.f32.mrb[0].mxu0
      %v1765 = vadd.f32 0.0, %v1764
      %v1766 = vpop.f32.mrb[0].mxu0
      %v1767 = vadd.f32 0.0, %v1766
      %1768 = vmatprep.mubr.bf16.mxu0 0
      %1769 = vmatmul.mubr.bf16.gmra.mrb[0].mxu0 %v714
      %v1770 = vpop.f32.mrb[0].mxu0
      %v1771 = vadd.f32 0.0, %v1770
      %v1772 = vpop.f32.mrb[0].mxu0
      %v1773 = vadd.f32 0.0, %v1772
      %v1774 = vpop.f32.mrb[0].mxu0
      %v1775 = vadd.f32 0.0, %v1774
      %v1776 = vpop.f32.mrb[0].mxu0
      %v1777 = vadd.f32 0.0, %v1776
      %1778 = vmatprep.mubr.bf16.mxu0 0
      %1779 = vmatmul.mubr.bf16.gmra.mrb[0].mxu0 %v715
      %v1780 = vpop.f32.mrb[0].mxu0
      %v1781 = vadd.f32 0.0, %v1780
      %v1782 = vpop.f32.mrb[0].mxu0
      %v1783 = vadd.f32 0.0, %v1782
      %v1784 = vpop.f32.mrb[0].mxu0
      %v1785 = vadd.f32 0.0, %v1784
      %v1786 = vpop.f32.mrb[0].mxu0
      %v1787 = vadd.f32 0.0, %v1786
      %1788 = vmatprep.mubr.bf16.mxu0 0
      %1789 = vmatmul.mubr.bf16.gmra.mrb[0].mxu0 %v716
      %v1790 = vpop.f32.mrb[0].mxu0
      %v1791 = vadd.f32 0.0, %v1790
      %v1792 = vpop.f32.mrb[0].mxu0
      %v1793 = vadd.f32 0.0, %v1792
      %v1794 = vpop.f32.mrb[0].mxu0
      %v1795 = vadd.f32 0.0, %v1794
      %v1796 = vpop.f32.mrb[0].mxu0
      %v1797 = vadd.f32 0.0, %v1796
      %1798 = vmatprep.mubr.bf16.mxu0 0
      %1799 = vmatmul.mubr.bf16.gmra.mrb[0].mxu0 %v717
      %v1800 = vpop.f32.mrb[0].mxu0
      %v1801 = vadd.f32 0.0, %v1800
      %v1802 = vpop.f32.mrb[0].mxu0
      %v1803 = vadd.f32 0.0, %v1802
      %v1804 = vpop.f32.mrb[0].mxu0
      %v1805 = vadd.f32 0.0, %v1804
      %v1806 = vpop.f32.mrb[0].mxu0
      %v1807 = vadd.f32 0.0, %v1806
      %1808 = vmatprep.mubr.bf16.mxu0 0
      %1809 = vmatmul.mubr.bf16.gmra.mrb[0].mxu0 %v718
      %v1810 = vpop.f32.mrb[0].mxu0
      %v1811 = vadd.f32 0.0, %v1810
      %v1812 = vpop.f32.mrb[0].mxu0
      %v1813 = vadd.f32 0.0, %v1812
      %v1814 = vpop.f32.mrb[0].mxu0
      %v1815 = vadd.f32 0.0, %v1814
      %v1816 = vpop.f32.mrb[0].mxu0
      %v1817 = vadd.f32 0.0, %v1816
      %1818 = vmatprep.mubr.bf16.mxu0 0
      %1819 = vmatmul.mubr.bf16.gmra.mrb[0].mxu0 %v719
      %v1820 = vpop.f32.mrb[0].mxu0
      %v1821 = vadd.f32 0.0, %v1820
      %v1822 = vpop.f32.mrb[0].mxu0
      %v1823 = vadd.f32 0.0, %v1822
      %v1824 = vpop.f32.mrb[0].mxu0
      %v1825 = vadd.f32 0.0, %v1824
      %v1826 = vpop.f32.mrb[0].mxu0
      %v1827 = vadd.f32 0.0, %v1826
      %1828 = vmatprep.mubr.bf16.mxu0 0
      %1829 = vmatmul.mubr.bf16.gmra.mrb[0].mxu0 %v720
      %v1830 = vpop.f32.mrb[0].mxu0
      %v1831 = vadd.f32 0.0, %v1830
      %v1832 = vpop.f32.mrb[0].mxu0
      %v1833 = vadd.f32 0.0, %v1832
      %v1834 = vpop.f32.mrb[0].mxu0
      %v1835 = vadd.f32 0.0, %v1834
      %v1836 = vpop.f32.mrb[0].mxu0
      %v1837 = vadd.f32 0.0, %v1836
      %1838 = vmatprep.mubr.bf16.mxu0 0
      %1839 = vmatmul.mubr.bf16.gmra.mrb[0].mxu0 %v721
      %v1840 = vpop.f32.mrb[0].mxu0
      %v1841 = vadd.f32 0.0, %v1840
      %v1842 = vpop.f32.mrb[0].mxu0
      %v1843 = vadd.f32 0.0, %v1842
      %v1844 = vpop.f32.mrb[0].mxu0
      %v1845 = vadd.f32 0.0, %v1844
      %v1846 = vpop.f32.mrb[0].mxu0
      %v1847 = vadd.f32 0.0, %v1846
      %1848 = vmatprep.mubr.bf16.mxu0 0
      %1849 = vmatmul.mubr.bf16.gmra.mrb[0].mxu0 %v722
      %v1850 = vpop.f32.mrb[0].mxu0
      %v1851 = vadd.f32 0.0, %v1850
      %v1852 = vpop.f32.mrb[0].mxu0
      %v1853 = vadd.f32 0.0, %v1852
      %v1854 = vpop.f32.mrb[0].mxu0
      %v1855 = vadd.f32 0.0, %v1854
      %v1856 = vpop.f32.mrb[0].mxu0
      %v1857 = vadd.f32 0.0, %v1856
      %1858 = vmatprep.mubr.bf16.mxu0 0
      %1859 = vmatmul.mubr.bf16.gmra.mrb[0].mxu0 %v723
      %v1860 = vpop.f32.mrb[0].mxu0
      %v1861 = vadd.f32 0.0, %v1860
      %v1862 = vpop.f32.mrb[0].mxu0
      %v1863 = vadd.f32 0.0, %v1862
      %v1864 = vpop.f32.mrb[0].mxu0
      %v1865 = vadd.f32 0.0, %v1864
      %v1866 = vpop.f32.mrb[0].mxu0
      %v1867 = vadd.f32 0.0, %v1866
      %1868 = vmatprep.mubr.bf16.mxu0 0
      %1869 = vmatmul.mubr.bf16.gmra.mrb[0].mxu0 %v724
      %v1870 = vpop.f32.mrb[0].mxu0
      %v1871 = vadd.f32 0.0, %v1870
      %v1872 = vpop.f32.mrb[0].mxu0
      %v1873 = vadd.f32 0.0, %v1872
      %v1874 = vpop.f32.mrb[0].mxu0
      %v1875 = vadd.f32 0.0, %v1874
      %v1876 = vpop.f32.mrb[0].mxu0
      %v1877 = vadd.f32 0.0, %v1876
      %1878 = vmatprep.mubr.bf16.mxu0 0
      %1879 = vmatmul.mubr.bf16.gmra.mrb[0].mxu0 %v725
      %v1880 = vpop.f32.mrb[0].mxu0
      %v1881 = vadd.f32 0.0, %v1880
      %v1882 = vpop.f32.mrb[0].mxu0
      %v1883 = vadd.f32 0.0, %v1882
      %v1884 = vpop.f32.mrb[0].mxu0
      %v1885 = vadd.f32 0.0, %v1884
      %v1886 = vpop.f32.mrb[0].mxu0
      %v1887 = vadd.f32 0.0, %v1886
      %1888 = vmatprep.mubr.bf16.mxu0 0
      %1889 = vmatmul.mubr.bf16.gmra.mrb[0].mxu0 %v726
      %v1890 = vpop.f32.mrb[0].mxu0
      %v1891 = vadd.f32 0.0, %v1890
      %v1892 = vpop.f32.mrb[0].mxu0
      %v1893 = vadd.f32 0.0, %v1892
      %v1894 = vpop.f32.mrb[0].mxu0
      %v1895 = vadd.f32 0.0, %v1894
      %v1896 = vpop.f32.mrb[0].mxu0
      %v1897 = vadd.f32 0.0, %v1896
      %1898 = vmatprep.mubr.bf16.mxu0 0
      %1899 = vmatmul.mubr.bf16.gmra.mrb[0].mxu0 %v727
      %v1900 = vpop.f32.mrb[0].mxu0
      %v1901 = vadd.f32 0.0, %v1900
      %v1902 = vpop.f32.mrb[0].mxu0
      %v1903 = vadd.f32 0.0, %v1902
      %v1904 = vpop.f32.mrb[0].mxu0
      %v1905 = vadd.f32 0.0, %v1904
      %v1906 = vpop.f32.mrb[0].mxu0
      %v1907 = vadd.f32 0.0, %v1906
      %1908 = vmatprep.mubr.bf16.mxu0 0
      %1909 = vmatmul.mubr.bf16.gmra.mrb[0].mxu0 %v728
      %v1910 = vpop.f32.mrb[0].mxu0
      %v1911 = vadd.f32 0.0, %v1910
      %v1912 = vpop.f32.mrb[0].mxu0
      %v1913 = vadd.f32 0.0, %v1912
      %v1914 = vpop.f32.mrb[0].mxu0
      %v1915 = vadd.f32 0.0, %v1914
      %v1916 = vpop.f32.mrb[0].mxu0
      %v1917 = vadd.f32 0.0, %v1916
      %1918 = vmatprep.mubr.bf16.mxu0 0
      %1919 = vmatmul.mubr.bf16.gmra.mrb[0].mxu0 %v729
      %v1920 = vpop.f32.mrb[0].mxu0
      %v1921 = vadd.f32 0.0, %v1920
      %v1922 = vpop.f32.mrb[0].mxu0
      %v1923 = vadd.f32 0.0, %v1922
      %v1924 = vpop.f32.mrb[0].mxu0
      %v1925 = vadd.f32 0.0, %v1924
      %v1926 = vpop.f32.mrb[0].mxu0
      %v1927 = vadd.f32 0.0, %v1926
      %1928 = vmatprep.mubr.bf16.mxu0 0
      %1929 = vmatmul.mubr.bf16.gmra.mrb[0].mxu0 %v730
      %v1930 = vpop.f32.mrb[0].mxu0
      %v1931 = vadd.f32 0.0, %v1930
      %v1932 = vpop.f32.mrb[0].mxu0
      %v1933 = vadd.f32 0.0, %v1932
      %v1934 = vpop.f32.mrb[0].mxu0
      %v1935 = vadd.f32 0.0, %v1934
      %v1936 = vpop.f32.mrb[0].mxu0
      %v1937 = vadd.f32 0.0, %v1936
      %1938 = vmatprep.mubr.bf16.mxu0 0
      %1939 = vmatmul.mubr.bf16.gmra.mrb[0].mxu0 %v731
      %v1940 = vpop.f32.mrb[0].mxu0
      %v1941 = vadd.f32 0.0, %v1940
      %v1942 = vpop.f32.mrb[0].mxu0
      %v1943 = vadd.f32 0.0, %v1942
      %v1944 = vpop.f32.mrb[0].mxu0
      %v1945 = vadd.f32 0.0, %v1944
      %v1946 = vpop.f32.mrb[0].mxu0
      %v1947 = vadd.f32 0.0, %v1946
      %1948 = vmatprep.mubr.bf16.mxu0 0
      %1949 = vmatmul.mubr.bf16.gmra.mrb[0].mxu0 %v732
      %v1950 = vpop.f32.mrb[0].mxu0
      %v1951 = vadd.f32 0.0, %v1950
      %v1952 = vpop.f32.mrb[0].mxu0
      %v1953 = vadd.f32 0.0, %v1952
      %v1954 = vpop.f32.mrb[0].mxu0
      %v1955 = vadd.f32 0.0, %v1954
      %v1956 = vpop.f32.mrb[0].mxu0
      %v1957 = vadd.f32 0.0, %v1956
      %1958 = vmatprep.mubr.bf16.mxu0 0
      %1959 = vmatmul.mubr.bf16.gmra.mrb[0].mxu0 %v1574
      %v1960 = vpop.f32.mrb[0].mxu0
      %v1961 = vadd.f32 0.0, %v1960
      %v1962 = vpop.f32.mrb[0].mxu0
      %v1963 = vadd.f32 0.0, %v1962
      %v1964 = vpop.f32.mrb[0].mxu0
      %v1965 = vadd.f32 0.0, %v1964
      %v1966 = vpop.f32.mrb[0].mxu0
      %v1967 = vadd.f32 0.0, %v1966
      %1968 = vdwg.mxu0
      %v1969 = vadd.f32 %v1275, %v1691
      %v1970 = vadd.f32 %v1277, %v1693
      %v1971 = vadd.f32 %v1279, %v1695
      %v1972 = vadd.f32 %v1281, %v1697
      %v1973 = vadd.f32 %v1285, %v1701
      %v1974 = vadd.f32 %v1287, %v1703
      %v1975 = vadd.f32 %v1289, %v1705
      %v1976 = vadd.f32 %v1291, %v1707
      %v1977 = vadd.f32 %v1295, %v1711
      %v1978 = vadd.f32 %v1297, %v1713
      %v1979 = vadd.f32 %v1299, %v1715
      %v1980 = vadd.f32 %v1301, %v1717
      %v1981 = vadd.f32 %v1305, %v1721
      %v1982 = vadd.f32 %v1307, %v1723
      %v1983 = vadd.f32 %v1309, %v1725
      %v1984 = vadd.f32 %v1311, %v1727
      %v1985 = vadd.f32 %v1315, %v1731
      %v1986 = vadd.f32 %v1317, %v1733
      %v1987 = vadd.f32 %v1319, %v1735
      %v1988 = vadd.f32 %v1321, %v1737
      %v1989 = vadd.f32 %v1325, %v1741
      %v1990 = vadd.f32 %v1327, %v1743
      %v1991 = vadd.f32 %v1329, %v1745
      %v1992 = vadd.f32 %v1331, %v1747
      %v1993 = vadd.f32 %v1335, %v1751
      %v1994 = vadd.f32 %v1337, %v1753
      %v1995 = vadd.f32 %v1339, %v1755
      %v1996 = vadd.f32 %v1341, %v1757
      %v1997 = vadd.f32 %v1345, %v1761
      %v1998 = vadd.f32 %v1347, %v1763
      %v1999 = vadd.f32 %v1349, %v1765
      %v2000 = vadd.f32 %v1351, %v1767
      %v2001 = vadd.f32 %v1355, %v1771
      %v2002 = vadd.f32 %v1357, %v1773
      %v2003 = vadd.f32 %v1359, %v1775
      %v2004 = vadd.f32 %v1361, %v1777
      %v2005 = vadd.f32 %v1365, %v1781
      %v2006 = vadd.f32 %v1367, %v1783
      %v2007 = vadd.f32 %v1369, %v1785
      %v2008 = vadd.f32 %v1371, %v1787
      %v2009 = vadd.f32 %v1375, %v1791
      %v2010 = vadd.f32 %v1377, %v1793
      %v2011 = vadd.f32 %v1379, %v1795
      %v2012 = vadd.f32 %v1381, %v1797
      %v2013 = vadd.f32 %v1385, %v1801
      %v2014 = vadd.f32 %v1387, %v1803
      %v2015 = vadd.f32 %v1389, %v1805
      %v2016 = vadd.f32 %v1391, %v1807
      %v2017 = vadd.f32 %v1395, %v1811
      %v2018 = vadd.f32 %v1397, %v1813
      %v2019 = vadd.f32 %v1399, %v1815
      %v2020 = vadd.f32 %v1401, %v1817
      %v2021 = vadd.f32 %v1405, %v1821
      %v2022 = vadd.f32 %v1407, %v1823
      %v2023 = vadd.f32 %v1409, %v1825
      %v2024 = vadd.f32 %v1411, %v1827
      %v2025 = vadd.f32 %v1415, %v1831
      %v2026 = vadd.f32 %v1417, %v1833
      %v2027 = vadd.f32 %v1419, %v1835
      %v2028 = vadd.f32 %v1421, %v1837
      %v2029 = vadd.f32 %v1425, %v1841
      %v2030 = vadd.f32 %v1427, %v1843
      %v2031 = vadd.f32 %v1429, %v1845
      %v2032 = vadd.f32 %v1431, %v1847
      %v2033 = vadd.f32 %v1435, %v1851
      %v2034 = vadd.f32 %v1437, %v1853
      %v2035 = vadd.f32 %v1439, %v1855
      %v2036 = vadd.f32 %v1441, %v1857
      %v2037 = vadd.f32 %v1445, %v1861
      %v2038 = vadd.f32 %v1447, %v1863
      %v2039 = vadd.f32 %v1449, %v1865
      %v2040 = vadd.f32 %v1451, %v1867
      %v2041 = vadd.f32 %v1455, %v1871
      %v2042 = vadd.f32 %v1457, %v1873
      %v2043 = vadd.f32 %v1459, %v1875
      %v2044 = vadd.f32 %v1461, %v1877
      %v2045 = vadd.f32 %v1465, %v1881
      %v2046 = vadd.f32 %v1467, %v1883
      %v2047 = vadd.f32 %v1469, %v1885
      %v2048 = vadd.f32 %v1471, %v1887
      %v2049 = vadd.f32 %v1475, %v1891
      %v2050 = vadd.f32 %v1477, %v1893
      %v2051 = vadd.f32 %v1479, %v1895
      %v2052 = vadd.f32 %v1481, %v1897
      %v2053 = vadd.f32 %v1485, %v1901
      %v2054 = vadd.f32 %v1487, %v1903
      %v2055 = vadd.f32 %v1489, %v1905
      %v2056 = vadd.f32 %v1491, %v1907
      %v2057 = vadd.f32 %v1495, %v1911
      %v2058 = vadd.f32 %v1497, %v1913
      %v2059 = vadd.f32 %v1499, %v1915
      %v2060 = vadd.f32 %v1501, %v1917
      %v2061 = vadd.f32 %v1505, %v1921
      %v2062 = vadd.f32 %v1507, %v1923
      %v2063 = vadd.f32 %v1509, %v1925
      %v2064 = vadd.f32 %v1511, %v1927
      %v2065 = vadd.f32 %v1515, %v1931
      %v2066 = vadd.f32 %v1517, %v1933
      %v2067 = vadd.f32 %v1519, %v1935
      %v2068 = vadd.f32 %v1521, %v1937
      %v2069 = vadd.f32 %v1525, %v1941
      %v2070 = vadd.f32 %v1527, %v1943
      %v2071 = vadd.f32 %v1529, %v1945
      %v2072 = vadd.f32 %v1531, %v1947
      %v2073 = vadd.f32 %v1535, %v1951
      %v2074 = vadd.f32 %v1537, %v1953
      %v2075 = vadd.f32 %v1539, %v1955
      %v2076 = vadd.f32 %v1541, %v1957
      %v2077 = vadd.f32 %v1545, %v1961
      %v2078 = vadd.f32 %v1547, %v1963
      %v2079 = vadd.f32 %v1549, %v1965
      %v2080 = vadd.f32 %v1551, %v1967
      %s2081 = scalar_lea.vmem %s1, 384
      %v2082 = vld [vmem:[%s2081] sm:$0xff]
      %v2083 = vld [vmem:[%s2081 + $0x8] sm:$0xff]
      %v2084 = vld [vmem:[%s2081 + $0x10] sm:$0xff]
      %v2085 = vld [vmem:[%s2081 + $0x18] sm:$0xff]
      %v2086 = vld [vmem:[%s2081 + $0x20] sm:$0xff]
      %v2087 = vld [vmem:[%s2081 + $0x28] sm:$0xff]
      %v2088 = vld [vmem:[%s2081 + $0x30] sm:$0xff]
      %v2089 = vld [vmem:[%s2081 + $0x38] sm:$0xff]
      %v2090 = vld [vmem:[%s2081 + $0x40] sm:$0xff]
      %v2091 = vld [vmem:[%s2081 + $0x48] sm:$0xff]
      %v2092 = vld [vmem:[%s2081 + $0x50] sm:$0xff]
      %v2093 = vld [vmem:[%s2081 + $0x58] sm:$0xff]
      %v2094 = vld [vmem:[%s2081 + $0x60] sm:$0xff]
      %v2095 = vld [vmem:[%s2081 + $0x68] sm:$0xff]
      %v2096 = vld [vmem:[%s2081 + $0x70] sm:$0xff]
      %v2097 = vld [vmem:[%s2081 + $0x78] sm:$0xff]
      %v2100 = vunpack.c.l.b16 %v556
      %v2101 = vunpack.c.l.b16 %v557
      %v2102 = vpack.c.b16 %v2101, %v2100
      %v2120 = vunpack.c.l.b16 %v2082
      %v2121 = vunpack.c.h.b16 %v2082
      %v2122 = vunpack.c.l.b16 %v2083
      %v2123 = vunpack.c.h.b16 %v2083
      %v2124 = vunpack.c.l.b16 %v2084
      %v2125 = vunpack.c.h.b16 %v2084
      %v2126 = vunpack.c.l.b16 %v2085
      %v2127 = vunpack.c.h.b16 %v2085
      %v2128 = vunpack.c.l.b16 %v2086
      %v2129 = vunpack.c.h.b16 %v2086
      %v2130 = vunpack.c.l.b16 %v2087
      %v2131 = vunpack.c.h.b16 %v2087
      %v2132 = vunpack.c.l.b16 %v2088
      %v2133 = vunpack.c.h.b16 %v2088
      %v2134 = vunpack.c.l.b16 %v2089
      %v2135 = vunpack.c.h.b16 %v2089
      %v2136 = vunpack.c.l.b16 %v2090
      %v2137 = vunpack.c.h.b16 %v2090
      %v2138 = vunpack.c.l.b16 %v2091
      %v2139 = vunpack.c.h.b16 %v2091
      %v2140 = vunpack.c.l.b16 %v2092
      %v2141 = vunpack.c.h.b16 %v2092
      %v2142 = vunpack.c.l.b16 %v2093
      %v2143 = vunpack.c.h.b16 %v2093
      %v2144 = vunpack.c.l.b16 %v2094
      %v2145 = vunpack.c.h.b16 %v2094
      %v2146 = vunpack.c.l.b16 %v2095
      %v2147 = vunpack.c.h.b16 %v2095
      %v2148 = vunpack.c.l.b16 %v2096
      %v2149 = vunpack.c.h.b16 %v2096
      %v2150 = vunpack.c.l.b16 %v2097
      %v2151 = vunpack.c.h.b16 %v2097
      %v2152 = vpack.c.b16 %v2122, %v2120
      %v2153 = vpack.c.b16 %v2123, %v2121
      %v2154 = vpack.c.b16 %v2126, %v2124
      %v2155 = vpack.c.b16 %v2127, %v2125
      %v2156 = vpack.c.b16 %v2130, %v2128
      %v2157 = vpack.c.b16 %v2131, %v2129
      %v2158 = vpack.c.b16 %v2134, %v2132
      %v2159 = vpack.c.b16 %v2135, %v2133
      %v2160 = vpack.c.b16 %v2138, %v2136
      %v2161 = vpack.c.b16 %v2139, %v2137
      %v2162 = vpack.c.b16 %v2142, %v2140
      %v2163 = vpack.c.b16 %v2143, %v2141
      %v2164 = vpack.c.b16 %v2146, %v2144
      %v2165 = vpack.c.b16 %v2147, %v2145
      %v2166 = vpack.c.b16 %v2150, %v2148
      %v2167 = vpack.c.b16 %v2151, %v2149
      %2184 = vmatprep.subr.bf16.mxu0 %v2153
      %2185 = vmatpush1.bf16.msra.mxu0 %v2152
      %2186 = vmatprep.subr.bf16.mxu0 %v2155
      %2187 = vmatpush1.bf16.msra.mxu0 %v2154
      %2188 = vmatprep.subr.bf16.mxu0 %v2157
      %2189 = vmatpush1.bf16.msra.mxu0 %v2156
      %2190 = vmatprep.subr.bf16.mxu0 %v2159
      %2191 = vmatpush1.bf16.msra.mxu0 %v2158
      %2192 = vmatprep.subr.bf16.mxu0 %v2161
      %2193 = vmatpush1.bf16.msra.mxu0 %v2160
      %2194 = vmatprep.subr.bf16.mxu0 %v2163
      %2195 = vmatpush1.bf16.msra.mxu0 %v2162
      %2196 = vmatprep.subr.bf16.mxu0 %v2165
      %2197 = vmatpush1.bf16.msra.mxu0 %v2164
      %2198 = vmatprep.subr.bf16.mxu0 %v2167
      %2199 = vmatpush1.bf16.msra.mxu0 %v2166
      %2200 = vmatprep.subr.bf16.mxu0 0
      %2201 = vmatpush1.bf16.msra.mxu0 0
      %2202 = vmatprep.subr.bf16.mxu0 0
      %2203 = vmatpush1.bf16.msra.mxu0 0
      %2204 = vmatprep.subr.bf16.mxu0 0
      %2205 = vmatpush1.bf16.msra.mxu0 0
      %2206 = vmatprep.subr.bf16.mxu0 0
      %2207 = vmatpush1.bf16.msra.mxu0 0
      %2208 = vmatprep.subr.bf16.mxu0 0
      %2209 = vmatpush1.bf16.msra.mxu0 0
      %2210 = vmatprep.subr.bf16.mxu0 0
      %2211 = vmatpush1.bf16.msra.mxu0 0
      %2212 = vmatprep.subr.bf16.mxu0 0
      %2213 = vmatpush1.bf16.msra.mxu0 0
      %2214 = vmatprep.subr.bf16.mxu0 0
      %2215 = vmatpush1.bf16.msra.mxu0 0
      %2216 = vmatprep.mubr.bf16.mxu0 0
      %2217 = vmatmul.mubr.bf16.gmra.mrb[0].mxu0 %v707
      %v2218 = vpop.f32.mrb[0].mxu0
      %v2219 = vadd.f32 0.0, %v2218
      %v2220 = vpop.f32.mrb[0].mxu0
      %v2221 = vadd.f32 0.0, %v2220
      %v2222 = vpop.f32.mrb[0].mxu0
      %v2223 = vadd.f32 0.0, %v2222
      %v2224 = vpop.f32.mrb[0].mxu0
      %v2225 = vadd.f32 0.0, %v2224
      %2226 = vmatprep.mubr.bf16.mxu0 0
      %2227 = vmatmul.mubr.bf16.gmra.mrb[0].mxu0 %v708
      %v2228 = vpop.f32.mrb[0].mxu0
      %v2229 = vadd.f32 0.0, %v2228
      %v2230 = vpop.f32.mrb[0].mxu0
      %v2231 = vadd.f32 0.0, %v2230
      %v2232 = vpop.f32.mrb[0].mxu0
      %v2233 = vadd.f32 0.0, %v2232
      %v2234 = vpop.f32.mrb[0].mxu0
      %v2235 = vadd.f32 0.0, %v2234
      %2236 = vmatprep.mubr.bf16.mxu0 0
      %2237 = vmatmul.mubr.bf16.gmra.mrb[0].mxu0 %v709
      %v2238 = vpop.f32.mrb[0].mxu0
      %v2239 = vadd.f32 0.0, %v2238
      %v2240 = vpop.f32.mrb[0].mxu0
      %v2241 = vadd.f32 0.0, %v2240
      %v2242 = vpop.f32.mrb[0].mxu0
      %v2243 = vadd.f32 0.0, %v2242
      %v2244 = vpop.f32.mrb[0].mxu0
      %v2245 = vadd.f32 0.0, %v2244
      %2246 = vmatprep.mubr.bf16.mxu0 0
      %2247 = vmatmul.mubr.bf16.gmra.mrb[0].mxu0 %v710
      %v2248 = vpop.f32.mrb[0].mxu0
      %v2249 = vadd.f32 0.0, %v2248
      %v2250 = vpop.f32.mrb[0].mxu0
      %v2251 = vadd.f32 0.0, %v2250
      %v2252 = vpop.f32.mrb[0].mxu0
      %v2253 = vadd.f32 0.0, %v2252
      %v2254 = vpop.f32.mrb[0].mxu0
      %v2255 = vadd.f32 0.0, %v2254
      %2256 = vmatprep.mubr.bf16.mxu0 0
      %2257 = vmatmul.mubr.bf16.gmra.mrb[0].mxu0 %v711
      %v2258 = vpop.f32.mrb[0].mxu0
      %v2259 = vadd.f32 0.0, %v2258
      %v2260 = vpop.f32.mrb[0].mxu0
      %v2261 = vadd.f32 0.0, %v2260
      %v2262 = vpop.f32.mrb[0].mxu0
      %v2263 = vadd.f32 0.0, %v2262
      %v2264 = vpop.f32.mrb[0].mxu0
      %v2265 = vadd.f32 0.0, %v2264
      %2266 = vmatprep.mubr.bf16.mxu0 0
      %2267 = vmatmul.mubr.bf16.gmra.mrb[0].mxu0 %v712
      %v2268 = vpop.f32.mrb[0].mxu0
      %v2269 = vadd.f32 0.0, %v2268
      %v2270 = vpop.f32.mrb[0].mxu0
      %v2271 = vadd.f32 0.0, %v2270
      %v2272 = vpop.f32.mrb[0].mxu0
      %v2273 = vadd.f32 0.0, %v2272
      %v2274 = vpop.f32.mrb[0].mxu0
      %v2275 = vadd.f32 0.0, %v2274
      %2276 = vmatprep.mubr.bf16.mxu0 0
      %2277 = vmatmul.mubr.bf16.gmra.mrb[0].mxu0 %v713
      %v2278 = vpop.f32.mrb[0].mxu0
      %v2279 = vadd.f32 0.0, %v2278
      %v2280 = vpop.f32.mrb[0].mxu0
      %v2281 = vadd.f32 0.0, %v2280
      %v2282 = vpop.f32.mrb[0].mxu0
      %v2283 = vadd.f32 0.0, %v2282
      %v2284 = vpop.f32.mrb[0].mxu0
      %v2285 = vadd.f32 0.0, %v2284
      %2286 = vmatprep.mubr.bf16.mxu0 0
      %2287 = vmatmul.mubr.bf16.gmra.mrb[0].mxu0 %v714
      %v2288 = vpop.f32.mrb[0].mxu0
      %v2289 = vadd.f32 0.0, %v2288
      %v2290 = vpop.f32.mrb[0].mxu0
      %v2291 = vadd.f32 0.0, %v2290
      %v2292 = vpop.f32.mrb[0].mxu0
      %v2293 = vadd.f32 0.0, %v2292
      %v2294 = vpop.f32.mrb[0].mxu0
      %v2295 = vadd.f32 0.0, %v2294
      %2296 = vmatprep.mubr.bf16.mxu0 0
      %2297 = vmatmul.mubr.bf16.gmra.mrb[0].mxu0 %v715
      %v2298 = vpop.f32.mrb[0].mxu0
      %v2299 = vadd.f32 0.0, %v2298
      %v2300 = vpop.f32.mrb[0].mxu0
      %v2301 = vadd.f32 0.0, %v2300
      %v2302 = vpop.f32.mrb[0].mxu0
      %v2303 = vadd.f32 0.0, %v2302
      %v2304 = vpop.f32.mrb[0].mxu0
      %v2305 = vadd.f32 0.0, %v2304
      %2306 = vmatprep.mubr.bf16.mxu0 0
      %2307 = vmatmul.mubr.bf16.gmra.mrb[0].mxu0 %v716
      %v2308 = vpop.f32.mrb[0].mxu0
      %v2309 = vadd.f32 0.0, %v2308
      %v2310 = vpop.f32.mrb[0].mxu0
      %v2311 = vadd.f32 0.0, %v2310
      %v2312 = vpop.f32.mrb[0].mxu0
      %v2313 = vadd.f32 0.0, %v2312
      %v2314 = vpop.f32.mrb[0].mxu0
      %v2315 = vadd.f32 0.0, %v2314
      %2316 = vmatprep.mubr.bf16.mxu0 0
      %2317 = vmatmul.mubr.bf16.gmra.mrb[0].mxu0 %v717
      %v2318 = vpop.f32.mrb[0].mxu0
      %v2319 = vadd.f32 0.0, %v2318
      %v2320 = vpop.f32.mrb[0].mxu0
      %v2321 = vadd.f32 0.0, %v2320
      %v2322 = vpop.f32.mrb[0].mxu0
      %v2323 = vadd.f32 0.0, %v2322
      %v2324 = vpop.f32.mrb[0].mxu0
      %v2325 = vadd.f32 0.0, %v2324
      %2326 = vmatprep.mubr.bf16.mxu0 0
      %2327 = vmatmul.mubr.bf16.gmra.mrb[0].mxu0 %v718
      %v2328 = vpop.f32.mrb[0].mxu0
      %v2329 = vadd.f32 0.0, %v2328
      %v2330 = vpop.f32.mrb[0].mxu0
      %v2331 = vadd.f32 0.0, %v2330
      %v2332 = vpop.f32.mrb[0].mxu0
      %v2333 = vadd.f32 0.0, %v2332
      %v2334 = vpop.f32.mrb[0].mxu0
      %v2335 = vadd.f32 0.0, %v2334
      %2336 = vmatprep.mubr.bf16.mxu0 0
      %2337 = vmatmul.mubr.bf16.gmra.mrb[0].mxu0 %v719
      %v2338 = vpop.f32.mrb[0].mxu0
      %v2339 = vadd.f32 0.0, %v2338
      %v2340 = vpop.f32.mrb[0].mxu0
      %v2341 = vadd.f32 0.0, %v2340
      %v2342 = vpop.f32.mrb[0].mxu0
      %v2343 = vadd.f32 0.0, %v2342
      %v2344 = vpop.f32.mrb[0].mxu0
      %v2345 = vadd.f32 0.0, %v2344
      %2346 = vmatprep.mubr.bf16.mxu0 0
      %2347 = vmatmul.mubr.bf16.gmra.mrb[0].mxu0 %v720
      %v2348 = vpop.f32.mrb[0].mxu0
      %v2349 = vadd.f32 0.0, %v2348
      %v2350 = vpop.f32.mrb[0].mxu0
      %v2351 = vadd.f32 0.0, %v2350
      %v2352 = vpop.f32.mrb[0].mxu0
      %v2353 = vadd.f32 0.0, %v2352
      %v2354 = vpop.f32.mrb[0].mxu0
      %v2355 = vadd.f32 0.0, %v2354
      %2356 = vmatprep.mubr.bf16.mxu0 0
      %2357 = vmatmul.mubr.bf16.gmra.mrb[0].mxu0 %v721
      %v2358 = vpop.f32.mrb[0].mxu0
      %v2359 = vadd.f32 0.0, %v2358
      %v2360 = vpop.f32.mrb[0].mxu0
      %v2361 = vadd.f32 0.0, %v2360
      %v2362 = vpop.f32.mrb[0].mxu0
      %v2363 = vadd.f32 0.0, %v2362
      %v2364 = vpop.f32.mrb[0].mxu0
      %v2365 = vadd.f32 0.0, %v2364
      %2366 = vmatprep.mubr.bf16.mxu0 0
      %2367 = vmatmul.mubr.bf16.gmra.mrb[0].mxu0 %v722
      %v2368 = vpop.f32.mrb[0].mxu0
      %v2369 = vadd.f32 0.0, %v2368
      %v2370 = vpop.f32.mrb[0].mxu0
      %v2371 = vadd.f32 0.0, %v2370
      %v2372 = vpop.f32.mrb[0].mxu0
      %v2373 = vadd.f32 0.0, %v2372
      %v2374 = vpop.f32.mrb[0].mxu0
      %v2375 = vadd.f32 0.0, %v2374
      %2376 = vmatprep.mubr.bf16.mxu0 0
      %2377 = vmatmul.mubr.bf16.gmra.mrb[0].mxu0 %v723
      %v2378 = vpop.f32.mrb[0].mxu0
      %v2379 = vadd.f32 0.0, %v2378
      %v2380 = vpop.f32.mrb[0].mxu0
      %v2381 = vadd.f32 0.0, %v2380
      %v2382 = vpop.f32.mrb[0].mxu0
      %v2383 = vadd.f32 0.0, %v2382
      %v2384 = vpop.f32.mrb[0].mxu0
      %v2385 = vadd.f32 0.0, %v2384
      %2386 = vmatprep.mubr.bf16.mxu0 0
      %2387 = vmatmul.mubr.bf16.gmra.mrb[0].mxu0 %v724
      %v2388 = vpop.f32.mrb[0].mxu0
      %v2389 = vadd.f32 0.0, %v2388
      %v2390 = vpop.f32.mrb[0].mxu0
      %v2391 = vadd.f32 0.0, %v2390
      %v2392 = vpop.f32.mrb[0].mxu0
      %v2393 = vadd.f32 0.0, %v2392
      %v2394 = vpop.f32.mrb[0].mxu0
      %v2395 = vadd.f32 0.0, %v2394
      %2396 = vmatprep.mubr.bf16.mxu0 0
      %2397 = vmatmul.mubr.bf16.gmra.mrb[0].mxu0 %v725
      %v2398 = vpop.f32.mrb[0].mxu0
      %v2399 = vadd.f32 0.0, %v2398
      %v2400 = vpop.f32.mrb[0].mxu0
      %v2401 = vadd.f32 0.0, %v2400
      %v2402 = vpop.f32.mrb[0].mxu0
      %v2403 = vadd.f32 0.0, %v2402
      %v2404 = vpop.f32.mrb[0].mxu0
      %v2405 = vadd.f32 0.0, %v2404
      %2406 = vmatprep.mubr.bf16.mxu0 0
      %2407 = vmatmul.mubr.bf16.gmra.mrb[0].mxu0 %v726
      %v2408 = vpop.f32.mrb[0].mxu0
      %v2409 = vadd.f32 0.0, %v2408
      %v2410 = vpop.f32.mrb[0].mxu0
      %v2411 = vadd.f32 0.0, %v2410
      %v2412 = vpop.f32.mrb[0].mxu0
      %v2413 = vadd.f32 0.0, %v2412
      %v2414 = vpop.f32.mrb[0].mxu0
      %v2415 = vadd.f32 0.0, %v2414
      %2416 = vmatprep.mubr.bf16.mxu0 0
      %2417 = vmatmul.mubr.bf16.gmra.mrb[0].mxu0 %v727
      %v2418 = vpop.f32.mrb[0].mxu0
      %v2419 = vadd.f32 0.0, %v2418
      %v2420 = vpop.f32.mrb[0].mxu0
      %v2421 = vadd.f32 0.0, %v2420
      %v2422 = vpop.f32.mrb[0].mxu0
      %v2423 = vadd.f32 0.0, %v2422
      %v2424 = vpop.f32.mrb[0].mxu0
      %v2425 = vadd.f32 0.0, %v2424
      %2426 = vmatprep.mubr.bf16.mxu0 0
      %2427 = vmatmul.mubr.bf16.gmra.mrb[0].mxu0 %v728
      %v2428 = vpop.f32.mrb[0].mxu0
      %v2429 = vadd.f32 0.0, %v2428
      %v2430 = vpop.f32.mrb[0].mxu0
      %v2431 = vadd.f32 0.0, %v2430
      %v2432 = vpop.f32.mrb[0].mxu0
      %v2433 = vadd.f32 0.0, %v2432
      %v2434 = vpop.f32.mrb[0].mxu0
      %v2435 = vadd.f32 0.0, %v2434
      %2436 = vmatprep.mubr.bf16.mxu0 0
      %2437 = vmatmul.mubr.bf16.gmra.mrb[0].mxu0 %v729
      %v2438 = vpop.f32.mrb[0].mxu0
      %v2439 = vadd.f32 0.0, %v2438
      %v2440 = vpop.f32.mrb[0].mxu0
      %v2441 = vadd.f32 0.0, %v2440
      %v2442 = vpop.f32.mrb[0].mxu0
      %v2443 = vadd.f32 0.0, %v2442
      %v2444 = vpop.f32.mrb[0].mxu0
      %v2445 = vadd.f32 0.0, %v2444
      %2446 = vmatprep.mubr.bf16.mxu0 0
      %2447 = vmatmul.mubr.bf16.gmra.mrb[0].mxu0 %v730
      %v2448 = vpop.f32.mrb[0].mxu0
      %v2449 = vadd.f32 0.0, %v2448
      %v2450 = vpop.f32.mrb[0].mxu0
      %v2451 = vadd.f32 0.0, %v2450
      %v2452 = vpop.f32.mrb[0].mxu0
      %v2453 = vadd.f32 0.0, %v2452
      %v2454 = vpop.f32.mrb[0].mxu0
      %v2455 = vadd.f32 0.0, %v2454
      %2456 = vmatprep.mubr.bf16.mxu0 0
      %2457 = vmatmul.mubr.bf16.gmra.mrb[0].mxu0 %v731
      %v2458 = vpop.f32.mrb[0].mxu0
      %v2459 = vadd.f32 0.0, %v2458
      %v2460 = vpop.f32.mrb[0].mxu0
      %v2461 = vadd.f32 0.0, %v2460
      %v2462 = vpop.f32.mrb[0].mxu0
      %v2463 = vadd.f32 0.0, %v2462
      %v2464 = vpop.f32.mrb[0].mxu0
      %v2465 = vadd.f32 0.0, %v2464
      %2466 = vmatprep.mubr.bf16.mxu0 0
      %2467 = vmatmul.mubr.bf16.gmra.mrb[0].mxu0 %v732
      %v2468 = vpop.f32.mrb[0].mxu0
      %v2469 = vadd.f32 0.0, %v2468
      %v2470 = vpop.f32.mrb[0].mxu0
      %v2471 = vadd.f32 0.0, %v2470
      %v2472 = vpop.f32.mrb[0].mxu0
      %v2473 = vadd.f32 0.0, %v2472
      %v2474 = vpop.f32.mrb[0].mxu0
      %v2475 = vadd.f32 0.0, %v2474
      %2476 = vmatprep.mubr.bf16.mxu0 0
      %2477 = vmatmul.mubr.bf16.gmra.mrb[0].mxu0 %v1574
      %v2478 = vpop.f32.mrb[0].mxu0
      %v2479 = vadd.f32 0.0, %v2478
      %v2480 = vpop.f32.mrb[0].mxu0
      %v2481 = vadd.f32 0.0, %v2480
      %v2482 = vpop.f32.mrb[0].mxu0
      %v2483 = vadd.f32 0.0, %v2482
      %v2484 = vpop.f32.mrb[0].mxu0
      %v2485 = vadd.f32 0.0, %v2484
      %2486 = vmatprep.mubr.bf16.mxu0 0
      %2487 = vmatmul.mubr.bf16.gmra.mrb[0].mxu0 %v2102
      %v2488 = vpop.f32.mrb[0].mxu0
      %v2489 = vadd.f32 0.0, %v2488
      %v2490 = vpop.f32.mrb[0].mxu0
      %v2491 = vadd.f32 0.0, %v2490
      %v2492 = vpop.f32.mrb[0].mxu0
      %v2493 = vadd.f32 0.0, %v2492
      %v2494 = vpop.f32.mrb[0].mxu0
      %v2495 = vadd.f32 0.0, %v2494
      %2496 = vdwg.mxu0
      %v2497 = vadd.f32 %v1969, %v2219
      %v2498 = vadd.f32 %v1970, %v2221
      %v2499 = vadd.f32 %v1971, %v2223
      %v2500 = vadd.f32 %v1972, %v2225
      %v2501 = vadd.f32 %v1973, %v2229
      %v2502 = vadd.f32 %v1974, %v2231
      %v2503 = vadd.f32 %v1975, %v2233
      %v2504 = vadd.f32 %v1976, %v2235
      %v2505 = vadd.f32 %v1977, %v2239
      %v2506 = vadd.f32 %v1978, %v2241
      %v2507 = vadd.f32 %v1979, %v2243
      %v2508 = vadd.f32 %v1980, %v2245
      %v2509 = vadd.f32 %v1981, %v2249
      %v2510 = vadd.f32 %v1982, %v2251
      %v2511 = vadd.f32 %v1983, %v2253
      %v2512 = vadd.f32 %v1984, %v2255
      %v2513 = vadd.f32 %v1985, %v2259
      %v2514 = vadd.f32 %v1986, %v2261
      %v2515 = vadd.f32 %v1987, %v2263
      %v2516 = vadd.f32 %v1988, %v2265
      %v2517 = vadd.f32 %v1989, %v2269
      %v2518 = vadd.f32 %v1990, %v2271
      %v2519 = vadd.f32 %v1991, %v2273
      %v2520 = vadd.f32 %v1992, %v2275
      %v2521 = vadd.f32 %v1993, %v2279
      %v2522 = vadd.f32 %v1994, %v2281
      %v2523 = vadd.f32 %v1995, %v2283
      %v2524 = vadd.f32 %v1996, %v2285
      %v2525 = vadd.f32 %v1997, %v2289
      %v2526 = vadd.f32 %v1998, %v2291
      %v2527 = vadd.f32 %v1999, %v2293
      %v2528 = vadd.f32 %v2000, %v2295
      %v2529 = vadd.f32 %v2001, %v2299
      %v2530 = vadd.f32 %v2002, %v2301
      %v2531 = vadd.f32 %v2003, %v2303
      %v2532 = vadd.f32 %v2004, %v2305
      %v2533 = vadd.f32 %v2005, %v2309
      %v2534 = vadd.f32 %v2006, %v2311
      %v2535 = vadd.f32 %v2007, %v2313
      %v2536 = vadd.f32 %v2008, %v2315
      %v2537 = vadd.f32 %v2009, %v2319
      %v2538 = vadd.f32 %v2010, %v2321
      %v2539 = vadd.f32 %v2011, %v2323
      %v2540 = vadd.f32 %v2012, %v2325
      %v2541 = vadd.f32 %v2013, %v2329
      %v2542 = vadd.f32 %v2014, %v2331
      %v2543 = vadd.f32 %v2015, %v2333
      %v2544 = vadd.f32 %v2016, %v2335
      %v2545 = vadd.f32 %v2017, %v2339
      %v2546 = vadd.f32 %v2018, %v2341
      %v2547 = vadd.f32 %v2019, %v2343
      %v2548 = vadd.f32 %v2020, %v2345
      %v2549 = vadd.f32 %v2021, %v2349
      %v2550 = vadd.f32 %v2022, %v2351
      %v2551 = vadd.f32 %v2023, %v2353
      %v2552 = vadd.f32 %v2024, %v2355
      %v2553 = vadd.f32 %v2025, %v2359
      %v2554 = vadd.f32 %v2026, %v2361
      %v2555 = vadd.f32 %v2027, %v2363
      %v2556 = vadd.f32 %v2028, %v2365
      %v2557 = vadd.f32 %v2029, %v2369
      %v2558 = vadd.f32 %v2030, %v2371
      %v2559 = vadd.f32 %v2031, %v2373
      %v2560 = vadd.f32 %v2032, %v2375
      %v2561 = vadd.f32 %v2033, %v2379
      %v2562 = vadd.f32 %v2034, %v2381
      %v2563 = vadd.f32 %v2035, %v2383
      %v2564 = vadd.f32 %v2036, %v2385
      %v2565 = vadd.f32 %v2037, %v2389
      %v2566 = vadd.f32 %v2038, %v2391
      %v2567 = vadd.f32 %v2039, %v2393
      %v2568 = vadd.f32 %v2040, %v2395
      %v2569 = vadd.f32 %v2041, %v2399
      %v2570 = vadd.f32 %v2042, %v2401
      %v2571 = vadd.f32 %v2043, %v2403
      %v2572 = vadd.f32 %v2044, %v2405
      %v2573 = vadd.f32 %v2045, %v2409
      %v2574 = vadd.f32 %v2046, %v2411
      %v2575 = vadd.f32 %v2047, %v2413
      %v2576 = vadd.f32 %v2048, %v2415
      %v2577 = vadd.f32 %v2049, %v2419
      %v2578 = vadd.f32 %v2050, %v2421
      %v2579 = vadd.f32 %v2051, %v2423
      %v2580 = vadd.f32 %v2052, %v2425
      %v2581 = vadd.f32 %v2053, %v2429
      %v2582 = vadd.f32 %v2054, %v2431
      %v2583 = vadd.f32 %v2055, %v2433
      %v2584 = vadd.f32 %v2056, %v2435
      %v2585 = vadd.f32 %v2057, %v2439
      %v2586 = vadd.f32 %v2058, %v2441
      %v2587 = vadd.f32 %v2059, %v2443
      %v2588 = vadd.f32 %v2060, %v2445
      %v2589 = vadd.f32 %v2061, %v2449
      %v2590 = vadd.f32 %v2062, %v2451
      %v2591 = vadd.f32 %v2063, %v2453
      %v2592 = vadd.f32 %v2064, %v2455
      %v2593 = vadd.f32 %v2065, %v2459
      %v2594 = vadd.f32 %v2066, %v2461
      %v2595 = vadd.f32 %v2067, %v2463
      %v2596 = vadd.f32 %v2068, %v2465
      %v2597 = vadd.f32 %v2069, %v2469
      %v2598 = vadd.f32 %v2070, %v2471
      %v2599 = vadd.f32 %v2071, %v2473
      %v2600 = vadd.f32 %v2072, %v2475
      %v2601 = vadd.f32 %v2073, %v2479
      %v2602 = vadd.f32 %v2074, %v2481
      %v2603 = vadd.f32 %v2075, %v2483
      %v2604 = vadd.f32 %v2076, %v2485
      %v2605 = vadd.f32 %v2077, %v2489
      %v2606 = vadd.f32 %v2078, %v2491
      %v2607 = vadd.f32 %v2079, %v2493
      %v2608 = vadd.f32 %v2080, %v2495
      %s2609 = scalar_lea.vmem %s1, 512
      %v2610 = vld [vmem:[%s2609] sm:$0xff]
      %v2611 = vld [vmem:[%s2609 + $0x8] sm:$0xff]
      %v2612 = vld [vmem:[%s2609 + $0x10] sm:$0xff]
      %v2613 = vld [vmem:[%s2609 + $0x18] sm:$0xff]
      %v2614 = vld [vmem:[%s2609 + $0x20] sm:$0xff]
      %v2615 = vld [vmem:[%s2609 + $0x28] sm:$0xff]
      %v2616 = vld [vmem:[%s2609 + $0x30] sm:$0xff]
      %v2617 = vld [vmem:[%s2609 + $0x38] sm:$0xff]
      %v2618 = vld [vmem:[%s2609 + $0x40] sm:$0xff]
      %v2619 = vld [vmem:[%s2609 + $0x48] sm:$0xff]
      %v2620 = vld [vmem:[%s2609 + $0x50] sm:$0xff]
      %v2621 = vld [vmem:[%s2609 + $0x58] sm:$0xff]
      %v2622 = vld [vmem:[%s2609 + $0x60] sm:$0xff]
      %v2623 = vld [vmem:[%s2609 + $0x68] sm:$0xff]
      %v2624 = vld [vmem:[%s2609 + $0x70] sm:$0xff]
      %v2625 = vld [vmem:[%s2609 + $0x78] sm:$0xff]
      %v2628 = vunpack.c.l.b16 %v558
      %v2629 = vunpack.c.l.b16 %v559
      %v2630 = vpack.c.b16 %v2629, %v2628
      %v2648 = vunpack.c.l.b16 %v2610
      %v2649 = vunpack.c.h.b16 %v2610
      %v2650 = vunpack.c.l.b16 %v2611
      %v2651 = vunpack.c.h.b16 %v2611
      %v2652 = vunpack.c.l.b16 %v2612
      %v2653 = vunpack.c.h.b16 %v2612
      %v2654 = vunpack.c.l.b16 %v2613
      %v2655 = vunpack.c.h.b16 %v2613
      %v2656 = vunpack.c.l.b16 %v2614
      %v2657 = vunpack.c.h.b16 %v2614
      %v2658 = vunpack.c.l.b16 %v2615
      %v2659 = vunpack.c.h.b16 %v2615
      %v2660 = vunpack.c.l.b16 %v2616
      %v2661 = vunpack.c.h.b16 %v2616
      %v2662 = vunpack.c.l.b16 %v2617
      %v2663 = vunpack.c.h.b16 %v2617
      %v2664 = vunpack.c.l.b16 %v2618
      %v2665 = vunpack.c.h.b16 %v2618
      %v2666 = vunpack.c.l.b16 %v2619
      %v2667 = vunpack.c.h.b16 %v2619
      %v2668 = vunpack.c.l.b16 %v2620
      %v2669 = vunpack.c.h.b16 %v2620
      %v2670 = vunpack.c.l.b16 %v2621
      %v2671 = vunpack.c.h.b16 %v2621
      %v2672 = vunpack.c.l.b16 %v2622
      %v2673 = vunpack.c.h.b16 %v2622
      %v2674 = vunpack.c.l.b16 %v2623
      %v2675 = vunpack.c.h.b16 %v2623
      %v2676 = vunpack.c.l.b16 %v2624
      %v2677 = vunpack.c.h.b16 %v2624
      %v2678 = vunpack.c.l.b16 %v2625
      %v2679 = vunpack.c.h.b16 %v2625
      %v2680 = vpack.c.b16 %v2650, %v2648
      %v2681 = vpack.c.b16 %v2651, %v2649
      %v2682 = vpack.c.b16 %v2654, %v2652
      %v2683 = vpack.c.b16 %v2655, %v2653
      %v2684 = vpack.c.b16 %v2658, %v2656
      %v2685 = vpack.c.b16 %v2659, %v2657
      %v2686 = vpack.c.b16 %v2662, %v2660
      %v2687 = vpack.c.b16 %v2663, %v2661
      %v2688 = vpack.c.b16 %v2666, %v2664
      %v2689 = vpack.c.b16 %v2667, %v2665
      %v2690 = vpack.c.b16 %v2670, %v2668
      %v2691 = vpack.c.b16 %v2671, %v2669
      %v2692 = vpack.c.b16 %v2674, %v2672
      %v2693 = vpack.c.b16 %v2675, %v2673
      %v2694 = vpack.c.b16 %v2678, %v2676
      %v2695 = vpack.c.b16 %v2679, %v2677
      %2712 = vmatprep.subr.bf16.mxu0 %v2681
      %2713 = vmatpush1.bf16.msra.mxu0 %v2680
      %2714 = vmatprep.subr.bf16.mxu0 %v2683
      %2715 = vmatpush1.bf16.msra.mxu0 %v2682
      %2716 = vmatprep.subr.bf16.mxu0 %v2685
      %2717 = vmatpush1.bf16.msra.mxu0 %v2684
      %2718 = vmatprep.subr.bf16.mxu0 %v2687
      %2719 = vmatpush1.bf16.msra.mxu0 %v2686
      %2720 = vmatprep.subr.bf16.mxu0 %v2689
      %2721 = vmatpush1.bf16.msra.mxu0 %v2688
      %2722 = vmatprep.subr.bf16.mxu0 %v2691
      %2723 = vmatpush1.bf16.msra.mxu0 %v2690
      %2724 = vmatprep.subr.bf16.mxu0 %v2693
      %2725 = vmatpush1.bf16.msra.mxu0 %v2692
      %2726 = vmatprep.subr.bf16.mxu0 %v2695
      %2727 = vmatpush1.bf16.msra.mxu0 %v2694
      %2728 = vmatprep.subr.bf16.mxu0 0
      %2729 = vmatpush1.bf16.msra.mxu0 0
      %2730 = vmatprep.subr.bf16.mxu0 0
      %2731 = vmatpush1.bf16.msra.mxu0 0
      %2732 = vmatprep.subr.bf16.mxu0 0
      %2733 = vmatpush1.bf16.msra.mxu0 0
      %2734 = vmatprep.subr.bf16.mxu0 0
      %2735 = vmatpush1.bf16.msra.mxu0 0
      %2736 = vmatprep.subr.bf16.mxu0 0
      %2737 = vmatpush1.bf16.msra.mxu0 0
      %2738 = vmatprep.subr.bf16.mxu0 0
      %2739 = vmatpush1.bf16.msra.mxu0 0
      %2740 = vmatprep.subr.bf16.mxu0 0
      %2741 = vmatpush1.bf16.msra.mxu0 0
      %2742 = vmatprep.subr.bf16.mxu0 0
      %2743 = vmatpush1.bf16.msra.mxu0 0
      %2744 = vmatprep.mubr.bf16.mxu0 0
      %2745 = vmatmul.mubr.bf16.gmra.mrb[0].mxu0 %v708
      %v2746 = vpop.f32.mrb[0].mxu0
      %v2747 = vadd.f32 0.0, %v2746
      %v2748 = vpop.f32.mrb[0].mxu0
      %v2749 = vadd.f32 0.0, %v2748
      %v2750 = vpop.f32.mrb[0].mxu0
      %v2751 = vadd.f32 0.0, %v2750
      %v2752 = vpop.f32.mrb[0].mxu0
      %v2753 = vadd.f32 0.0, %v2752
      %2754 = vmatprep.mubr.bf16.mxu0 0
      %2755 = vmatmul.mubr.bf16.gmra.mrb[0].mxu0 %v709
      %v2756 = vpop.f32.mrb[0].mxu0
      %v2757 = vadd.f32 0.0, %v2756
      %v2758 = vpop.f32.mrb[0].mxu0
      %v2759 = vadd.f32 0.0, %v2758
      %v2760 = vpop.f32.mrb[0].mxu0
      %v2761 = vadd.f32 0.0, %v2760
      %v2762 = vpop.f32.mrb[0].mxu0
      %v2763 = vadd.f32 0.0, %v2762
      %2764 = vmatprep.mubr.bf16.mxu0 0
      %2765 = vmatmul.mubr.bf16.gmra.mrb[0].mxu0 %v710
      %v2766 = vpop.f32.mrb[0].mxu0
      %v2767 = vadd.f32 0.0, %v2766
      %v2768 = vpop.f32.mrb[0].mxu0
      %v2769 = vadd.f32 0.0, %v2768
      %v2770 = vpop.f32.mrb[0].mxu0
      %v2771 = vadd.f32 0.0, %v2770
      %v2772 = vpop.f32.mrb[0].mxu0
      %v2773 = vadd.f32 0.0, %v2772
      %2774 = vmatprep.mubr.bf16.mxu0 0
      %2775 = vmatmul.mubr.bf16.gmra.mrb[0].mxu0 %v711
      %v2776 = vpop.f32.mrb[0].mxu0
      %v2777 = vadd.f32 0.0, %v2776
      %v2778 = vpop.f32.mrb[0].mxu0
      %v2779 = vadd.f32 0.0, %v2778
      %v2780 = vpop.f32.mrb[0].mxu0
      %v2781 = vadd.f32 0.0, %v2780
      %v2782 = vpop.f32.mrb[0].mxu0
      %v2783 = vadd.f32 0.0, %v2782
      %2784 = vmatprep.mubr.bf16.mxu0 0
      %2785 = vmatmul.mubr.bf16.gmra.mrb[0].mxu0 %v712
      %v2786 = vpop.f32.mrb[0].mxu0
      %v2787 = vadd.f32 0.0, %v2786
      %v2788 = vpop.f32.mrb[0].mxu0
      %v2789 = vadd.f32 0.0, %v2788
      %v2790 = vpop.f32.mrb[0].mxu0
      %v2791 = vadd.f32 0.0, %v2790
      %v2792 = vpop.f32.mrb[0].mxu0
      %v2793 = vadd.f32 0.0, %v2792
      %2794 = vmatprep.mubr.bf16.mxu0 0
      %2795 = vmatmul.mubr.bf16.gmra.mrb[0].mxu0 %v713
      %v2796 = vpop.f32.mrb[0].mxu0
      %v2797 = vadd.f32 0.0, %v2796
      %v2798 = vpop.f32.mrb[0].mxu0
      %v2799 = vadd.f32 0.0, %v2798
      %v2800 = vpop.f32.mrb[0].mxu0
      %v2801 = vadd.f32 0.0, %v2800
      %v2802 = vpop.f32.mrb[0].mxu0
      %v2803 = vadd.f32 0.0, %v2802
      %2804 = vmatprep.mubr.bf16.mxu0 0
      %2805 = vmatmul.mubr.bf16.gmra.mrb[0].mxu0 %v714
      %v2806 = vpop.f32.mrb[0].mxu0
      %v2807 = vadd.f32 0.0, %v2806
      %v2808 = vpop.f32.mrb[0].mxu0
      %v2809 = vadd.f32 0.0, %v2808
      %v2810 = vpop.f32.mrb[0].mxu0
      %v2811 = vadd.f32 0.0, %v2810
      %v2812 = vpop.f32.mrb[0].mxu0
      %v2813 = vadd.f32 0.0, %v2812
      %2814 = vmatprep.mubr.bf16.mxu0 0
      %2815 = vmatmul.mubr.bf16.gmra.mrb[0].mxu0 %v715
      %v2816 = vpop.f32.mrb[0].mxu0
      %v2817 = vadd.f32 0.0, %v2816
      %v2818 = vpop.f32.mrb[0].mxu0
      %v2819 = vadd.f32 0.0, %v2818
      %v2820 = vpop.f32.mrb[0].mxu0
      %v2821 = vadd.f32 0.0, %v2820
      %v2822 = vpop.f32.mrb[0].mxu0
      %v2823 = vadd.f32 0.0, %v2822
      %2824 = vmatprep.mubr.bf16.mxu0 0
      %2825 = vmatmul.mubr.bf16.gmra.mrb[0].mxu0 %v716
      %v2826 = vpop.f32.mrb[0].mxu0
      %v2827 = vadd.f32 0.0, %v2826
      %v2828 = vpop.f32.mrb[0].mxu0
      %v2829 = vadd.f32 0.0, %v2828
      %v2830 = vpop.f32.mrb[0].mxu0
      %v2831 = vadd.f32 0.0, %v2830
      %v2832 = vpop.f32.mrb[0].mxu0
      %v2833 = vadd.f32 0.0, %v2832
      %2834 = vmatprep.mubr.bf16.mxu0 0
      %2835 = vmatmul.mubr.bf16.gmra.mrb[0].mxu0 %v717
      %v2836 = vpop.f32.mrb[0].mxu0
      %v2837 = vadd.f32 0.0, %v2836
      %v2838 = vpop.f32.mrb[0].mxu0
      %v2839 = vadd.f32 0.0, %v2838
      %v2840 = vpop.f32.mrb[0].mxu0
      %v2841 = vadd.f32 0.0, %v2840
      %v2842 = vpop.f32.mrb[0].mxu0
      %v2843 = vadd.f32 0.0, %v2842
      %2844 = vmatprep.mubr.bf16.mxu0 0
      %2845 = vmatmul.mubr.bf16.gmra.mrb[0].mxu0 %v718
      %v2846 = vpop.f32.mrb[0].mxu0
      %v2847 = vadd.f32 0.0, %v2846
      %v2848 = vpop.f32.mrb[0].mxu0
      %v2849 = vadd.f32 0.0, %v2848
      %v2850 = vpop.f32.mrb[0].mxu0
      %v2851 = vadd.f32 0.0, %v2850
      %v2852 = vpop.f32.mrb[0].mxu0
      %v2853 = vadd.f32 0.0, %v2852
      %2854 = vmatprep.mubr.bf16.mxu0 0
      %2855 = vmatmul.mubr.bf16.gmra.mrb[0].mxu0 %v719
      %v2856 = vpop.f32.mrb[0].mxu0
      %v2857 = vadd.f32 0.0, %v2856
      %v2858 = vpop.f32.mrb[0].mxu0
      %v2859 = vadd.f32 0.0, %v2858
      %v2860 = vpop.f32.mrb[0].mxu0
      %v2861 = vadd.f32 0.0, %v2860
      %v2862 = vpop.f32.mrb[0].mxu0
      %v2863 = vadd.f32 0.0, %v2862
      %2864 = vmatprep.mubr.bf16.mxu0 0
      %2865 = vmatmul.mubr.bf16.gmra.mrb[0].mxu0 %v720
      %v2866 = vpop.f32.mrb[0].mxu0
      %v2867 = vadd.f32 0.0, %v2866
      %v2868 = vpop.f32.mrb[0].mxu0
      %v2869 = vadd.f32 0.0, %v2868
      %v2870 = vpop.f32.mrb[0].mxu0
      %v2871 = vadd.f32 0.0, %v2870
      %v2872 = vpop.f32.mrb[0].mxu0
      %v2873 = vadd.f32 0.0, %v2872
      %2874 = vmatprep.mubr.bf16.mxu0 0
      %2875 = vmatmul.mubr.bf16.gmra.mrb[0].mxu0 %v721
      %v2876 = vpop.f32.mrb[0].mxu0
      %v2877 = vadd.f32 0.0, %v2876
      %v2878 = vpop.f32.mrb[0].mxu0
      %v2879 = vadd.f32 0.0, %v2878
      %v2880 = vpop.f32.mrb[0].mxu0
      %v2881 = vadd.f32 0.0, %v2880
      %v2882 = vpop.f32.mrb[0].mxu0
      %v2883 = vadd.f32 0.0, %v2882
      %2884 = vmatprep.mubr.bf16.mxu0 0
      %2885 = vmatmul.mubr.bf16.gmra.mrb[0].mxu0 %v722
      %v2886 = vpop.f32.mrb[0].mxu0
      %v2887 = vadd.f32 0.0, %v2886
      %v2888 = vpop.f32.mrb[0].mxu0
      %v2889 = vadd.f32 0.0, %v2888
      %v2890 = vpop.f32.mrb[0].mxu0
      %v2891 = vadd.f32 0.0, %v2890
      %v2892 = vpop.f32.mrb[0].mxu0
      %v2893 = vadd.f32 0.0, %v2892
      %2894 = vmatprep.mubr.bf16.mxu0 0
      %2895 = vmatmul.mubr.bf16.gmra.mrb[0].mxu0 %v723
      %v2896 = vpop.f32.mrb[0].mxu0
      %v2897 = vadd.f32 0.0, %v2896
      %v2898 = vpop.f32.mrb[0].mxu0
      %v2899 = vadd.f32 0.0, %v2898
      %v2900 = vpop.f32.mrb[0].mxu0
      %v2901 = vadd.f32 0.0, %v2900
      %v2902 = vpop.f32.mrb[0].mxu0
      %v2903 = vadd.f32 0.0, %v2902
      %2904 = vmatprep.mubr.bf16.mxu0 0
      %2905 = vmatmul.mubr.bf16.gmra.mrb[0].mxu0 %v724
      %v2906 = vpop.f32.mrb[0].mxu0
      %v2907 = vadd.f32 0.0, %v2906
      %v2908 = vpop.f32.mrb[0].mxu0
      %v2909 = vadd.f32 0.0, %v2908
      %v2910 = vpop.f32.mrb[0].mxu0
      %v2911 = vadd.f32 0.0, %v2910
      %v2912 = vpop.f32.mrb[0].mxu0
      %v2913 = vadd.f32 0.0, %v2912
      %2914 = vmatprep.mubr.bf16.mxu0 0
      %2915 = vmatmul.mubr.bf16.gmra.mrb[0].mxu0 %v725
      %v2916 = vpop.f32.mrb[0].mxu0
      %v2917 = vadd.f32 0.0, %v2916
      %v2918 = vpop.f32.mrb[0].mxu0
      %v2919 = vadd.f32 0.0, %v2918
      %v2920 = vpop.f32.mrb[0].mxu0
      %v2921 = vadd.f32 0.0, %v2920
      %v2922 = vpop.f32.mrb[0].mxu0
      %v2923 = vadd.f32 0.0, %v2922
      %2924 = vmatprep.mubr.bf16.mxu0 0
      %2925 = vmatmul.mubr.bf16.gmra.mrb[0].mxu0 %v726
      %v2926 = vpop.f32.mrb[0].mxu0
      %v2927 = vadd.f32 0.0, %v2926
      %v2928 = vpop.f32.mrb[0].mxu0
      %v2929 = vadd.f32 0.0, %v2928
      %v2930 = vpop.f32.mrb[0].mxu0
      %v2931 = vadd.f32 0.0, %v2930
      %v2932 = vpop.f32.mrb[0].mxu0
      %v2933 = vadd.f32 0.0, %v2932
      %2934 = vmatprep.mubr.bf16.mxu0 0
      %2935 = vmatmul.mubr.bf16.gmra.mrb[0].mxu0 %v727
      %v2936 = vpop.f32.mrb[0].mxu0
      %v2937 = vadd.f32 0.0, %v2936
      %v2938 = vpop.f32.mrb[0].mxu0
      %v2939 = vadd.f32 0.0, %v2938
      %v2940 = vpop.f32.mrb[0].mxu0
      %v2941 = vadd.f32 0.0, %v2940
      %v2942 = vpop.f32.mrb[0].mxu0
      %v2943 = vadd.f32 0.0, %v2942
      %2944 = vmatprep.mubr.bf16.mxu0 0
      %2945 = vmatmul.mubr.bf16.gmra.mrb[0].mxu0 %v728
      %v2946 = vpop.f32.mrb[0].mxu0
      %v2947 = vadd.f32 0.0, %v2946
      %v2948 = vpop.f32.mrb[0].mxu0
      %v2949 = vadd.f32 0.0, %v2948
      %v2950 = vpop.f32.mrb[0].mxu0
      %v2951 = vadd.f32 0.0, %v2950
      %v2952 = vpop.f32.mrb[0].mxu0
      %v2953 = vadd.f32 0.0, %v2952
      %2954 = vmatprep.mubr.bf16.mxu0 0
      %2955 = vmatmul.mubr.bf16.gmra.mrb[0].mxu0 %v729
      %v2956 = vpop.f32.mrb[0].mxu0
      %v2957 = vadd.f32 0.0, %v2956
      %v2958 = vpop.f32.mrb[0].mxu0
      %v2959 = vadd.f32 0.0, %v2958
      %v2960 = vpop.f32.mrb[0].mxu0
      %v2961 = vadd.f32 0.0, %v2960
      %v2962 = vpop.f32.mrb[0].mxu0
      %v2963 = vadd.f32 0.0, %v2962
      %2964 = vmatprep.mubr.bf16.mxu0 0
      %2965 = vmatmul.mubr.bf16.gmra.mrb[0].mxu0 %v730
      %v2966 = vpop.f32.mrb[0].mxu0
      %v2967 = vadd.f32 0.0, %v2966
      %v2968 = vpop.f32.mrb[0].mxu0
      %v2969 = vadd.f32 0.0, %v2968
      %v2970 = vpop.f32.mrb[0].mxu0
      %v2971 = vadd.f32 0.0, %v2970
      %v2972 = vpop.f32.mrb[0].mxu0
      %v2973 = vadd.f32 0.0, %v2972
      %2974 = vmatprep.mubr.bf16.mxu0 0
      %2975 = vmatmul.mubr.bf16.gmra.mrb[0].mxu0 %v731
      %v2976 = vpop.f32.mrb[0].mxu0
      %v2977 = vadd.f32 0.0, %v2976
      %v2978 = vpop.f32.mrb[0].mxu0
      %v2979 = vadd.f32 0.0, %v2978
      %v2980 = vpop.f32.mrb[0].mxu0
      %v2981 = vadd.f32 0.0, %v2980
      %v2982 = vpop.f32.mrb[0].mxu0
      %v2983 = vadd.f32 0.0, %v2982
      %2984 = vmatprep.mubr.bf16.mxu0 0
      %2985 = vmatmul.mubr.bf16.gmra.mrb[0].mxu0 %v732
      %v2986 = vpop.f32.mrb[0].mxu0
      %v2987 = vadd.f32 0.0, %v2986
      %v2988 = vpop.f32.mrb[0].mxu0
      %v2989 = vadd.f32 0.0, %v2988
      %v2990 = vpop.f32.mrb[0].mxu0
      %v2991 = vadd.f32 0.0, %v2990
      %v2992 = vpop.f32.mrb[0].mxu0
      %v2993 = vadd.f32 0.0, %v2992
      %2994 = vmatprep.mubr.bf16.mxu0 0
      %2995 = vmatmul.mubr.bf16.gmra.mrb[0].mxu0 %v1574
      %v2996 = vpop.f32.mrb[0].mxu0
      %v2997 = vadd.f32 0.0, %v2996
      %v2998 = vpop.f32.mrb[0].mxu0
      %v2999 = vadd.f32 0.0, %v2998
      %v3000 = vpop.f32.mrb[0].mxu0
      %v3001 = vadd.f32 0.0, %v3000
      %v3002 = vpop.f32.mrb[0].mxu0
      %v3003 = vadd.f32 0.0, %v3002
      %3004 = vmatprep.mubr.bf16.mxu0 0
      %3005 = vmatmul.mubr.bf16.gmra.mrb[0].mxu0 %v2102
      %v3006 = vpop.f32.mrb[0].mxu0
      %v3007 = vadd.f32 0.0, %v3006
      %v3008 = vpop.f32.mrb[0].mxu0
      %v3009 = vadd.f32 0.0, %v3008
      %v3010 = vpop.f32.mrb[0].mxu0
      %v3011 = vadd.f32 0.0, %v3010
      %v3012 = vpop.f32.mrb[0].mxu0
      %v3013 = vadd.f32 0.0, %v3012
      %3014 = vmatprep.mubr.bf16.mxu0 0
      %3015 = vmatmul.mubr.bf16.gmra.mrb[0].mxu0 %v2630
      %v3016 = vpop.f32.mrb[0].mxu0
      %v3017 = vadd.f32 0.0, %v3016
      %v3018 = vpop.f32.mrb[0].mxu0
      %v3019 = vadd.f32 0.0, %v3018
      %v3020 = vpop.f32.mrb[0].mxu0
      %v3021 = vadd.f32 0.0, %v3020
      %v3022 = vpop.f32.mrb[0].mxu0
      %v3023 = vadd.f32 0.0, %v3022
      %3024 = vdwg.mxu0
      %v3025 = vadd.f32 %v2497, %v2747
      %v3026 = vadd.f32 %v2498, %v2749
      %v3027 = vadd.f32 %v2499, %v2751
      %v3028 = vadd.f32 %v2500, %v2753
      %v3029 = vadd.f32 %v2501, %v2757
      %v3030 = vadd.f32 %v2502, %v2759
      %v3031 = vadd.f32 %v2503, %v2761
      %v3032 = vadd.f32 %v2504, %v2763
      %v3033 = vadd.f32 %v2505, %v2767
      %v3034 = vadd.f32 %v2506, %v2769
      %v3035 = vadd.f32 %v2507, %v2771
      %v3036 = vadd.f32 %v2508, %v2773
      %v3037 = vadd.f32 %v2509, %v2777
      %v3038 = vadd.f32 %v2510, %v2779
      %v3039 = vadd.f32 %v2511, %v2781
      %v3040 = vadd.f32 %v2512, %v2783
      %v3041 = vadd.f32 %v2513, %v2787
      %v3042 = vadd.f32 %v2514, %v2789
      %v3043 = vadd.f32 %v2515, %v2791
      %v3044 = vadd.f32 %v2516, %v2793
      %v3045 = vadd.f32 %v2517, %v2797
      %v3046 = vadd.f32 %v2518, %v2799
      %v3047 = vadd.f32 %v2519, %v2801
      %v3048 = vadd.f32 %v2520, %v2803
      %v3049 = vadd.f32 %v2521, %v2807
      %v3050 = vadd.f32 %v2522, %v2809
      %v3051 = vadd.f32 %v2523, %v2811
      %v3052 = vadd.f32 %v2524, %v2813
      %v3053 = vadd.f32 %v2525, %v2817
      %v3054 = vadd.f32 %v2526, %v2819
      %v3055 = vadd.f32 %v2527, %v2821
      %v3056 = vadd.f32 %v2528, %v2823
      %v3057 = vadd.f32 %v2529, %v2827
      %v3058 = vadd.f32 %v2530, %v2829
      %v3059 = vadd.f32 %v2531, %v2831
      %v3060 = vadd.f32 %v2532, %v2833
      %v3061 = vadd.f32 %v2533, %v2837
      %v3062 = vadd.f32 %v2534, %v2839
      %v3063 = vadd.f32 %v2535, %v2841
      %v3064 = vadd.f32 %v2536, %v2843
      %v3065 = vadd.f32 %v2537, %v2847
      %v3066 = vadd.f32 %v2538, %v2849
      %v3067 = vadd.f32 %v2539, %v2851
      %v3068 = vadd.f32 %v2540, %v2853
      %v3069 = vadd.f32 %v2541, %v2857
      %v3070 = vadd.f32 %v2542, %v2859
      %v3071 = vadd.f32 %v2543, %v2861
      %v3072 = vadd.f32 %v2544, %v2863
      %v3073 = vadd.f32 %v2545, %v2867
      %v3074 = vadd.f32 %v2546, %v2869
      %v3075 = vadd.f32 %v2547, %v2871
      %v3076 = vadd.f32 %v2548, %v2873
      %v3077 = vadd.f32 %v2549, %v2877
      %v3078 = vadd.f32 %v2550, %v2879
      %v3079 = vadd.f32 %v2551, %v2881
      %v3080 = vadd.f32 %v2552, %v2883
      %v3081 = vadd.f32 %v2553, %v2887
      %v3082 = vadd.f32 %v2554, %v2889
      %v3083 = vadd.f32 %v2555, %v2891
      %v3084 = vadd.f32 %v2556, %v2893
      %v3085 = vadd.f32 %v2557, %v2897
      %v3086 = vadd.f32 %v2558, %v2899
      %v3087 = vadd.f32 %v2559, %v2901
      %v3088 = vadd.f32 %v2560, %v2903
      %v3089 = vadd.f32 %v2561, %v2907
      %v3090 = vadd.f32 %v2562, %v2909
      %v3091 = vadd.f32 %v2563, %v2911
      %v3092 = vadd.f32 %v2564, %v2913
      %v3093 = vadd.f32 %v2565, %v2917
      %v3094 = vadd.f32 %v2566, %v2919
      %v3095 = vadd.f32 %v2567, %v2921
      %v3096 = vadd.f32 %v2568, %v2923
      %v3097 = vadd.f32 %v2569, %v2927
      %v3098 = vadd.f32 %v2570, %v2929
      %v3099 = vadd.f32 %v2571, %v2931
      %v3100 = vadd.f32 %v2572, %v2933
      %v3101 = vadd.f32 %v2573, %v2937
      %v3102 = vadd.f32 %v2574, %v2939
      %v3103 = vadd.f32 %v2575, %v2941
      %v3104 = vadd.f32 %v2576, %v2943
      %v3105 = vadd.f32 %v2577, %v2947
      %v3106 = vadd.f32 %v2578, %v2949
      %v3107 = vadd.f32 %v2579, %v2951
      %v3108 = vadd.f32 %v2580, %v2953
      %v3109 = vadd.f32 %v2581, %v2957
      %v3110 = vadd.f32 %v2582, %v2959
      %v3111 = vadd.f32 %v2583, %v2961
      %v3112 = vadd.f32 %v2584, %v2963
      %v3113 = vadd.f32 %v2585, %v2967
      %v3114 = vadd.f32 %v2586, %v2969
      %v3115 = vadd.f32 %v2587, %v2971
      %v3116 = vadd.f32 %v2588, %v2973
      %v3117 = vadd.f32 %v2589, %v2977
      %v3118 = vadd.f32 %v2590, %v2979
      %v3119 = vadd.f32 %v2591, %v2981
      %v3120 = vadd.f32 %v2592, %v2983
      %v3121 = vadd.f32 %v2593, %v2987
      %v3122 = vadd.f32 %v2594, %v2989
      %v3123 = vadd.f32 %v2595, %v2991
      %v3124 = vadd.f32 %v2596, %v2993
      %v3125 = vadd.f32 %v2597, %v2997
      %v3126 = vadd.f32 %v2598, %v2999
      %v3127 = vadd.f32 %v2599, %v3001
      %v3128 = vadd.f32 %v2600, %v3003
      %v3129 = vadd.f32 %v2601, %v3007
      %v3130 = vadd.f32 %v2602, %v3009
      %v3131 = vadd.f32 %v2603, %v3011
      %v3132 = vadd.f32 %v2604, %v3013
      %v3133 = vadd.f32 %v2605, %v3017
      %v3134 = vadd.f32 %v2606, %v3019
      %v3135 = vadd.f32 %v2607, %v3021
      %v3136 = vadd.f32 %v2608, %v3023
      %v3137 = vld [vmem:[%s2] sm:$0x3]
      %v3139 = vlaneseq
      %v3140 = vshrl.u32 %v3139, 7
      %v3141 = vsub.s32 0, %v3140
      %v3142 = vrot.slane %v3137, %v3141
      %v3143 = vlaneseq
      %v3144 = vshrl.u32 %v3143, 7
      %v3145 = vsub.s32 1, %v3144
      %v3146 = vrot.slane %v3137, %v3145
      %v3149 = vadd.f32 %v3025, %v3142
      %v3150 = vadd.f32 %v3026, %v3146
      %v3151 = vadd.f32 %v3027, %v3142
      %v3152 = vadd.f32 %v3028, %v3146
      %v3153 = vadd.f32 %v3029, %v3142
      %v3154 = vadd.f32 %v3030, %v3146
      %v3155 = vadd.f32 %v3031, %v3142
      %v3156 = vadd.f32 %v3032, %v3146
      %v3157 = vadd.f32 %v3033, %v3142
      %v3158 = vadd.f32 %v3034, %v3146
      %v3159 = vadd.f32 %v3035, %v3142
      %v3160 = vadd.f32 %v3036, %v3146
      %v3161 = vadd.f32 %v3037, %v3142
      %v3162 = vadd.f32 %v3038, %v3146
      %v3163 = vadd.f32 %v3039, %v3142
      %v3164 = vadd.f32 %v3040, %v3146
      %v3165 = vadd.f32 %v3041, %v3142
      %v3166 = vadd.f32 %v3042, %v3146
      %v3167 = vadd.f32 %v3043, %v3142
      %v3168 = vadd.f32 %v3044, %v3146
      %v3169 = vadd.f32 %v3045, %v3142
      %v3170 = vadd.f32 %v3046, %v3146
      %v3171 = vadd.f32 %v3047, %v3142
      %v3172 = vadd.f32 %v3048, %v3146
      %v3173 = vadd.f32 %v3049, %v3142
      %v3174 = vadd.f32 %v3050, %v3146
      %v3175 = vadd.f32 %v3051, %v3142
      %v3176 = vadd.f32 %v3052, %v3146
      %v3177 = vadd.f32 %v3053, %v3142
      %v3178 = vadd.f32 %v3054, %v3146
      %v3179 = vadd.f32 %v3055, %v3142
      %v3180 = vadd.f32 %v3056, %v3146
      %v3181 = vadd.f32 %v3057, %v3142
      %v3182 = vadd.f32 %v3058, %v3146
      %v3183 = vadd.f32 %v3059, %v3142
      %v3184 = vadd.f32 %v3060, %v3146
      %v3185 = vadd.f32 %v3061, %v3142
      %v3186 = vadd.f32 %v3062, %v3146
      %v3187 = vadd.f32 %v3063, %v3142
      %v3188 = vadd.f32 %v3064, %v3146
      %v3189 = vadd.f32 %v3065, %v3142
      %v3190 = vadd.f32 %v3066, %v3146
      %v3191 = vadd.f32 %v3067, %v3142
      %v3192 = vadd.f32 %v3068, %v3146
      %v3193 = vadd.f32 %v3069, %v3142
      %v3194 = vadd.f32 %v3070, %v3146
      %v3195 = vadd.f32 %v3071, %v3142
      %v3196 = vadd.f32 %v3072, %v3146
      %v3197 = vadd.f32 %v3073, %v3142
      %v3198 = vadd.f32 %v3074, %v3146
      %v3199 = vadd.f32 %v3075, %v3142
      %v3200 = vadd.f32 %v3076, %v3146
      %v3201 = vadd.f32 %v3077, %v3142
      %v3202 = vadd.f32 %v3078, %v3146
      %v3203 = vadd.f32 %v3079, %v3142
      %v3204 = vadd.f32 %v3080, %v3146
      %v3205 = vadd.f32 %v3081, %v3142
      %v3206 = vadd.f32 %v3082, %v3146
      %v3207 = vadd.f32 %v3083, %v3142
      %v3208 = vadd.f32 %v3084, %v3146
      %v3209 = vadd.f32 %v3085, %v3142
      %v3210 = vadd.f32 %v3086, %v3146
      %v3211 = vadd.f32 %v3087, %v3142
      %v3212 = vadd.f32 %v3088, %v3146
      %v3213 = vadd.f32 %v3089, %v3142
      %v3214 = vadd.f32 %v3090, %v3146
      %v3215 = vadd.f32 %v3091, %v3142
      %v3216 = vadd.f32 %v3092, %v3146
      %v3217 = vadd.f32 %v3093, %v3142
      %v3218 = vadd.f32 %v3094, %v3146
      %v3219 = vadd.f32 %v3095, %v3142
      %v3220 = vadd.f32 %v3096, %v3146
      %v3221 = vadd.f32 %v3097, %v3142
      %v3222 = vadd.f32 %v3098, %v3146
      %v3223 = vadd.f32 %v3099, %v3142
      %v3224 = vadd.f32 %v3100, %v3146
      %v3225 = vadd.f32 %v3101, %v3142
      %v3226 = vadd.f32 %v3102, %v3146
      %v3227 = vadd.f32 %v3103, %v3142
      %v3228 = vadd.f32 %v3104, %v3146
      %v3229 = vadd.f32 %v3105, %v3142
      %v3230 = vadd.f32 %v3106, %v3146
      %v3231 = vadd.f32 %v3107, %v3142
      %v3232 = vadd.f32 %v3108, %v3146
      %v3233 = vadd.f32 %v3109, %v3142
      %v3234 = vadd.f32 %v3110, %v3146
      %v3235 = vadd.f32 %v3111, %v3142
      %v3236 = vadd.f32 %v3112, %v3146
      %v3237 = vadd.f32 %v3113, %v3142
      %v3238 = vadd.f32 %v3114, %v3146
      %v3239 = vadd.f32 %v3115, %v3142
      %v3240 = vadd.f32 %v3116, %v3146
      %v3241 = vadd.f32 %v3117, %v3142
      %v3242 = vadd.f32 %v3118, %v3146
      %v3243 = vadd.f32 %v3119, %v3142
      %v3244 = vadd.f32 %v3120, %v3146
      %v3245 = vadd.f32 %v3121, %v3142
      %v3246 = vadd.f32 %v3122, %v3146
      %v3247 = vadd.f32 %v3123, %v3142
      %v3248 = vadd.f32 %v3124, %v3146
      %v3249 = vadd.f32 %v3125, %v3142
      %v3250 = vadd.f32 %v3126, %v3146
      %v3251 = vadd.f32 %v3127, %v3142
      %v3252 = vadd.f32 %v3128, %v3146
      %v3253 = vadd.f32 %v3129, %v3142
      %v3254 = vadd.f32 %v3130, %v3146
      %v3255 = vadd.f32 %v3131, %v3142
      %v3256 = vadd.f32 %v3132, %v3146
      %v3257 = vadd.f32 %v3133, %v3142
      %v3258 = vadd.f32 %v3134, %v3146
      %v3259 = vadd.f32 %v3135, %v3142
      %v3260 = vadd.f32 %v3136, %v3146
      %v3261 = vmax.f32 %v3149, 0.0
      %v3262 = vmax.f32 %v3150, 0.0
      %v3263 = vmax.f32 %v3151, 0.0
      %v3264 = vmax.f32 %v3152, 0.0
      %v3265 = vmax.f32 %v3153, 0.0
      %v3266 = vmax.f32 %v3154, 0.0
      %v3267 = vmax.f32 %v3155, 0.0
      %v3268 = vmax.f32 %v3156, 0.0
      %v3269 = vmax.f32 %v3157, 0.0
      %v3270 = vmax.f32 %v3158, 0.0
      %v3271 = vmax.f32 %v3159, 0.0
      %v3272 = vmax.f32 %v3160, 0.0
      %v3273 = vmax.f32 %v3161, 0.0
      %v3274 = vmax.f32 %v3162, 0.0
      %v3275 = vmax.f32 %v3163, 0.0
      %v3276 = vmax.f32 %v3164, 0.0
      %v3277 = vmax.f32 %v3165, 0.0
      %v3278 = vmax.f32 %v3166, 0.0
      %v3279 = vmax.f32 %v3167, 0.0
      %v3280 = vmax.f32 %v3168, 0.0
      %v3281 = vmax.f32 %v3169, 0.0
      %v3282 = vmax.f32 %v3170, 0.0
      %v3283 = vmax.f32 %v3171, 0.0
      %v3284 = vmax.f32 %v3172, 0.0
      %v3285 = vmax.f32 %v3173, 0.0
      %v3286 = vmax.f32 %v3174, 0.0
      %v3287 = vmax.f32 %v3175, 0.0
      %v3288 = vmax.f32 %v3176, 0.0
      %v3289 = vmax.f32 %v3177, 0.0
      %v3290 = vmax.f32 %v3178, 0.0
      %v3291 = vmax.f32 %v3179, 0.0
      %v3292 = vmax.f32 %v3180, 0.0
      %v3293 = vmax.f32 %v3181, 0.0
      %v3294 = vmax.f32 %v3182, 0.0
      %v3295 = vmax.f32 %v3183, 0.0
      %v3296 = vmax.f32 %v3184, 0.0
      %v3297 = vmax.f32 %v3185, 0.0
      %v3298 = vmax.f32 %v3186, 0.0
      %v3299 = vmax.f32 %v3187, 0.0
      %v3300 = vmax.f32 %v3188, 0.0
      %v3301 = vmax.f32 %v3189, 0.0
      %v3302 = vmax.f32 %v3190, 0.0
      %v3303 = vmax.f32 %v3191, 0.0
      %v3304 = vmax.f32 %v3192, 0.0
      %v3305 = vmax.f32 %v3193, 0.0
      %v3306 = vmax.f32 %v3194, 0.0
      %v3307 = vmax.f32 %v3195, 0.0
      %v3308 = vmax.f32 %v3196, 0.0
      %v3309 = vmax.f32 %v3197, 0.0
      %v3310 = vmax.f32 %v3198, 0.0
      %v3311 = vmax.f32 %v3199, 0.0
      %v3312 = vmax.f32 %v3200, 0.0
      %v3313 = vmax.f32 %v3201, 0.0
      %v3314 = vmax.f32 %v3202, 0.0
      %v3315 = vmax.f32 %v3203, 0.0
      %v3316 = vmax.f32 %v3204, 0.0
      %v3317 = vmax.f32 %v3205, 0.0
      %v3318 = vmax.f32 %v3206, 0.0
      %v3319 = vmax.f32 %v3207, 0.0
      %v3320 = vmax.f32 %v3208, 0.0
      %v3321 = vmax.f32 %v3209, 0.0
      %v3322 = vmax.f32 %v3210, 0.0
      %v3323 = vmax.f32 %v3211, 0.0
      %v3324 = vmax.f32 %v3212, 0.0
      %v3325 = vmax.f32 %v3213, 0.0
      %v3326 = vmax.f32 %v3214, 0.0
      %v3327 = vmax.f32 %v3215, 0.0
      %v3328 = vmax.f32 %v3216, 0.0
      %v3329 = vmax.f32 %v3217, 0.0
      %v3330 = vmax.f32 %v3218, 0.0
      %v3331 = vmax.f32 %v3219, 0.0
      %v3332 = vmax.f32 %v3220, 0.0
      %v3333 = vmax.f32 %v3221, 0.0
      %v3334 = vmax.f32 %v3222, 0.0
      %v3335 = vmax.f32 %v3223, 0.0
      %v3336 = vmax.f32 %v3224, 0.0
      %v3337 = vmax.f32 %v3225, 0.0
      %v3338 = vmax.f32 %v3226, 0.0
      %v3339 = vmax.f32 %v3227, 0.0
      %v3340 = vmax.f32 %v3228, 0.0
      %v3341 = vmax.f32 %v3229, 0.0
      %v3342 = vmax.f32 %v3230, 0.0
      %v3343 = vmax.f32 %v3231, 0.0
      %v3344 = vmax.f32 %v3232, 0.0
      %v3345 = vmax.f32 %v3233, 0.0
      %v3346 = vmax.f32 %v3234, 0.0
      %v3347 = vmax.f32 %v3235, 0.0
      %v3348 = vmax.f32 %v3236, 0.0
      %v3349 = vmax.f32 %v3237, 0.0
      %v3350 = vmax.f32 %v3238, 0.0
      %v3351 = vmax.f32 %v3239, 0.0
      %v3352 = vmax.f32 %v3240, 0.0
      %v3353 = vmax.f32 %v3241, 0.0
      %v3354 = vmax.f32 %v3242, 0.0
      %v3355 = vmax.f32 %v3243, 0.0
      %v3356 = vmax.f32 %v3244, 0.0
      %v3357 = vmax.f32 %v3245, 0.0
      %v3358 = vmax.f32 %v3246, 0.0
      %v3359 = vmax.f32 %v3247, 0.0
      %v3360 = vmax.f32 %v3248, 0.0
      %v3361 = vmax.f32 %v3249, 0.0
      %v3362 = vmax.f32 %v3250, 0.0
      %v3363 = vmax.f32 %v3251, 0.0
      %v3364 = vmax.f32 %v3252, 0.0
      %v3365 = vmax.f32 %v3253, 0.0
      %v3366 = vmax.f32 %v3254, 0.0
      %v3367 = vmax.f32 %v3255, 0.0
      %v3368 = vmax.f32 %v3256, 0.0
      %v3369 = vmax.f32 %v3257, 0.0
      %v3370 = vmax.f32 %v3258, 0.0
      %v3371 = vmax.f32 %v3259, 0.0
      %v3372 = vmax.f32 %v3260, 0.0
      %v3373 = vmax.f32 %v3261, %v3265
      %v3374 = vmax.f32 %v3262, %v3266
      %v3375 = vmax.f32 %v3263, %v3267
      %v3376 = vmax.f32 %v3264, %v3268
      %v3377 = vmax.f32 %v3269, %v3273
      %v3378 = vmax.f32 %v3270, %v3274
      %v3379 = vmax.f32 %v3271, %v3275
      %v3380 = vmax.f32 %v3272, %v3276
      %v3381 = vmax.f32 %v3277, %v3281
      %v3382 = vmax.f32 %v3278, %v3282
      %v3383 = vmax.f32 %v3279, %v3283
      %v3384 = vmax.f32 %v3280, %v3284
      %v3385 = vmax.f32 %v3285, %v3289
      %v3386 = vmax.f32 %v3286, %v3290
      %v3387 = vmax.f32 %v3287, %v3291
      %v3388 = vmax.f32 %v3288, %v3292
      %v3389 = vmax.f32 %v3293, %v3297
      %v3390 = vmax.f32 %v3294, %v3298
      %v3391 = vmax.f32 %v3295, %v3299
      %v3392 = vmax.f32 %v3296, %v3300
      %v3393 = vmax.f32 %v3301, %v3305
      %v3394 = vmax.f32 %v3302, %v3306
      %v3395 = vmax.f32 %v3303, %v3307
      %v3396 = vmax.f32 %v3304, %v3308
      %v3397 = vmax.f32 %v3309, %v3313
      %v3398 = vmax.f32 %v3310, %v3314
      %v3399 = vmax.f32 %v3311, %v3315
      %v3400 = vmax.f32 %v3312, %v3316
      %v3401 = vmax.f32 %v3317, %v3321
      %v3402 = vmax.f32 %v3318, %v3322
      %v3403 = vmax.f32 %v3319, %v3323
      %v3404 = vmax.f32 %v3320, %v3324
      %v3405 = vmax.f32 %v3325, %v3329
      %v3406 = vmax.f32 %v3326, %v3330
      %v3407 = vmax.f32 %v3327, %v3331
      %v3408 = vmax.f32 %v3328, %v3332
      %v3409 = vmax.f32 %v3333, %v3337
      %v3410 = vmax.f32 %v3334, %v3338
      %v3411 = vmax.f32 %v3335, %v3339
      %v3412 = vmax.f32 %v3336, %v3340
      %v3413 = vmax.f32 %v3341, %v3345
      %v3414 = vmax.f32 %v3342, %v3346
      %v3415 = vmax.f32 %v3343, %v3347
      %v3416 = vmax.f32 %v3344, %v3348
      %v3417 = vmax.f32 %v3349, %v3353
      %v3418 = vmax.f32 %v3350, %v3354
      %v3419 = vmax.f32 %v3351, %v3355
      %v3420 = vmax.f32 %v3352, %v3356
      %v3421 = vmax.f32 %v3357, %v3361
      %v3422 = vmax.f32 %v3358, %v3362
      %v3423 = vmax.f32 %v3359, %v3363
      %v3424 = vmax.f32 %v3360, %v3364
      %v3425 = vmax.f32 %v3365, %v3369
      %v3426 = vmax.f32 %v3366, %v3370
      %v3427 = vmax.f32 %v3367, %v3371
      %v3428 = vmax.f32 %v3368, %v3372
      %v3429 = vpack.c.bf16 %v3375, %v3373
      %v3430 = vpack.c.bf16 %v3376, %v3374
      %v3431 = vpack.c.bf16 %v3379, %v3377
      %v3432 = vpack.c.bf16 %v3380, %v3378
      %v3433 = vpack.c.bf16 %v3383, %v3381
      %v3434 = vpack.c.bf16 %v3384, %v3382
      %v3435 = vpack.c.bf16 %v3387, %v3385
      %v3436 = vpack.c.bf16 %v3388, %v3386
      %v3437 = vpack.c.bf16 %v3391, %v3389
      %v3438 = vpack.c.bf16 %v3392, %v3390
      %v3439 = vpack.c.bf16 %v3395, %v3393
      %v3440 = vpack.c.bf16 %v3396, %v3394
      %v3441 = vpack.c.bf16 %v3399, %v3397
      %v3442 = vpack.c.bf16 %v3400, %v3398
      %v3443 = vpack.c.bf16 %v3403, %v3401
      %v3444 = vpack.c.bf16 %v3404, %v3402
      %v3445 = vpack.c.bf16 %v3407, %v3405
      %v3446 = vpack.c.bf16 %v3408, %v3406
      %v3447 = vpack.c.bf16 %v3411, %v3409
      %v3448 = vpack.c.bf16 %v3412, %v3410
      %v3449 = vpack.c.bf16 %v3415, %v3413
      %v3450 = vpack.c.bf16 %v3416, %v3414
      %v3451 = vpack.c.bf16 %v3419, %v3417
      %v3452 = vpack.c.bf16 %v3420, %v3418
      %v3453 = vpack.c.bf16 %v3423, %v3421
      %v3454 = vpack.c.bf16 %v3424, %v3422
      %v3455 = vpack.c.bf16 %v3427, %v3425
      %v3456 = vpack.c.bf16 %v3428, %v3426
      %v3457 = vld [vmem:[%s3] sm:$0xf]
      %v3458 = vld [vmem:[%s3 + $0x4] sm:$0xf]
      %v3459 = vld [vmem:[%s3 + $0x8] sm:$0xf]
      %v3460 = vld [vmem:[%s3 + $0xc] sm:$0xf]
      %v3461 = vld [vmem:[%s3 + $0x10] sm:$0xf]
      %v3462 = vld [vmem:[%s3 + $0x14] sm:$0xf]
      %v3463 = vld [vmem:[%s3 + $0x18] sm:$0xf]
      %v3464 = vld [vmem:[%s3 + $0x1c] sm:$0xf]
      %v3465 = vld [vmem:[%s3 + $0x20] sm:$0xf]
      %v3466 = vld [vmem:[%s3 + $0x24] sm:$0xf]
      %v3467 = vld [vmem:[%s3 + $0x28] sm:$0xf]
      %v3468 = vld [vmem:[%s3 + $0x2c] sm:$0xf]
      %v3469 = vld [vmem:[%s3 + $0x30] sm:$0xf]
      %v3470 = vld [vmem:[%s3 + $0x34] sm:$0xf]
      %v3471 = vld [vmem:[%s3 + $0x38] sm:$0xf]
      %v3472 = vld [vmem:[%s3 + $0x3c] sm:$0xf]
      %v3473 = vld [vmem:[%s3 + $0x40] sm:$0xf]
      %v3474 = vld [vmem:[%s3 + $0x44] sm:$0xf]
      %v3475 = vld [vmem:[%s3 + $0x48] sm:$0xf]
      %v3476 = vld [vmem:[%s3 + $0x4c] sm:$0xf]
      %v3477 = vld [vmem:[%s3 + $0x50] sm:$0xf]
      %v3499 = vunpack.c.l.b16 %v3457
      %v3500 = vunpack.c.l.b16 %v3458
      %v3501 = vunpack.c.l.b16 %v3459
      %v3502 = vunpack.c.l.b16 %v3460
      %v3503 = vunpack.c.l.b16 %v3461
      %v3504 = vunpack.c.l.b16 %v3462
      %v3505 = vunpack.c.l.b16 %v3463
      %v3506 = vunpack.c.l.b16 %v3464
      %v3507 = vunpack.c.l.b16 %v3465
      %v3508 = vunpack.c.l.b16 %v3466
      %v3509 = vunpack.c.l.b16 %v3467
      %v3510 = vunpack.c.l.b16 %v3468
      %v3511 = vunpack.c.l.b16 %v3469
      %v3512 = vunpack.c.l.b16 %v3470
      %v3513 = vunpack.c.l.b16 %v3471
      %v3514 = vunpack.c.l.b16 %v3472
      %v3515 = vunpack.c.l.b16 %v3473
      %v3516 = vunpack.c.l.b16 %v3474
      %v3517 = vunpack.c.l.b16 %v3475
      %v3518 = vunpack.c.l.b16 %v3476
      %v3519 = vunpack.c.l.b16 %v3477
      %v3520 = vpack.c.b16 %v3500, %v3499
      %v3521 = vpack.c.b16 %v3502, %v3501
      %v3522 = vpack.c.b16 %v3504, %v3503
      %v3523 = vpack.c.b16 %v3506, %v3505
      %v3524 = vpack.c.b16 %v3508, %v3507
      %v3525 = vpack.c.b16 %v3510, %v3509
      %v3526 = vpack.c.b16 %v3512, %v3511
      %v3527 = vpack.c.b16 %v3514, %v3513
      %v3528 = vpack.c.b16 %v3516, %v3515
      %v3529 = vpack.c.b16 %v3518, %v3517
      %v3530 = vpack.c.b16 %v3519, %v3519
      %vm3541 = vcmask 326656
      %v3543 = vsel %vm3541, %v3430, 0
      %v3546 = vsel %vm3541, %v3432, 0
      %v3549 = vsel %vm3541, %v3434, 0
      %v3552 = vsel %vm3541, %v3436, 0
      %v3555 = vsel %vm3541, %v3438, 0
      %v3558 = vsel %vm3541, %v3440, 0
      %v3561 = vsel %vm3541, %v3442, 0
      %v3564 = vsel %vm3541, %v3444, 0
      %v3567 = vsel %vm3541, %v3446, 0
      %v3570 = vsel %vm3541, %v3448, 0
      %v3573 = vsel %vm3541, %v3450, 0
      %v3576 = vsel %vm3541, %v3452, 0
      %v3579 = vsel %vm3541, %v3454, 0
      %v3582 = vsel %vm3541, %v3456, 0
      %vm3584 = vcmask 1043456
      %v3586 = vsel %vm3584, %v3530, 0
      %3588 = vmatprep.subr.bf16.mxu0 0
      %3589 = vmatpush1.bf16.msra.mxu0 %v3520
      %3590 = vmatprep.subr.bf16.mxu0 0
      %3591 = vmatpush1.bf16.msra.mxu0 %v3521
      %3592 = vmatprep.subr.bf16.mxu0 0
      %3593 = vmatpush1.bf16.msra.mxu0 %v3522
      %3594 = vmatprep.subr.bf16.mxu0 0
      %3595 = vmatpush1.bf16.msra.mxu0 %v3523
      %3596 = vmatprep.subr.bf16.mxu0 0
      %3597 = vmatpush1.bf16.msra.mxu0 %v3524
      %3598 = vmatprep.subr.bf16.mxu0 0
      %3599 = vmatpush1.bf16.msra.mxu0 %v3525
      %3600 = vmatprep.subr.bf16.mxu0 0
      %3601 = vmatpush1.bf16.msra.mxu0 %v3526
      %3602 = vmatprep.subr.bf16.mxu0 0
      %3603 = vmatpush1.bf16.msra.mxu0 %v3527
      %3604 = vmatprep.subr.bf16.mxu0 0
      %3605 = vmatpush1.bf16.msra.mxu0 %v3528
      %3606 = vmatprep.subr.bf16.mxu0 0
      %3607 = vmatpush1.bf16.msra.mxu0 %v3529
      %3608 = vmatprep.subr.bf16.mxu0 0
      %3609 = vmatpush1.bf16.msra.mxu0 %v3586
      %3610 = vmatprep.subr.bf16.mxu0 0
      %3611 = vmatpush1.bf16.msra.mxu0 0
      %3612 = vmatprep.subr.bf16.mxu0 0
      %3613 = vmatpush1.bf16.msra.mxu0 0
      %3614 = vmatprep.subr.bf16.mxu0 0
      %3615 = vmatpush1.bf16.msra.mxu0 0
      %3616 = vmatprep.subr.bf16.mxu0 0
      %3617 = vmatpush1.bf16.msra.mxu0 0
      %3618 = vmatprep.subr.bf16.mxu0 0
      %3619 = vmatpush1.bf16.msra.mxu0 0
      %3620 = vmatprep.mubr.bf16.mxu0 %v3543
      %3621 = vmatmul.mubr.bf16.gmra.mrb[0].mxu0 %v3429
      %v3622 = vpop.f32.mrb[0].mxu0
      %v3623 = vadd.f32 0.0, %v3622
      %v3624 = vpop.f32.mrb[0].mxu0
      %v3625 = vpop.f32.mrb[0].mxu0
      %v3626 = vadd.f32 0.0, %v3625
      %v3627 = vpop.f32.mrb[0].mxu0
      %3628 = vmatprep.mubr.bf16.mxu0 %v3546
      %3629 = vmatmul.mubr.bf16.gmra.mrb[0].mxu0 %v3431
      %v3630 = vpop.f32.mrb[0].mxu0
      %v3631 = vadd.f32 0.0, %v3630
      %v3632 = vpop.f32.mrb[0].mxu0
      %v3633 = vpop.f32.mrb[0].mxu0
      %v3634 = vadd.f32 0.0, %v3633
      %v3635 = vpop.f32.mrb[0].mxu0
      %3636 = vmatprep.mubr.bf16.mxu0 %v3549
      %3637 = vmatmul.mubr.bf16.gmra.mrb[0].mxu0 %v3433
      %v3638 = vpop.f32.mrb[0].mxu0
      %v3639 = vadd.f32 0.0, %v3638
      %v3640 = vpop.f32.mrb[0].mxu0
      %v3641 = vpop.f32.mrb[0].mxu0
      %v3642 = vadd.f32 0.0, %v3641
      %v3643 = vpop.f32.mrb[0].mxu0
      %3644 = vmatprep.mubr.bf16.mxu0 %v3552
      %3645 = vmatmul.mubr.bf16.gmra.mrb[0].mxu0 %v3435
      %v3646 = vpop.f32.mrb[0].mxu0
      %v3647 = vadd.f32 0.0, %v3646
      %v3648 = vpop.f32.mrb[0].mxu0
      %v3649 = vpop.f32.mrb[0].mxu0
      %v3650 = vadd.f32 0.0, %v3649
      %v3651 = vpop.f32.mrb[0].mxu0
      %3652 = vmatprep.mubr.bf16.mxu0 %v3555
      %3653 = vmatmul.mubr.bf16.gmra.mrb[0].mxu0 %v3437
      %v3654 = vpop.f32.mrb[0].mxu0
      %v3655 = vadd.f32 0.0, %v3654
      %v3656 = vpop.f32.mrb[0].mxu0
      %v3657 = vpop.f32.mrb[0].mxu0
      %v3658 = vadd.f32 0.0, %v3657
      %v3659 = vpop.f32.mrb[0].mxu0
      %3660 = vmatprep.mubr.bf16.mxu0 %v3558
      %3661 = vmatmul.mubr.bf16.gmra.mrb[0].mxu0 %v3439
      %v3662 = vpop.f32.mrb[0].mxu0
      %v3663 = vadd.f32 0.0, %v3662
      %v3664 = vpop.f32.mrb[0].mxu0
      %v3665 = vpop.f32.mrb[0].mxu0
      %v3666 = vadd.f32 0.0, %v3665
      %v3667 = vpop.f32.mrb[0].mxu0
      %3668 = vmatprep.mubr.bf16.mxu0 %v3561
      %3669 = vmatmul.mubr.bf16.gmra.mrb[0].mxu0 %v3441
      %v3670 = vpop.f32.mrb[0].mxu0
      %v3671 = vadd.f32 0.0, %v3670
      %v3672 = vpop.f32.mrb[0].mxu0
      %v3673 = vpop.f32.mrb[0].mxu0
      %v3674 = vadd.f32 0.0, %v3673
      %v3675 = vpop.f32.mrb[0].mxu0
      %3676 = vmatprep.mubr.bf16.mxu0 %v3564
      %3677 = vmatmul.mubr.bf16.gmra.mrb[0].mxu0 %v3443
      %v3678 = vpop.f32.mrb[0].mxu0
      %v3679 = vadd.f32 0.0, %v3678
      %v3680 = vpop.f32.mrb[0].mxu0
      %v3681 = vpop.f32.mrb[0].mxu0
      %v3682 = vadd.f32 0.0, %v3681
      %v3683 = vpop.f32.mrb[0].mxu0
      %3684 = vmatprep.mubr.bf16.mxu0 %v3567
      %3685 = vmatmul.mubr.bf16.gmra.mrb[0].mxu0 %v3445
      %v3686 = vpop.f32.mrb[0].mxu0
      %v3687 = vadd.f32 0.0, %v3686
      %v3688 = vpop.f32.mrb[0].mxu0
      %v3689 = vpop.f32.mrb[0].mxu0
      %v3690 = vadd.f32 0.0, %v3689
      %v3691 = vpop.f32.mrb[0].mxu0
      %3692 = vmatprep.mubr.bf16.mxu0 %v3570
      %3693 = vmatmul.mubr.bf16.gmra.mrb[0].mxu0 %v3447
      %v3694 = vpop.f32.mrb[0].mxu0
      %v3695 = vadd.f32 0.0, %v3694
      %v3696 = vpop.f32.mrb[0].mxu0
      %v3697 = vpop.f32.mrb[0].mxu0
      %v3698 = vadd.f32 0.0, %v3697
      %v3699 = vpop.f32.mrb[0].mxu0
      %3700 = vmatprep.mubr.bf16.mxu0 %v3573
      %3701 = vmatmul.mubr.bf16.gmra.mrb[0].mxu0 %v3449
      %v3702 = vpop.f32.mrb[0].mxu0
      %v3703 = vadd.f32 0.0, %v3702
      %v3704 = vpop.f32.mrb[0].mxu0
      %v3705 = vpop.f32.mrb[0].mxu0
      %v3706 = vadd.f32 0.0, %v3705
      %v3707 = vpop.f32.mrb[0].mxu0
      %3708 = vmatprep.mubr.bf16.mxu0 %v3576
      %3709 = vmatmul.mubr.bf16.gmra.mrb[0].mxu0 %v3451
      %v3710 = vpop.f32.mrb[0].mxu0
      %v3711 = vadd.f32 0.0, %v3710
      %v3712 = vpop.f32.mrb[0].mxu0
      %v3713 = vpop.f32.mrb[0].mxu0
      %v3714 = vadd.f32 0.0, %v3713
      %v3715 = vpop.f32.mrb[0].mxu0
      %3716 = vmatprep.mubr.bf16.mxu0 %v3579
      %3717 = vmatmul.mubr.bf16.gmra.mrb[0].mxu0 %v3453
      %v3718 = vpop.f32.mrb[0].mxu0
      %v3719 = vadd.f32 0.0, %v3718
      %v3720 = vpop.f32.mrb[0].mxu0
      %v3721 = vpop.f32.mrb[0].mxu0
      %v3722 = vadd.f32 0.0, %v3721
      %v3723 = vpop.f32.mrb[0].mxu0
      %3724 = vmatprep.mubr.bf16.mxu0 %v3582
      %3725 = vmatmul.mubr.bf16.gmra.mrb[0].mxu0 %v3455
      %v3726 = vpop.f32.mrb[0].mxu0
      %v3727 = vadd.f32 0.0, %v3726
      %v3728 = vpop.f32.mrb[0].mxu0
      %v3729 = vpop.f32.mrb[0].mxu0
      %v3730 = vadd.f32 0.0, %v3729
      %v3731 = vpop.f32.mrb[0].mxu0
      %3732 = vdwg.mxu0
      %v3733 = vld [vmem:[%s4] sm:$0xf]
      %v3734 = vld [vmem:[%s4 + $0x4] sm:$0xf]
      %v3735 = vld [vmem:[%s4 + $0x8] sm:$0xf]
      %v3736 = vld [vmem:[%s4 + $0xc] sm:$0xf]
      %v3737 = vld [vmem:[%s4 + $0x10] sm:$0xf]
      %v3738 = vld [vmem:[%s4 + $0x14] sm:$0xf]
      %v3739 = vld [vmem:[%s4 + $0x18] sm:$0xf]
      %v3740 = vld [vmem:[%s4 + $0x1c] sm:$0xf]
      %v3741 = vld [vmem:[%s4 + $0x20] sm:$0xf]
      %v3742 = vld [vmem:[%s4 + $0x24] sm:$0xf]
      %v3743 = vld [vmem:[%s4 + $0x28] sm:$0xf]
      %v3744 = vld [vmem:[%s4 + $0x2c] sm:$0xf]
      %v3745 = vld [vmem:[%s4 + $0x30] sm:$0xf]
      %v3746 = vld [vmem:[%s4 + $0x34] sm:$0xf]
      %v3747 = vld [vmem:[%s4 + $0x38] sm:$0xf]
      %v3748 = vld [vmem:[%s4 + $0x3c] sm:$0xf]
      %v3749 = vld [vmem:[%s4 + $0x40] sm:$0xf]
      %v3750 = vld [vmem:[%s4 + $0x44] sm:$0xf]
      %v3751 = vld [vmem:[%s4 + $0x48] sm:$0xf]
      %v3752 = vld [vmem:[%s4 + $0x4c] sm:$0xf]
      %v3753 = vld [vmem:[%s4 + $0x50] sm:$0xf]
      %v3775 = vunpack.c.l.b16 %v3733
      %v3776 = vunpack.c.l.b16 %v3734
      %v3777 = vunpack.c.l.b16 %v3735
      %v3778 = vunpack.c.l.b16 %v3736
      %v3779 = vunpack.c.l.b16 %v3737
      %v3780 = vunpack.c.l.b16 %v3738
      %v3781 = vunpack.c.l.b16 %v3739
      %v3782 = vunpack.c.l.b16 %v3740
      %v3783 = vunpack.c.l.b16 %v3741
      %v3784 = vunpack.c.l.b16 %v3742
      %v3785 = vunpack.c.l.b16 %v3743
      %v3786 = vunpack.c.l.b16 %v3744
      %v3787 = vunpack.c.l.b16 %v3745
      %v3788 = vunpack.c.l.b16 %v3746
      %v3789 = vunpack.c.l.b16 %v3747
      %v3790 = vunpack.c.l.b16 %v3748
      %v3791 = vunpack.c.l.b16 %v3749
      %v3792 = vunpack.c.l.b16 %v3750
      %v3793 = vunpack.c.l.b16 %v3751
      %v3794 = vunpack.c.l.b16 %v3752
      %v3795 = vunpack.c.l.b16 %v3753
      %v3796 = vpack.c.b16 %v3776, %v3775
      %v3797 = vpack.c.b16 %v3778, %v3777
      %v3798 = vpack.c.b16 %v3780, %v3779
      %v3799 = vpack.c.b16 %v3782, %v3781
      %v3800 = vpack.c.b16 %v3784, %v3783
      %v3801 = vpack.c.b16 %v3786, %v3785
      %v3802 = vpack.c.b16 %v3788, %v3787
      %v3803 = vpack.c.b16 %v3790, %v3789
      %v3804 = vpack.c.b16 %v3792, %v3791
      %v3805 = vpack.c.b16 %v3794, %v3793
      %v3806 = vpack.c.b16 %v3795, %v3795
      %v3818 = vsel %vm3584, %v3806, 0
      %3820 = vmatprep.subr.bf16.mxu0 0
      %3821 = vmatpush1.bf16.msra.mxu0 %v3796
      %3822 = vmatprep.subr.bf16.mxu0 0
      %3823 = vmatpush1.bf16.msra.mxu0 %v3797
      %3824 = vmatprep.subr.bf16.mxu0 0
      %3825 = vmatpush1.bf16.msra.mxu0 %v3798
      %3826 = vmatprep.subr.bf16.mxu0 0
      %3827 = vmatpush1.bf16.msra.mxu0 %v3799
      %3828 = vmatprep.subr.bf16.mxu0 0
      %3829 = vmatpush1.bf16.msra.mxu0 %v3800
      %3830 = vmatprep.subr.bf16.mxu0 0
      %3831 = vmatpush1.bf16.msra.mxu0 %v3801
      %3832 = vmatprep.subr.bf16.mxu0 0
      %3833 = vmatpush1.bf16.msra.mxu0 %v3802
      %3834 = vmatprep.subr.bf16.mxu0 0
      %3835 = vmatpush1.bf16.msra.mxu0 %v3803
      %3836 = vmatprep.subr.bf16.mxu0 0
      %3837 = vmatpush1.bf16.msra.mxu0 %v3804
      %3838 = vmatprep.subr.bf16.mxu0 0
      %3839 = vmatpush1.bf16.msra.mxu0 %v3805
      %3840 = vmatprep.subr.bf16.mxu0 0
      %3841 = vmatpush1.bf16.msra.mxu0 %v3818
      %3842 = vmatprep.subr.bf16.mxu0 0
      %3843 = vmatpush1.bf16.msra.mxu0 0
      %3844 = vmatprep.subr.bf16.mxu0 0
      %3845 = vmatpush1.bf16.msra.mxu0 0
      %3846 = vmatprep.subr.bf16.mxu0 0
      %3847 = vmatpush1.bf16.msra.mxu0 0
      %3848 = vmatprep.subr.bf16.mxu0 0
      %3849 = vmatpush1.bf16.msra.mxu0 0
      %3850 = vmatprep.subr.bf16.mxu0 0
      %3851 = vmatpush1.bf16.msra.mxu0 0
      %3852 = vmatprep.mubr.bf16.mxu0 %v3543
      %3853 = vmatmul.mubr.bf16.gmra.mrb[0].mxu0 %v3429
      %v3854 = vpop.f32.mrb[0].mxu0
      %v3855 = vadd.f32 0.0, %v3854
      %v3856 = vpop.f32.mrb[0].mxu0
      %v3857 = vpop.f32.mrb[0].mxu0
      %v3858 = vadd.f32 0.0, %v3857
      %v3859 = vpop.f32.mrb[0].mxu0
      %3860 = vmatprep.mubr.bf16.mxu0 %v3546
      %3861 = vmatmul.mubr.bf16.gmra.mrb[0].mxu0 %v3431
      %v3862 = vpop.f32.mrb[0].mxu0
      %v3863 = vadd.f32 0.0, %v3862
      %v3864 = vpop.f32.mrb[0].mxu0
      %v3865 = vpop.f32.mrb[0].mxu0
      %v3866 = vadd.f32 0.0, %v3865
      %v3867 = vpop.f32.mrb[0].mxu0
      %3868 = vmatprep.mubr.bf16.mxu0 %v3549
      %3869 = vmatmul.mubr.bf16.gmra.mrb[0].mxu0 %v3433
      %v3870 = vpop.f32.mrb[0].mxu0
      %v3871 = vadd.f32 0.0, %v3870
      %v3872 = vpop.f32.mrb[0].mxu0
      %v3873 = vpop.f32.mrb[0].mxu0
      %v3874 = vadd.f32 0.0, %v3873
      %v3875 = vpop.f32.mrb[0].mxu0
      %3876 = vmatprep.mubr.bf16.mxu0 %v3552
      %3877 = vmatmul.mubr.bf16.gmra.mrb[0].mxu0 %v3435
      %v3878 = vpop.f32.mrb[0].mxu0
      %v3879 = vadd.f32 0.0, %v3878
      %v3880 = vpop.f32.mrb[0].mxu0
      %v3881 = vpop.f32.mrb[0].mxu0
      %v3882 = vadd.f32 0.0, %v3881
      %v3883 = vpop.f32.mrb[0].mxu0
      %3884 = vmatprep.mubr.bf16.mxu0 %v3555
      %3885 = vmatmul.mubr.bf16.gmra.mrb[0].mxu0 %v3437
      %v3886 = vpop.f32.mrb[0].mxu0
      %v3887 = vadd.f32 0.0, %v3886
      %v3888 = vpop.f32.mrb[0].mxu0
      %v3889 = vpop.f32.mrb[0].mxu0
      %v3890 = vadd.f32 0.0, %v3889
      %v3891 = vpop.f32.mrb[0].mxu0
      %3892 = vmatprep.mubr.bf16.mxu0 %v3558
      %3893 = vmatmul.mubr.bf16.gmra.mrb[0].mxu0 %v3439
      %v3894 = vpop.f32.mrb[0].mxu0
      %v3895 = vadd.f32 0.0, %v3894
      %v3896 = vpop.f32.mrb[0].mxu0
      %v3897 = vpop.f32.mrb[0].mxu0
      %v3898 = vadd.f32 0.0, %v3897
      %v3899 = vpop.f32.mrb[0].mxu0
      %3900 = vmatprep.mubr.bf16.mxu0 %v3561
      %3901 = vmatmul.mubr.bf16.gmra.mrb[0].mxu0 %v3441
      %v3902 = vpop.f32.mrb[0].mxu0
      %v3903 = vadd.f32 0.0, %v3902
      %v3904 = vpop.f32.mrb[0].mxu0
      %v3905 = vpop.f32.mrb[0].mxu0
      %v3906 = vadd.f32 0.0, %v3905
      %v3907 = vpop.f32.mrb[0].mxu0
      %3908 = vmatprep.mubr.bf16.mxu0 %v3564
      %3909 = vmatmul.mubr.bf16.gmra.mrb[0].mxu0 %v3443
      %v3910 = vpop.f32.mrb[0].mxu0
      %v3911 = vadd.f32 0.0, %v3910
      %v3912 = vpop.f32.mrb[0].mxu0
      %v3913 = vpop.f32.mrb[0].mxu0
      %v3914 = vadd.f32 0.0, %v3913
      %v3915 = vpop.f32.mrb[0].mxu0
      %3916 = vmatprep.mubr.bf16.mxu0 %v3567
      %3917 = vmatmul.mubr.bf16.gmra.mrb[0].mxu0 %v3445
      %v3918 = vpop.f32.mrb[0].mxu0
      %v3919 = vadd.f32 0.0, %v3918
      %v3920 = vpop.f32.mrb[0].mxu0
      %v3921 = vpop.f32.mrb[0].mxu0
      %v3922 = vadd.f32 0.0, %v3921
      %v3923 = vpop.f32.mrb[0].mxu0
      %3924 = vmatprep.mubr.bf16.mxu0 %v3570
      %3925 = vmatmul.mubr.bf16.gmra.mrb[0].mxu0 %v3447
      %v3926 = vpop.f32.mrb[0].mxu0
      %v3927 = vadd.f32 0.0, %v3926
      %v3928 = vpop.f32.mrb[0].mxu0
      %v3929 = vpop.f32.mrb[0].mxu0
      %v3930 = vadd.f32 0.0, %v3929
      %v3931 = vpop.f32.mrb[0].mxu0
      %3932 = vmatprep.mubr.bf16.mxu0 %v3573
      %3933 = vmatmul.mubr.bf16.gmra.mrb[0].mxu0 %v3449
      %v3934 = vpop.f32.mrb[0].mxu0
      %v3935 = vadd.f32 0.0, %v3934
      %v3936 = vpop.f32.mrb[0].mxu0
      %v3937 = vpop.f32.mrb[0].mxu0
      %v3938 = vadd.f32 0.0, %v3937
      %v3939 = vpop.f32.mrb[0].mxu0
      %3940 = vmatprep.mubr.bf16.mxu0 %v3576
      %3941 = vmatmul.mubr.bf16.gmra.mrb[0].mxu0 %v3451
      %v3942 = vpop.f32.mrb[0].mxu0
      %v3943 = vadd.f32 0.0, %v3942
      %v3944 = vpop.f32.mrb[0].mxu0
      %v3945 = vpop.f32.mrb[0].mxu0
      %v3946 = vadd.f32 0.0, %v3945
      %v3947 = vpop.f32.mrb[0].mxu0
      %3948 = vmatprep.mubr.bf16.mxu0 %v3579
      %3949 = vmatmul.mubr.bf16.gmra.mrb[0].mxu0 %v3453
      %v3950 = vpop.f32.mrb[0].mxu0
      %v3951 = vadd.f32 0.0, %v3950
      %v3952 = vpop.f32.mrb[0].mxu0
      %v3953 = vpop.f32.mrb[0].mxu0
      %v3954 = vadd.f32 0.0, %v3953
      %v3955 = vpop.f32.mrb[0].mxu0
      %3956 = vmatprep.mubr.bf16.mxu0 %v3582
      %3957 = vmatmul.mubr.bf16.gmra.mrb[0].mxu0 %v3455
      %v3958 = vpop.f32.mrb[0].mxu0
      %v3959 = vadd.f32 0.0, %v3958
      %v3960 = vpop.f32.mrb[0].mxu0
      %v3961 = vpop.f32.mrb[0].mxu0
      %v3962 = vadd.f32 0.0, %v3961
      %v3963 = vpop.f32.mrb[0].mxu0
      %3964 = vdwg.mxu0
      %v3965 = vmax.f32 %v3623, %v3855
      %v3966 = vmax.f32 %v3626, %v3858
      %v3967 = vmax.f32 %v3631, %v3863
      %v3968 = vmax.f32 %v3634, %v3866
      %v3969 = vmax.f32 %v3639, %v3871
      %v3970 = vmax.f32 %v3642, %v3874
      %v3971 = vmax.f32 %v3647, %v3879
      %v3972 = vmax.f32 %v3650, %v3882
      %v3973 = vmax.f32 %v3655, %v3887
      %v3974 = vmax.f32 %v3658, %v3890
      %v3975 = vmax.f32 %v3663, %v3895
      %v3976 = vmax.f32 %v3666, %v3898
      %v3977 = vmax.f32 %v3671, %v3903
      %v3978 = vmax.f32 %v3674, %v3906
      %v3979 = vmax.f32 %v3679, %v3911
      %v3980 = vmax.f32 %v3682, %v3914
      %v3981 = vmax.f32 %v3687, %v3919
      %v3982 = vmax.f32 %v3690, %v3922
      %v3983 = vmax.f32 %v3695, %v3927
      %v3984 = vmax.f32 %v3698, %v3930
      %v3985 = vmax.f32 %v3703, %v3935
      %v3986 = vmax.f32 %v3706, %v3938
      %v3987 = vmax.f32 %v3711, %v3943
      %v3988 = vmax.f32 %v3714, %v3946
      %v3989 = vmax.f32 %v3719, %v3951
      %v3990 = vmax.f32 %v3722, %v3954
      %v3991 = vmax.f32 %v3727, %v3959
      %v3992 = vmax.f32 %v3730, %v3962
      %v3993 = vpack.c.bf16 %v3966, %v3965
      %v3994 = vpack.c.bf16 %v3968, %v3967
      %v3995 = vpack.c.bf16 %v3970, %v3969
      %v3996 = vpack.c.bf16 %v3972, %v3971
      %v3997 = vpack.c.bf16 %v3974, %v3973
      %v3998 = vpack.c.bf16 %v3976, %v3975
      %v3999 = vpack.c.bf16 %v3978, %v3977
      %v4000 = vpack.c.bf16 %v3980, %v3979
      %v4001 = vpack.c.bf16 %v3982, %v3981
      %v4002 = vpack.c.bf16 %v3984, %v3983
      %v4003 = vpack.c.bf16 %v3986, %v3985
      %v4004 = vpack.c.bf16 %v3988, %v3987
      %v4005 = vpack.c.bf16 %v3990, %v3989
      %v4006 = vpack.c.bf16 %v3992, %v3991
      %v4007 = vld [vmem:[%s5] sm:$0xff]
      %v4008 = vld [vmem:[%s5 + $0x8] sm:$0xff]
      %v4009 = vld [vmem:[%s5 + $0x10] sm:$0xff]
      %v4010 = vld [vmem:[%s5 + $0x18] sm:$0xff]
      %v4011 = vld [vmem:[%s5 + $0x20] sm:$0xff]
      %v4012 = vld [vmem:[%s5 + $0x28] sm:$0xff]
      %v4013 = vld [vmem:[%s5 + $0x30] sm:$0xff]
      %v4014 = vld [vmem:[%s5 + $0x38] sm:$0xff]
      %v4015 = vld [vmem:[%s5 + $0x40] sm:$0xff]
      %v4016 = vld [vmem:[%s5 + $0x48] sm:$0xff]
      %v4017 = vld [vmem:[%s5 + $0x50] sm:$0x33]
      %s4018 = scalar_lea.vmem %s5, 88
      %v4019 = vld [vmem:[%s4018] sm:$0xff]
      %v4020 = vld [vmem:[%s4018 + $0x8] sm:$0xff]
      %v4021 = vld [vmem:[%s4018 + $0x10] sm:$0xff]
      %v4022 = vld [vmem:[%s4018 + $0x18] sm:$0xff]
      %v4023 = vld [vmem:[%s4018 + $0x20] sm:$0xff]
      %v4024 = vld [vmem:[%s4018 + $0x28] sm:$0xff]
      %v4025 = vld [vmem:[%s4018 + $0x30] sm:$0xff]
      %v4026 = vld [vmem:[%s4018 + $0x38] sm:$0xff]
      %v4027 = vld [vmem:[%s4018 + $0x40] sm:$0xff]
      %v4028 = vld [vmem:[%s4018 + $0x48] sm:$0xff]
      %v4029 = vld [vmem:[%s4018 + $0x50] sm:$0x33]
      %v4041 = vunpack.c.l.b16 %v4019
      %v4042 = vunpack.c.h.b16 %v4019
      %v4043 = vunpack.c.l.b16 %v4020
      %v4044 = vunpack.c.h.b16 %v4020
      %v4045 = vunpack.c.l.b16 %v4021
      %v4046 = vunpack.c.h.b16 %v4021
      %v4047 = vunpack.c.l.b16 %v4022
      %v4048 = vunpack.c.h.b16 %v4022
      %v4049 = vunpack.c.l.b16 %v4023
      %v4050 = vunpack.c.h.b16 %v4023
      %v4051 = vunpack.c.l.b16 %v4024
      %v4052 = vunpack.c.h.b16 %v4024
      %v4053 = vunpack.c.l.b16 %v4025
      %v4054 = vunpack.c.h.b16 %v4025
      %v4055 = vunpack.c.l.b16 %v4026
      %v4056 = vunpack.c.h.b16 %v4026
      %v4057 = vunpack.c.l.b16 %v4027
      %v4058 = vunpack.c.h.b16 %v4027
      %v4059 = vunpack.c.l.b16 %v4028
      %v4060 = vunpack.c.h.b16 %v4028
      %v4061 = vunpack.c.l.b16 %v4029
      %v4062 = vunpack.c.h.b16 %v4029
      %v4063 = vpack.c.b16 %v4043, %v4041
      %v4064 = vpack.c.b16 %v4044, %v4042
      %v4065 = vpack.c.b16 %v4047, %v4045
      %v4066 = vpack.c.b16 %v4048, %v4046
      %v4067 = vpack.c.b16 %v4051, %v4049
      %v4068 = vpack.c.b16 %v4052, %v4050
      %v4069 = vpack.c.b16 %v4055, %v4053
      %v4070 = vpack.c.b16 %v4056, %v4054
      %v4071 = vpack.c.b16 %v4059, %v4057
      %v4072 = vpack.c.b16 %v4060, %v4058
      %v4073 = vpack.c.b16 %v4061, %v4061
      %v4074 = vpack.c.b16 %v4062, %v4062
      %vm4085 = vcmask 687104
      %v4087 = vsel %vm4085, %v3994, 0
      %v4090 = vsel %vm4085, %v3995, 0
      %v4093 = vsel %vm4085, %v3996, 0
      %v4096 = vsel %vm4085, %v3997, 0
      %v4099 = vsel %vm4085, %v3998, 0
      %v4102 = vsel %vm4085, %v3999, 0
      %v4105 = vsel %vm4085, %v4000, 0
      %v4108 = vsel %vm4085, %v4001, 0
      %v4111 = vsel %vm4085, %v4002, 0
      %v4114 = vsel %vm4085, %v4003, 0
      %vm4116 = vcmask 1041408
      %v4118 = vsel %vm4116, %v4073, 0
      %v4121 = vsel %vm4116, %v4074, 0
      %4123 = vmatprep.subr.bf16.mxu0 %v4064
      %4124 = vmatpush1.bf16.msra.mxu0 %v4063
      %4125 = vmatprep.subr.bf16.mxu0 %v4066
      %4126 = vmatpush1.bf16.msra.mxu0 %v4065
      %4127 = vmatprep.subr.bf16.mxu0 %v4068
      %4128 = vmatpush1.bf16.msra.mxu0 %v4067
      %4129 = vmatprep.subr.bf16.mxu0 %v4070
      %4130 = vmatpush1.bf16.msra.mxu0 %v4069
      %4131 = vmatprep.subr.bf16.mxu0 %v4072
      %4132 = vmatpush1.bf16.msra.mxu0 %v4071
      %4133 = vmatprep.subr.bf16.mxu0 %v4121
      %4134 = vmatpush1.bf16.msra.mxu0 %v4118
      %4135 = vmatprep.subr.bf16.mxu0 0
      %4136 = vmatpush1.bf16.msra.mxu0 0
      %4137 = vmatprep.subr.bf16.mxu0 0
      %4138 = vmatpush1.bf16.msra.mxu0 0
      %4139 = vmatprep.subr.bf16.mxu0 0
      %4140 = vmatpush1.bf16.msra.mxu0 0
      %4141 = vmatprep.subr.bf16.mxu0 0
      %4142 = vmatpush1.bf16.msra.mxu0 0
      %4143 = vmatprep.subr.bf16.mxu0 0
      %4144 = vmatpush1.bf16.msra.mxu0 0
      %4145 = vmatprep.subr.bf16.mxu0 0
      %4146 = vmatpush1.bf16.msra.mxu0 0
      %4147 = vmatprep.subr.bf16.mxu0 0
      %4148 = vmatpush1.bf16.msra.mxu0 0
      %4149 = vmatprep.subr.bf16.mxu0 0
      %4150 = vmatpush1.bf16.msra.mxu0 0
      %4151 = vmatprep.subr.bf16.mxu0 0
      %4152 = vmatpush1.bf16.msra.mxu0 0
      %4153 = vmatprep.subr.bf16.mxu0 0
      %4154 = vmatpush1.bf16.msra.mxu0 0
      %4155 = vmatprep.mubr.bf16.mxu0 0
      %4156 = vmatmul.mubr.bf16.gmra.mrb[0].mxu0 %v4087
      %v4157 = vpop.f32.mrb[0].mxu0
      %v4158 = vadd.f32 0.0, %v4157
      %v4159 = vpop.f32.mrb[0].mxu0
      %v4160 = vadd.f32 0.0, %v4159
      %v4161 = vpop.f32.mrb[0].mxu0
      %v4162 = vadd.f32 0.0, %v4161
      %v4163 = vpop.f32.mrb[0].mxu0
      %v4164 = vadd.f32 0.0, %v4163
      %4165 = vmatprep.mubr.bf16.mxu0 0
      %4166 = vmatmul.mubr.bf16.gmra.mrb[0].mxu0 %v4090
      %v4167 = vpop.f32.mrb[0].mxu0
      %v4168 = vadd.f32 0.0, %v4167
      %v4169 = vpop.f32.mrb[0].mxu0
      %v4170 = vadd.f32 0.0, %v4169
      %v4171 = vpop.f32.mrb[0].mxu0
      %v4172 = vadd.f32 0.0, %v4171
      %v4173 = vpop.f32.mrb[0].mxu0
      %v4174 = vadd.f32 0.0, %v4173
      %4175 = vmatprep.mubr.bf16.mxu0 0
      %4176 = vmatmul.mubr.bf16.gmra.mrb[0].mxu0 %v4093
      %v4177 = vpop.f32.mrb[0].mxu0
      %v4178 = vadd.f32 0.0, %v4177
      %v4179 = vpop.f32.mrb[0].mxu0
      %v4180 = vadd.f32 0.0, %v4179
      %v4181 = vpop.f32.mrb[0].mxu0
      %v4182 = vadd.f32 0.0, %v4181
      %v4183 = vpop.f32.mrb[0].mxu0
      %v4184 = vadd.f32 0.0, %v4183
      %4185 = vmatprep.mubr.bf16.mxu0 0
      %4186 = vmatmul.mubr.bf16.gmra.mrb[0].mxu0 %v4096
      %v4187 = vpop.f32.mrb[0].mxu0
      %v4188 = vadd.f32 0.0, %v4187
      %v4189 = vpop.f32.mrb[0].mxu0
      %v4190 = vadd.f32 0.0, %v4189
      %v4191 = vpop.f32.mrb[0].mxu0
      %v4192 = vadd.f32 0.0, %v4191
      %v4193 = vpop.f32.mrb[0].mxu0
      %v4194 = vadd.f32 0.0, %v4193
      %4195 = vmatprep.mubr.bf16.mxu0 0
      %4196 = vmatmul.mubr.bf16.gmra.mrb[0].mxu0 %v4099
      %v4197 = vpop.f32.mrb[0].mxu0
      %v4198 = vadd.f32 0.0, %v4197
      %v4199 = vpop.f32.mrb[0].mxu0
      %v4200 = vadd.f32 0.0, %v4199
      %v4201 = vpop.f32.mrb[0].mxu0
      %v4202 = vadd.f32 0.0, %v4201
      %v4203 = vpop.f32.mrb[0].mxu0
      %v4204 = vadd.f32 0.0, %v4203
      %4205 = vmatprep.mubr.bf16.mxu0 0
      %4206 = vmatmul.mubr.bf16.gmra.mrb[0].mxu0 %v4102
      %v4207 = vpop.f32.mrb[0].mxu0
      %v4208 = vadd.f32 0.0, %v4207
      %v4209 = vpop.f32.mrb[0].mxu0
      %v4210 = vadd.f32 0.0, %v4209
      %v4211 = vpop.f32.mrb[0].mxu0
      %v4212 = vadd.f32 0.0, %v4211
      %v4213 = vpop.f32.mrb[0].mxu0
      %v4214 = vadd.f32 0.0, %v4213
      %4215 = vmatprep.mubr.bf16.mxu0 0
      %4216 = vmatmul.mubr.bf16.gmra.mrb[0].mxu0 %v4105
      %v4217 = vpop.f32.mrb[0].mxu0
      %v4218 = vadd.f32 0.0, %v4217
      %v4219 = vpop.f32.mrb[0].mxu0
      %v4220 = vadd.f32 0.0, %v4219
      %v4221 = vpop.f32.mrb[0].mxu0
      %v4222 = vadd.f32 0.0, %v4221
      %v4223 = vpop.f32.mrb[0].mxu0
      %v4224 = vadd.f32 0.0, %v4223
      %4225 = vmatprep.mubr.bf16.mxu0 0
      %4226 = vmatmul.mubr.bf16.gmra.mrb[0].mxu0 %v4108
      %v4227 = vpop.f32.mrb[0].mxu0
      %v4228 = vadd.f32 0.0, %v4227
      %v4229 = vpop.f32.mrb[0].mxu0
      %v4230 = vadd.f32 0.0, %v4229
      %v4231 = vpop.f32.mrb[0].mxu0
      %v4232 = vadd.f32 0.0, %v4231
      %v4233 = vpop.f32.mrb[0].mxu0
      %v4234 = vadd.f32 0.0, %v4233
      %4235 = vmatprep.mubr.bf16.mxu0 0
      %4236 = vmatmul.mubr.bf16.gmra.mrb[0].mxu0 %v4111
      %v4237 = vpop.f32.mrb[0].mxu0
      %v4238 = vadd.f32 0.0, %v4237
      %v4239 = vpop.f32.mrb[0].mxu0
      %v4240 = vadd.f32 0.0, %v4239
      %v4241 = vpop.f32.mrb[0].mxu0
      %v4242 = vadd.f32 0.0, %v4241
      %v4243 = vpop.f32.mrb[0].mxu0
      %v4244 = vadd.f32 0.0, %v4243
      %4245 = vmatprep.mubr.bf16.mxu0 0
      %4246 = vmatmul.mubr.bf16.gmra.mrb[0].mxu0 %v4114
      %v4247 = vpop.f32.mrb[0].mxu0
      %v4248 = vadd.f32 0.0, %v4247
      %v4249 = vpop.f32.mrb[0].mxu0
      %v4250 = vadd.f32 0.0, %v4249
      %v4251 = vpop.f32.mrb[0].mxu0
      %v4252 = vadd.f32 0.0, %v4251
      %v4253 = vpop.f32.mrb[0].mxu0
      %v4254 = vadd.f32 0.0, %v4253
      %4255 = vdwg.mxu0
      %v4267 = vunpack.c.l.b16 %v4007
      %v4268 = vunpack.c.h.b16 %v4007
      %v4269 = vunpack.c.l.b16 %v4008
      %v4270 = vunpack.c.h.b16 %v4008
      %v4271 = vunpack.c.l.b16 %v4009
      %v4272 = vunpack.c.h.b16 %v4009
      %v4273 = vunpack.c.l.b16 %v4010
      %v4274 = vunpack.c.h.b16 %v4010
      %v4275 = vunpack.c.l.b16 %v4011
      %v4276 = vunpack.c.h.b16 %v4011
      %v4277 = vunpack.c.l.b16 %v4012
      %v4278 = vunpack.c.h.b16 %v4012
      %v4279 = vunpack.c.l.b16 %v4013
      %v4280 = vunpack.c.h.b16 %v4013
      %v4281 = vunpack.c.l.b16 %v4014
      %v4282 = vunpack.c.h.b16 %v4014
      %v4283 = vunpack.c.l.b16 %v4015
      %v4284 = vunpack.c.h.b16 %v4015
      %v4285 = vunpack.c.l.b16 %v4016
      %v4286 = vunpack.c.h.b16 %v4016
      %v4287 = vunpack.c.l.b16 %v4017
      %v4288 = vunpack.c.h.b16 %v4017
      %v4289 = vpack.c.b16 %v4269, %v4267
      %v4290 = vpack.c.b16 %v4270, %v4268
      %v4291 = vpack.c.b16 %v4273, %v4271
      %v4292 = vpack.c.b16 %v4274, %v4272
      %v4293 = vpack.c.b16 %v4277, %v4275
      %v4294 = vpack.c.b16 %v4278, %v4276
      %v4295 = vpack.c.b16 %v4281, %v4279
      %v4296 = vpack.c.b16 %v4282, %v4280
      %v4297 = vpack.c.b16 %v4285, %v4283
      %v4298 = vpack.c.b16 %v4286, %v4284
      %v4299 = vpack.c.b16 %v4287, %v4287
      %v4300 = vpack.c.b16 %v4288, %v4288
      %v4312 = vsel %vm4085, %v3993, 0
      %v4315 = vsel %vm4116, %v4299, 0
      %v4318 = vsel %vm4116, %v4300, 0
      %4320 = vmatprep.subr.bf16.mxu0 %v4290
      %4321 = vmatpush1.bf16.msra.mxu0 %v4289
      %4322 = vmatprep.subr.bf16.mxu0 %v4292
      %4323 = vmatpush1.bf16.msra.mxu0 %v4291
      %4324 = vmatprep.subr.bf16.mxu0 %v4294
      %4325 = vmatpush1.bf16.msra.mxu0 %v4293
      %4326 = vmatprep.subr.bf16.mxu0 %v4296
      %4327 = vmatpush1.bf16.msra.mxu0 %v4295
      %4328 = vmatprep.subr.bf16.mxu0 %v4298
      %4329 = vmatpush1.bf16.msra.mxu0 %v4297
      %4330 = vmatprep.subr.bf16.mxu0 %v4318
      %4331 = vmatpush1.bf16.msra.mxu0 %v4315
      %4332 = vmatprep.subr.bf16.mxu0 0
      %4333 = vmatpush1.bf16.msra.mxu0 0
      %4334 = vmatprep.subr.bf16.mxu0 0
      %4335 = vmatpush1.bf16.msra.mxu0 0
      %4336 = vmatprep.subr.bf16.mxu0 0
      %4337 = vmatpush1.bf16.msra.mxu0 0
      %4338 = vmatprep.subr.bf16.mxu0 0
      %4339 = vmatpush1.bf16.msra.mxu0 0
      %4340 = vmatprep.subr.bf16.mxu0 0
      %4341 = vmatpush1.bf16.msra.mxu0 0
      %4342 = vmatprep.subr.bf16.mxu0 0
      %4343 = vmatpush1.bf16.msra.mxu0 0
      %4344 = vmatprep.subr.bf16.mxu0 0
      %4345 = vmatpush1.bf16.msra.mxu0 0
      %4346 = vmatprep.subr.bf16.mxu0 0
      %4347 = vmatpush1.bf16.msra.mxu0 0
      %4348 = vmatprep.subr.bf16.mxu0 0
      %4349 = vmatpush1.bf16.msra.mxu0 0
      %4350 = vmatprep.subr.bf16.mxu0 0
      %4351 = vmatpush1.bf16.msra.mxu0 0
      %4352 = vmatprep.mubr.bf16.mxu0 0
      %4353 = vmatmul.mubr.bf16.gmra.mrb[0].mxu0 %v4312
      %v4354 = vpop.f32.mrb[0].mxu0
      %v4355 = vadd.f32 %v4158, %v4354
      %v4356 = vpop.f32.mrb[0].mxu0
      %v4357 = vadd.f32 %v4160, %v4356
      %v4358 = vpop.f32.mrb[0].mxu0
      %v4359 = vadd.f32 %v4162, %v4358
      %v4360 = vpop.f32.mrb[0].mxu0
      %v4361 = vadd.f32 %v4164, %v4360
      %4362 = vmatprep.mubr.bf16.mxu0 0
      %4363 = vmatmul.mubr.bf16.gmra.mrb[0].mxu0 %v4087
      %v4364 = vpop.f32.mrb[0].mxu0
      %v4365 = vadd.f32 %v4168, %v4364
      %v4366 = vpop.f32.mrb[0].mxu0
      %v4367 = vadd.f32 %v4170, %v4366
      %v4368 = vpop.f32.mrb[0].mxu0
      %v4369 = vadd.f32 %v4172, %v4368
      %v4370 = vpop.f32.mrb[0].mxu0
      %v4371 = vadd.f32 %v4174, %v4370
      %4372 = vmatprep.mubr.bf16.mxu0 0
      %4373 = vmatmul.mubr.bf16.gmra.mrb[0].mxu0 %v4090
      %v4374 = vpop.f32.mrb[0].mxu0
      %v4375 = vadd.f32 %v4178, %v4374
      %v4376 = vpop.f32.mrb[0].mxu0
      %v4377 = vadd.f32 %v4180, %v4376
      %v4378 = vpop.f32.mrb[0].mxu0
      %v4379 = vadd.f32 %v4182, %v4378
      %v4380 = vpop.f32.mrb[0].mxu0
      %v4381 = vadd.f32 %v4184, %v4380
      %4382 = vmatprep.mubr.bf16.mxu0 0
      %4383 = vmatmul.mubr.bf16.gmra.mrb[0].mxu0 %v4093
      %v4384 = vpop.f32.mrb[0].mxu0
      %v4385 = vadd.f32 %v4188, %v4384
      %v4386 = vpop.f32.mrb[0].mxu0
      %v4387 = vadd.f32 %v4190, %v4386
      %v4388 = vpop.f32.mrb[0].mxu0
      %v4389 = vadd.f32 %v4192, %v4388
      %v4390 = vpop.f32.mrb[0].mxu0
      %v4391 = vadd.f32 %v4194, %v4390
      %4392 = vmatprep.mubr.bf16.mxu0 0
      %4393 = vmatmul.mubr.bf16.gmra.mrb[0].mxu0 %v4096
      %v4394 = vpop.f32.mrb[0].mxu0
      %v4395 = vadd.f32 %v4198, %v4394
      %v4396 = vpop.f32.mrb[0].mxu0
      %v4397 = vadd.f32 %v4200, %v4396
      %v4398 = vpop.f32.mrb[0].mxu0
      %v4399 = vadd.f32 %v4202, %v4398
      %v4400 = vpop.f32.mrb[0].mxu0
      %v4401 = vadd.f32 %v4204, %v4400
      %4402 = vmatprep.mubr.bf16.mxu0 0
      %4403 = vmatmul.mubr.bf16.gmra.mrb[0].mxu0 %v4099
      %v4404 = vpop.f32.mrb[0].mxu0
      %v4405 = vadd.f32 %v4208, %v4404
      %v4406 = vpop.f32.mrb[0].mxu0
      %v4407 = vadd.f32 %v4210, %v4406
      %v4408 = vpop.f32.mrb[0].mxu0
      %v4409 = vadd.f32 %v4212, %v4408
      %v4410 = vpop.f32.mrb[0].mxu0
      %v4411 = vadd.f32 %v4214, %v4410
      %4412 = vmatprep.mubr.bf16.mxu0 0
      %4413 = vmatmul.mubr.bf16.gmra.mrb[0].mxu0 %v4102
      %v4414 = vpop.f32.mrb[0].mxu0
      %v4415 = vadd.f32 %v4218, %v4414
      %v4416 = vpop.f32.mrb[0].mxu0
      %v4417 = vadd.f32 %v4220, %v4416
      %v4418 = vpop.f32.mrb[0].mxu0
      %v4419 = vadd.f32 %v4222, %v4418
      %v4420 = vpop.f32.mrb[0].mxu0
      %v4421 = vadd.f32 %v4224, %v4420
      %4422 = vmatprep.mubr.bf16.mxu0 0
      %4423 = vmatmul.mubr.bf16.gmra.mrb[0].mxu0 %v4105
      %v4424 = vpop.f32.mrb[0].mxu0
      %v4425 = vadd.f32 %v4228, %v4424
      %v4426 = vpop.f32.mrb[0].mxu0
      %v4427 = vadd.f32 %v4230, %v4426
      %v4428 = vpop.f32.mrb[0].mxu0
      %v4429 = vadd.f32 %v4232, %v4428
      %v4430 = vpop.f32.mrb[0].mxu0
      %v4431 = vadd.f32 %v4234, %v4430
      %4432 = vmatprep.mubr.bf16.mxu0 0
      %4433 = vmatmul.mubr.bf16.gmra.mrb[0].mxu0 %v4108
      %v4434 = vpop.f32.mrb[0].mxu0
      %v4435 = vadd.f32 %v4238, %v4434
      %v4436 = vpop.f32.mrb[0].mxu0
      %v4437 = vadd.f32 %v4240, %v4436
      %v4438 = vpop.f32.mrb[0].mxu0
      %v4439 = vadd.f32 %v4242, %v4438
      %v4440 = vpop.f32.mrb[0].mxu0
      %v4441 = vadd.f32 %v4244, %v4440
      %4442 = vmatprep.mubr.bf16.mxu0 0
      %4443 = vmatmul.mubr.bf16.gmra.mrb[0].mxu0 %v4111
      %v4444 = vpop.f32.mrb[0].mxu0
      %v4445 = vadd.f32 %v4248, %v4444
      %v4446 = vpop.f32.mrb[0].mxu0
      %v4447 = vadd.f32 %v4250, %v4446
      %v4448 = vpop.f32.mrb[0].mxu0
      %v4449 = vadd.f32 %v4252, %v4448
      %v4450 = vpop.f32.mrb[0].mxu0
      %v4451 = vadd.f32 %v4254, %v4450
      %4452 = vdwg.mxu0
      %s4453 = scalar_lea.vmem %s5, 176
      %v4454 = vld [vmem:[%s4453] sm:$0xff]
      %v4455 = vld [vmem:[%s4453 + $0x8] sm:$0xff]
      %v4456 = vld [vmem:[%s4453 + $0x10] sm:$0xff]
      %v4457 = vld [vmem:[%s4453 + $0x18] sm:$0xff]
      %v4458 = vld [vmem:[%s4453 + $0x20] sm:$0xff]
      %v4459 = vld [vmem:[%s4453 + $0x28] sm:$0xff]
      %v4460 = vld [vmem:[%s4453 + $0x30] sm:$0xff]
      %v4461 = vld [vmem:[%s4453 + $0x38] sm:$0xff]
      %v4462 = vld [vmem:[%s4453 + $0x40] sm:$0xff]
      %v4463 = vld [vmem:[%s4453 + $0x48] sm:$0xff]
      %v4464 = vld [vmem:[%s4453 + $0x50] sm:$0x33]
      %v4476 = vunpack.c.l.b16 %v4454
      %v4477 = vunpack.c.h.b16 %v4454
      %v4478 = vunpack.c.l.b16 %v4455
      %v4479 = vunpack.c.h.b16 %v4455
      %v4480 = vunpack.c.l.b16 %v4456
      %v4481 = vunpack.c.h.b16 %v4456
      %v4482 = vunpack.c.l.b16 %v4457
      %v4483 = vunpack.c.h.b16 %v4457
      %v4484 = vunpack.c.l.b16 %v4458
      %v4485 = vunpack.c.h.b16 %v4458
      %v4486 = vunpack.c.l.b16 %v4459
      %v4487 = vunpack.c.h.b16 %v4459
      %v4488 = vunpack.c.l.b16 %v4460
      %v4489 = vunpack.c.h.b16 %v4460
      %v4490 = vunpack.c.l.b16 %v4461
      %v4491 = vunpack.c.h.b16 %v4461
      %v4492 = vunpack.c.l.b16 %v4462
      %v4493 = vunpack.c.h.b16 %v4462
      %v4494 = vunpack.c.l.b16 %v4463
      %v4495 = vunpack.c.h.b16 %v4463
      %v4496 = vunpack.c.l.b16 %v4464
      %v4497 = vunpack.c.h.b16 %v4464
      %v4498 = vpack.c.b16 %v4478, %v4476
      %v4499 = vpack.c.b16 %v4479, %v4477
      %v4500 = vpack.c.b16 %v4482, %v4480
      %v4501 = vpack.c.b16 %v4483, %v4481
      %v4502 = vpack.c.b16 %v4486, %v4484
      %v4503 = vpack.c.b16 %v4487, %v4485
      %v4504 = vpack.c.b16 %v4490, %v4488
      %v4505 = vpack.c.b16 %v4491, %v4489
      %v4506 = vpack.c.b16 %v4494, %v4492
      %v4507 = vpack.c.b16 %v4495, %v4493
      %v4508 = vpack.c.b16 %v4496, %v4496
      %v4509 = vpack.c.b16 %v4497, %v4497
      %v4521 = vsel %vm4085, %v4004, 0
      %v4524 = vsel %vm4116, %v4508, 0
      %v4527 = vsel %vm4116, %v4509, 0
      %4529 = vmatprep.subr.bf16.mxu0 %v4499
      %4530 = vmatpush1.bf16.msra.mxu0 %v4498
      %4531 = vmatprep.subr.bf16.mxu0 %v4501
      %4532 = vmatpush1.bf16.msra.mxu0 %v4500
      %4533 = vmatprep.subr.bf16.mxu0 %v4503
      %4534 = vmatpush1.bf16.msra.mxu0 %v4502
      %4535 = vmatprep.subr.bf16.mxu0 %v4505
      %4536 = vmatpush1.bf16.msra.mxu0 %v4504
      %4537 = vmatprep.subr.bf16.mxu0 %v4507
      %4538 = vmatpush1.bf16.msra.mxu0 %v4506
      %4539 = vmatprep.subr.bf16.mxu0 %v4527
      %4540 = vmatpush1.bf16.msra.mxu0 %v4524
      %4541 = vmatprep.subr.bf16.mxu0 0
      %4542 = vmatpush1.bf16.msra.mxu0 0
      %4543 = vmatprep.subr.bf16.mxu0 0
      %4544 = vmatpush1.bf16.msra.mxu0 0
      %4545 = vmatprep.subr.bf16.mxu0 0
      %4546 = vmatpush1.bf16.msra.mxu0 0
      %4547 = vmatprep.subr.bf16.mxu0 0
      %4548 = vmatpush1.bf16.msra.mxu0 0
      %4549 = vmatprep.subr.bf16.mxu0 0
      %4550 = vmatpush1.bf16.msra.mxu0 0
      %4551 = vmatprep.subr.bf16.mxu0 0
      %4552 = vmatpush1.bf16.msra.mxu0 0
      %4553 = vmatprep.subr.bf16.mxu0 0
      %4554 = vmatpush1.bf16.msra.mxu0 0
      %4555 = vmatprep.subr.bf16.mxu0 0
      %4556 = vmatpush1.bf16.msra.mxu0 0
      %4557 = vmatprep.subr.bf16.mxu0 0
      %4558 = vmatpush1.bf16.msra.mxu0 0
      %4559 = vmatprep.subr.bf16.mxu0 0
      %4560 = vmatpush1.bf16.msra.mxu0 0
      %4561 = vmatprep.mubr.bf16.mxu0 0
      %4562 = vmatmul.mubr.bf16.gmra.mrb[0].mxu0 %v4090
      %v4563 = vpop.f32.mrb[0].mxu0
      %v4564 = vadd.f32 0.0, %v4563
      %v4565 = vpop.f32.mrb[0].mxu0
      %v4566 = vadd.f32 0.0, %v4565
      %v4567 = vpop.f32.mrb[0].mxu0
      %v4568 = vadd.f32 0.0, %v4567
      %v4569 = vpop.f32.mrb[0].mxu0
      %v4570 = vadd.f32 0.0, %v4569
      %4571 = vmatprep.mubr.bf16.mxu0 0
      %4572 = vmatmul.mubr.bf16.gmra.mrb[0].mxu0 %v4093
      %v4573 = vpop.f32.mrb[0].mxu0
      %v4574 = vadd.f32 0.0, %v4573
      %v4575 = vpop.f32.mrb[0].mxu0
      %v4576 = vadd.f32 0.0, %v4575
      %v4577 = vpop.f32.mrb[0].mxu0
      %v4578 = vadd.f32 0.0, %v4577
      %v4579 = vpop.f32.mrb[0].mxu0
      %v4580 = vadd.f32 0.0, %v4579
      %4581 = vmatprep.mubr.bf16.mxu0 0
      %4582 = vmatmul.mubr.bf16.gmra.mrb[0].mxu0 %v4096
      %v4583 = vpop.f32.mrb[0].mxu0
      %v4584 = vadd.f32 0.0, %v4583
      %v4585 = vpop.f32.mrb[0].mxu0
      %v4586 = vadd.f32 0.0, %v4585
      %v4587 = vpop.f32.mrb[0].mxu0
      %v4588 = vadd.f32 0.0, %v4587
      %v4589 = vpop.f32.mrb[0].mxu0
      %v4590 = vadd.f32 0.0, %v4589
      %4591 = vmatprep.mubr.bf16.mxu0 0
      %4592 = vmatmul.mubr.bf16.gmra.mrb[0].mxu0 %v4099
      %v4593 = vpop.f32.mrb[0].mxu0
      %v4594 = vadd.f32 0.0, %v4593
      %v4595 = vpop.f32.mrb[0].mxu0
      %v4596 = vadd.f32 0.0, %v4595
      %v4597 = vpop.f32.mrb[0].mxu0
      %v4598 = vadd.f32 0.0, %v4597
      %v4599 = vpop.f32.mrb[0].mxu0
      %v4600 = vadd.f32 0.0, %v4599
      %4601 = vmatprep.mubr.bf16.mxu0 0
      %4602 = vmatmul.mubr.bf16.gmra.mrb[0].mxu0 %v4102
      %v4603 = vpop.f32.mrb[0].mxu0
      %v4604 = vadd.f32 0.0, %v4603
      %v4605 = vpop.f32.mrb[0].mxu0
      %v4606 = vadd.f32 0.0, %v4605
      %v4607 = vpop.f32.mrb[0].mxu0
      %v4608 = vadd.f32 0.0, %v4607
      %v4609 = vpop.f32.mrb[0].mxu0
      %v4610 = vadd.f32 0.0, %v4609
      %4611 = vmatprep.mubr.bf16.mxu0 0
      %4612 = vmatmul.mubr.bf16.gmra.mrb[0].mxu0 %v4105
      %v4613 = vpop.f32.mrb[0].mxu0
      %v4614 = vadd.f32 0.0, %v4613
      %v4615 = vpop.f32.mrb[0].mxu0
      %v4616 = vadd.f32 0.0, %v4615
      %v4617 = vpop.f32.mrb[0].mxu0
      %v4618 = vadd.f32 0.0, %v4617
      %v4619 = vpop.f32.mrb[0].mxu0
      %v4620 = vadd.f32 0.0, %v4619
      %4621 = vmatprep.mubr.bf16.mxu0 0
      %4622 = vmatmul.mubr.bf16.gmra.mrb[0].mxu0 %v4108
      %v4623 = vpop.f32.mrb[0].mxu0
      %v4624 = vadd.f32 0.0, %v4623
      %v4625 = vpop.f32.mrb[0].mxu0
      %v4626 = vadd.f32 0.0, %v4625
      %v4627 = vpop.f32.mrb[0].mxu0
      %v4628 = vadd.f32 0.0, %v4627
      %v4629 = vpop.f32.mrb[0].mxu0
      %v4630 = vadd.f32 0.0, %v4629
      %4631 = vmatprep.mubr.bf16.mxu0 0
      %4632 = vmatmul.mubr.bf16.gmra.mrb[0].mxu0 %v4111
      %v4633 = vpop.f32.mrb[0].mxu0
      %v4634 = vadd.f32 0.0, %v4633
      %v4635 = vpop.f32.mrb[0].mxu0
      %v4636 = vadd.f32 0.0, %v4635
      %v4637 = vpop.f32.mrb[0].mxu0
      %v4638 = vadd.f32 0.0, %v4637
      %v4639 = vpop.f32.mrb[0].mxu0
      %v4640 = vadd.f32 0.0, %v4639
      %4641 = vmatprep.mubr.bf16.mxu0 0
      %4642 = vmatmul.mubr.bf16.gmra.mrb[0].mxu0 %v4114
      %v4643 = vpop.f32.mrb[0].mxu0
      %v4644 = vadd.f32 0.0, %v4643
      %v4645 = vpop.f32.mrb[0].mxu0
      %v4646 = vadd.f32 0.0, %v4645
      %v4647 = vpop.f32.mrb[0].mxu0
      %v4648 = vadd.f32 0.0, %v4647
      %v4649 = vpop.f32.mrb[0].mxu0
      %v4650 = vadd.f32 0.0, %v4649
      %4651 = vmatprep.mubr.bf16.mxu0 0
      %4652 = vmatmul.mubr.bf16.gmra.mrb[0].mxu0 %v4521
      %v4653 = vpop.f32.mrb[0].mxu0
      %v4654 = vadd.f32 0.0, %v4653
      %v4655 = vpop.f32.mrb[0].mxu0
      %v4656 = vadd.f32 0.0, %v4655
      %v4657 = vpop.f32.mrb[0].mxu0
      %v4658 = vadd.f32 0.0, %v4657
      %v4659 = vpop.f32.mrb[0].mxu0
      %v4660 = vadd.f32 0.0, %v4659
      %4661 = vdwg.mxu0
      %v4662 = vadd.f32 %v4355, %v4564
      %v4663 = vadd.f32 %v4357, %v4566
      %v4664 = vadd.f32 %v4359, %v4568
      %v4665 = vadd.f32 %v4361, %v4570
      %v4666 = vadd.f32 %v4365, %v4574
      %v4667 = vadd.f32 %v4367, %v4576
      %v4668 = vadd.f32 %v4369, %v4578
      %v4669 = vadd.f32 %v4371, %v4580
      %v4670 = vadd.f32 %v4375, %v4584
      %v4671 = vadd.f32 %v4377, %v4586
      %v4672 = vadd.f32 %v4379, %v4588
      %v4673 = vadd.f32 %v4381, %v4590
      %v4674 = vadd.f32 %v4385, %v4594
      %v4675 = vadd.f32 %v4387, %v4596
      %v4676 = vadd.f32 %v4389, %v4598
      %v4677 = vadd.f32 %v4391, %v4600
      %v4678 = vadd.f32 %v4395, %v4604
      %v4679 = vadd.f32 %v4397, %v4606
      %v4680 = vadd.f32 %v4399, %v4608
      %v4681 = vadd.f32 %v4401, %v4610
      %v4682 = vadd.f32 %v4405, %v4614
      %v4683 = vadd.f32 %v4407, %v4616
      %v4684 = vadd.f32 %v4409, %v4618
      %v4685 = vadd.f32 %v4411, %v4620
      %v4686 = vadd.f32 %v4415, %v4624
      %v4687 = vadd.f32 %v4417, %v4626
      %v4688 = vadd.f32 %v4419, %v4628
      %v4689 = vadd.f32 %v4421, %v4630
      %v4690 = vadd.f32 %v4425, %v4634
      %v4691 = vadd.f32 %v4427, %v4636
      %v4692 = vadd.f32 %v4429, %v4638
      %v4693 = vadd.f32 %v4431, %v4640
      %v4694 = vadd.f32 %v4435, %v4644
      %v4695 = vadd.f32 %v4437, %v4646
      %v4696 = vadd.f32 %v4439, %v4648
      %v4697 = vadd.f32 %v4441, %v4650
      %v4698 = vadd.f32 %v4445, %v4654
      %v4699 = vadd.f32 %v4447, %v4656
      %v4700 = vadd.f32 %v4449, %v4658
      %v4701 = vadd.f32 %v4451, %v4660
      %s4702 = scalar_lea.vmem %s5, 264
      %v4703 = vld [vmem:[%s4702] sm:$0xff]
      %v4704 = vld [vmem:[%s4702 + $0x8] sm:$0xff]
      %v4705 = vld [vmem:[%s4702 + $0x10] sm:$0xff]
      %v4706 = vld [vmem:[%s4702 + $0x18] sm:$0xff]
      %v4707 = vld [vmem:[%s4702 + $0x20] sm:$0xff]
      %v4708 = vld [vmem:[%s4702 + $0x28] sm:$0xff]
      %v4709 = vld [vmem:[%s4702 + $0x30] sm:$0xff]
      %v4710 = vld [vmem:[%s4702 + $0x38] sm:$0xff]
      %v4711 = vld [vmem:[%s4702 + $0x40] sm:$0xff]
      %v4712 = vld [vmem:[%s4702 + $0x48] sm:$0xff]
      %v4713 = vld [vmem:[%s4702 + $0x50] sm:$0x33]
      %v4725 = vunpack.c.l.b16 %v4703
      %v4726 = vunpack.c.h.b16 %v4703
      %v4727 = vunpack.c.l.b16 %v4704
      %v4728 = vunpack.c.h.b16 %v4704
      %v4729 = vunpack.c.l.b16 %v4705
      %v4730 = vunpack.c.h.b16 %v4705
      %v4731 = vunpack.c.l.b16 %v4706
      %v4732 = vunpack.c.h.b16 %v4706
      %v4733 = vunpack.c.l.b16 %v4707
      %v4734 = vunpack.c.h.b16 %v4707
      %v4735 = vunpack.c.l.b16 %v4708
      %v4736 = vunpack.c.h.b16 %v4708
      %v4737 = vunpack.c.l.b16 %v4709
      %v4738 = vunpack.c.h.b16 %v4709
      %v4739 = vunpack.c.l.b16 %v4710
      %v4740 = vunpack.c.h.b16 %v4710
      %v4741 = vunpack.c.l.b16 %v4711
      %v4742 = vunpack.c.h.b16 %v4711
      %v4743 = vunpack.c.l.b16 %v4712
      %v4744 = vunpack.c.h.b16 %v4712
      %v4745 = vunpack.c.l.b16 %v4713
      %v4746 = vunpack.c.h.b16 %v4713
      %v4747 = vpack.c.b16 %v4727, %v4725
      %v4748 = vpack.c.b16 %v4728, %v4726
      %v4749 = vpack.c.b16 %v4731, %v4729
      %v4750 = vpack.c.b16 %v4732, %v4730
      %v4751 = vpack.c.b16 %v4735, %v4733
      %v4752 = vpack.c.b16 %v4736, %v4734
      %v4753 = vpack.c.b16 %v4739, %v4737
      %v4754 = vpack.c.b16 %v4740, %v4738
      %v4755 = vpack.c.b16 %v4743, %v4741
      %v4756 = vpack.c.b16 %v4744, %v4742
      %v4757 = vpack.c.b16 %v4745, %v4745
      %v4758 = vpack.c.b16 %v4746, %v4746
      %v4770 = vsel %vm4085, %v4005, 0
      %v4773 = vsel %vm4116, %v4757, 0
      %v4776 = vsel %vm4116, %v4758, 0
      %4778 = vmatprep.subr.bf16.mxu0 %v4748
      %4779 = vmatpush1.bf16.msra.mxu0 %v4747
      %4780 = vmatprep.subr.bf16.mxu0 %v4750
      %4781 = vmatpush1.bf16.msra.mxu0 %v4749
      %4782 = vmatprep.subr.bf16.mxu0 %v4752
      %4783 = vmatpush1.bf16.msra.mxu0 %v4751
      %4784 = vmatprep.subr.bf16.mxu0 %v4754
      %4785 = vmatpush1.bf16.msra.mxu0 %v4753
      %4786 = vmatprep.subr.bf16.mxu0 %v4756
      %4787 = vmatpush1.bf16.msra.mxu0 %v4755
      %4788 = vmatprep.subr.bf16.mxu0 %v4776
      %4789 = vmatpush1.bf16.msra.mxu0 %v4773
      %4790 = vmatprep.subr.bf16.mxu0 0
      %4791 = vmatpush1.bf16.msra.mxu0 0
      %4792 = vmatprep.subr.bf16.mxu0 0
      %4793 = vmatpush1.bf16.msra.mxu0 0
      %4794 = vmatprep.subr.bf16.mxu0 0
      %4795 = vmatpush1.bf16.msra.mxu0 0
      %4796 = vmatprep.subr.bf16.mxu0 0
      %4797 = vmatpush1.bf16.msra.mxu0 0
      %4798 = vmatprep.subr.bf16.mxu0 0
      %4799 = vmatpush1.bf16.msra.mxu0 0
      %4800 = vmatprep.subr.bf16.mxu0 0
      %4801 = vmatpush1.bf16.msra.mxu0 0
      %4802 = vmatprep.subr.bf16.mxu0 0
      %4803 = vmatpush1.bf16.msra.mxu0 0
      %4804 = vmatprep.subr.bf16.mxu0 0
      %4805 = vmatpush1.bf16.msra.mxu0 0
      %4806 = vmatprep.subr.bf16.mxu0 0
      %4807 = vmatpush1.bf16.msra.mxu0 0
      %4808 = vmatprep.subr.bf16.mxu0 0
      %4809 = vmatpush1.bf16.msra.mxu0 0
      %4810 = vmatprep.mubr.bf16.mxu0 0
      %4811 = vmatmul.mubr.bf16.gmra.mrb[0].mxu0 %v4093
      %v4812 = vpop.f32.mrb[0].mxu0
      %v4813 = vadd.f32 0.0, %v4812
      %v4814 = vpop.f32.mrb[0].mxu0
      %v4815 = vadd.f32 0.0, %v4814
      %v4816 = vpop.f32.mrb[0].mxu0
      %v4817 = vadd.f32 0.0, %v4816
      %v4818 = vpop.f32.mrb[0].mxu0
      %v4819 = vadd.f32 0.0, %v4818
      %4820 = vmatprep.mubr.bf16.mxu0 0
      %4821 = vmatmul.mubr.bf16.gmra.mrb[0].mxu0 %v4096
      %v4822 = vpop.f32.mrb[0].mxu0
      %v4823 = vadd.f32 0.0, %v4822
      %v4824 = vpop.f32.mrb[0].mxu0
      %v4825 = vadd.f32 0.0, %v4824
      %v4826 = vpop.f32.mrb[0].mxu0
      %v4827 = vadd.f32 0.0, %v4826
      %v4828 = vpop.f32.mrb[0].mxu0
      %v4829 = vadd.f32 0.0, %v4828
      %4830 = vmatprep.mubr.bf16.mxu0 0
      %4831 = vmatmul.mubr.bf16.gmra.mrb[0].mxu0 %v4099
      %v4832 = vpop.f32.mrb[0].mxu0
      %v4833 = vadd.f32 0.0, %v4832
      %v4834 = vpop.f32.mrb[0].mxu0
      %v4835 = vadd.f32 0.0, %v4834
      %v4836 = vpop.f32.mrb[0].mxu0
      %v4837 = vadd.f32 0.0, %v4836
      %v4838 = vpop.f32.mrb[0].mxu0
      %v4839 = vadd.f32 0.0, %v4838
      %4840 = vmatprep.mubr.bf16.mxu0 0
      %4841 = vmatmul.mubr.bf16.gmra.mrb[0].mxu0 %v4102
      %v4842 = vpop.f32.mrb[0].mxu0
      %v4843 = vadd.f32 0.0, %v4842
      %v4844 = vpop.f32.mrb[0].mxu0
      %v4845 = vadd.f32 0.0, %v4844
      %v4846 = vpop.f32.mrb[0].mxu0
      %v4847 = vadd.f32 0.0, %v4846
      %v4848 = vpop.f32.mrb[0].mxu0
      %v4849 = vadd.f32 0.0, %v4848
      %4850 = vmatprep.mubr.bf16.mxu0 0
      %4851 = vmatmul.mubr.bf16.gmra.mrb[0].mxu0 %v4105
      %v4852 = vpop.f32.mrb[0].mxu0
      %v4853 = vadd.f32 0.0, %v4852
      %v4854 = vpop.f32.mrb[0].mxu0
      %v4855 = vadd.f32 0.0, %v4854
      %v4856 = vpop.f32.mrb[0].mxu0
      %v4857 = vadd.f32 0.0, %v4856
      %v4858 = vpop.f32.mrb[0].mxu0
      %v4859 = vadd.f32 0.0, %v4858
      %4860 = vmatprep.mubr.bf16.mxu0 0
      %4861 = vmatmul.mubr.bf16.gmra.mrb[0].mxu0 %v4108
      %v4862 = vpop.f32.mrb[0].mxu0
      %v4863 = vadd.f32 0.0, %v4862
      %v4864 = vpop.f32.mrb[0].mxu0
      %v4865 = vadd.f32 0.0, %v4864
      %v4866 = vpop.f32.mrb[0].mxu0
      %v4867 = vadd.f32 0.0, %v4866
      %v4868 = vpop.f32.mrb[0].mxu0
      %v4869 = vadd.f32 0.0, %v4868
      %4870 = vmatprep.mubr.bf16.mxu0 0
      %4871 = vmatmul.mubr.bf16.gmra.mrb[0].mxu0 %v4111
      %v4872 = vpop.f32.mrb[0].mxu0
      %v4873 = vadd.f32 0.0, %v4872
      %v4874 = vpop.f32.mrb[0].mxu0
      %v4875 = vadd.f32 0.0, %v4874
      %v4876 = vpop.f32.mrb[0].mxu0
      %v4877 = vadd.f32 0.0, %v4876
      %v4878 = vpop.f32.mrb[0].mxu0
      %v4879 = vadd.f32 0.0, %v4878
      %4880 = vmatprep.mubr.bf16.mxu0 0
      %4881 = vmatmul.mubr.bf16.gmra.mrb[0].mxu0 %v4114
      %v4882 = vpop.f32.mrb[0].mxu0
      %v4883 = vadd.f32 0.0, %v4882
      %v4884 = vpop.f32.mrb[0].mxu0
      %v4885 = vadd.f32 0.0, %v4884
      %v4886 = vpop.f32.mrb[0].mxu0
      %v4887 = vadd.f32 0.0, %v4886
      %v4888 = vpop.f32.mrb[0].mxu0
      %v4889 = vadd.f32 0.0, %v4888
      %4890 = vmatprep.mubr.bf16.mxu0 0
      %4891 = vmatmul.mubr.bf16.gmra.mrb[0].mxu0 %v4521
      %v4892 = vpop.f32.mrb[0].mxu0
      %v4893 = vadd.f32 0.0, %v4892
      %v4894 = vpop.f32.mrb[0].mxu0
      %v4895 = vadd.f32 0.0, %v4894
      %v4896 = vpop.f32.mrb[0].mxu0
      %v4897 = vadd.f32 0.0, %v4896
      %v4898 = vpop.f32.mrb[0].mxu0
      %v4899 = vadd.f32 0.0, %v4898
      %4900 = vmatprep.mubr.bf16.mxu0 0
      %4901 = vmatmul.mubr.bf16.gmra.mrb[0].mxu0 %v4770
      %v4902 = vpop.f32.mrb[0].mxu0
      %v4903 = vadd.f32 0.0, %v4902
      %v4904 = vpop.f32.mrb[0].mxu0
      %v4905 = vadd.f32 0.0, %v4904
      %v4906 = vpop.f32.mrb[0].mxu0
      %v4907 = vadd.f32 0.0, %v4906
      %v4908 = vpop.f32.mrb[0].mxu0
      %v4909 = vadd.f32 0.0, %v4908
      %4910 = vdwg.mxu0
      %v4911 = vadd.f32 %v4662, %v4813
      %v4912 = vadd.f32 %v4663, %v4815
      %v4913 = vadd.f32 %v4664, %v4817
      %v4914 = vadd.f32 %v4665, %v4819
      %v4915 = vadd.f32 %v4666, %v4823
      %v4916 = vadd.f32 %v4667, %v4825
      %v4917 = vadd.f32 %v4668, %v4827
      %v4918 = vadd.f32 %v4669, %v4829
      %v4919 = vadd.f32 %v4670, %v4833
      %v4920 = vadd.f32 %v4671, %v4835
      %v4921 = vadd.f32 %v4672, %v4837
      %v4922 = vadd.f32 %v4673, %v4839
      %v4923 = vadd.f32 %v4674, %v4843
      %v4924 = vadd.f32 %v4675, %v4845
      %v4925 = vadd.f32 %v4676, %v4847
      %v4926 = vadd.f32 %v4677, %v4849
      %v4927 = vadd.f32 %v4678, %v4853
      %v4928 = vadd.f32 %v4679, %v4855
      %v4929 = vadd.f32 %v4680, %v4857
      %v4930 = vadd.f32 %v4681, %v4859
      %v4931 = vadd.f32 %v4682, %v4863
      %v4932 = vadd.f32 %v4683, %v4865
      %v4933 = vadd.f32 %v4684, %v4867
      %v4934 = vadd.f32 %v4685, %v4869
      %v4935 = vadd.f32 %v4686, %v4873
      %v4936 = vadd.f32 %v4687, %v4875
      %v4937 = vadd.f32 %v4688, %v4877
      %v4938 = vadd.f32 %v4689, %v4879
      %v4939 = vadd.f32 %v4690, %v4883
      %v4940 = vadd.f32 %v4691, %v4885
      %v4941 = vadd.f32 %v4692, %v4887
      %v4942 = vadd.f32 %v4693, %v4889
      %v4943 = vadd.f32 %v4694, %v4893
      %v4944 = vadd.f32 %v4695, %v4895
      %v4945 = vadd.f32 %v4696, %v4897
      %v4946 = vadd.f32 %v4697, %v4899
      %v4947 = vadd.f32 %v4698, %v4903
      %v4948 = vadd.f32 %v4699, %v4905
      %v4949 = vadd.f32 %v4700, %v4907
      %v4950 = vadd.f32 %v4701, %v4909
      %s4951 = scalar_lea.vmem %s5, 352
      %v4952 = vld [vmem:[%s4951] sm:$0xff]
      %v4953 = vld [vmem:[%s4951 + $0x8] sm:$0xff]
      %v4954 = vld [vmem:[%s4951 + $0x10] sm:$0xff]
      %v4955 = vld [vmem:[%s4951 + $0x18] sm:$0xff]
      %v4956 = vld [vmem:[%s4951 + $0x20] sm:$0xff]
      %v4957 = vld [vmem:[%s4951 + $0x28] sm:$0xff]
      %v4958 = vld [vmem:[%s4951 + $0x30] sm:$0xff]
      %v4959 = vld [vmem:[%s4951 + $0x38] sm:$0xff]
      %v4960 = vld [vmem:[%s4951 + $0x40] sm:$0xff]
      %v4961 = vld [vmem:[%s4951 + $0x48] sm:$0xff]
      %v4962 = vld [vmem:[%s4951 + $0x50] sm:$0x33]
      %v4974 = vunpack.c.l.b16 %v4952
      %v4975 = vunpack.c.h.b16 %v4952
      %v4976 = vunpack.c.l.b16 %v4953
      %v4977 = vunpack.c.h.b16 %v4953
      %v4978 = vunpack.c.l.b16 %v4954
      %v4979 = vunpack.c.h.b16 %v4954
      %v4980 = vunpack.c.l.b16 %v4955
      %v4981 = vunpack.c.h.b16 %v4955
      %v4982 = vunpack.c.l.b16 %v4956
      %v4983 = vunpack.c.h.b16 %v4956
      %v4984 = vunpack.c.l.b16 %v4957
      %v4985 = vunpack.c.h.b16 %v4957
      %v4986 = vunpack.c.l.b16 %v4958
      %v4987 = vunpack.c.h.b16 %v4958
      %v4988 = vunpack.c.l.b16 %v4959
      %v4989 = vunpack.c.h.b16 %v4959
      %v4990 = vunpack.c.l.b16 %v4960
      %v4991 = vunpack.c.h.b16 %v4960
      %v4992 = vunpack.c.l.b16 %v4961
      %v4993 = vunpack.c.h.b16 %v4961
      %v4994 = vunpack.c.l.b16 %v4962
      %v4995 = vunpack.c.h.b16 %v4962
      %v4996 = vpack.c.b16 %v4976, %v4974
      %v4997 = vpack.c.b16 %v4977, %v4975
      %v4998 = vpack.c.b16 %v4980, %v4978
      %v4999 = vpack.c.b16 %v4981, %v4979
      %v5000 = vpack.c.b16 %v4984, %v4982
      %v5001 = vpack.c.b16 %v4985, %v4983
      %v5002 = vpack.c.b16 %v4988, %v4986
      %v5003 = vpack.c.b16 %v4989, %v4987
      %v5004 = vpack.c.b16 %v4992, %v4990
      %v5005 = vpack.c.b16 %v4993, %v4991
      %v5006 = vpack.c.b16 %v4994, %v4994
      %v5007 = vpack.c.b16 %v4995, %v4995
      %v5019 = vsel %vm4085, %v4006, 0
      %v5022 = vsel %vm4116, %v5006, 0
      %v5025 = vsel %vm4116, %v5007, 0
      %5027 = vmatprep.subr.bf16.mxu0 %v4997
      %5028 = vmatpush1.bf16.msra.mxu0 %v4996
      %5029 = vmatprep.subr.bf16.mxu0 %v4999
      %5030 = vmatpush1.bf16.msra.mxu0 %v4998
      %5031 = vmatprep.subr.bf16.mxu0 %v5001
      %5032 = vmatpush1.bf16.msra.mxu0 %v5000
      %5033 = vmatprep.subr.bf16.mxu0 %v5003
      %5034 = vmatpush1.bf16.msra.mxu0 %v5002
      %5035 = vmatprep.subr.bf16.mxu0 %v5005
      %5036 = vmatpush1.bf16.msra.mxu0 %v5004
      %5037 = vmatprep.subr.bf16.mxu0 %v5025
      %5038 = vmatpush1.bf16.msra.mxu0 %v5022
      %5039 = vmatprep.subr.bf16.mxu0 0
      %5040 = vmatpush1.bf16.msra.mxu0 0
      %5041 = vmatprep.subr.bf16.mxu0 0
      %5042 = vmatpush1.bf16.msra.mxu0 0
      %5043 = vmatprep.subr.bf16.mxu0 0
      %5044 = vmatpush1.bf16.msra.mxu0 0
      %5045 = vmatprep.subr.bf16.mxu0 0
      %5046 = vmatpush1.bf16.msra.mxu0 0
      %5047 = vmatprep.subr.bf16.mxu0 0
      %5048 = vmatpush1.bf16.msra.mxu0 0
      %5049 = vmatprep.subr.bf16.mxu0 0
      %5050 = vmatpush1.bf16.msra.mxu0 0
      %5051 = vmatprep.subr.bf16.mxu0 0
      %5052 = vmatpush1.bf16.msra.mxu0 0
      %5053 = vmatprep.subr.bf16.mxu0 0
      %5054 = vmatpush1.bf16.msra.mxu0 0
      %5055 = vmatprep.subr.bf16.mxu0 0
      %5056 = vmatpush1.bf16.msra.mxu0 0
      %5057 = vmatprep.subr.bf16.mxu0 0
      %5058 = vmatpush1.bf16.msra.mxu0 0
      %5059 = vmatprep.mubr.bf16.mxu0 0
      %5060 = vmatmul.mubr.bf16.gmra.mrb[0].mxu0 %v4096
      %v5061 = vpop.f32.mrb[0].mxu0
      %v5062 = vadd.f32 0.0, %v5061
      %v5063 = vpop.f32.mrb[0].mxu0
      %v5064 = vadd.f32 0.0, %v5063
      %v5065 = vpop.f32.mrb[0].mxu0
      %v5066 = vadd.f32 0.0, %v5065
      %v5067 = vpop.f32.mrb[0].mxu0
      %v5068 = vadd.f32 0.0, %v5067
      %5069 = vmatprep.mubr.bf16.mxu0 0
      %5070 = vmatmul.mubr.bf16.gmra.mrb[0].mxu0 %v4099
      %v5071 = vpop.f32.mrb[0].mxu0
      %v5072 = vadd.f32 0.0, %v5071
      %v5073 = vpop.f32.mrb[0].mxu0
      %v5074 = vadd.f32 0.0, %v5073
      %v5075 = vpop.f32.mrb[0].mxu0
      %v5076 = vadd.f32 0.0, %v5075
      %v5077 = vpop.f32.mrb[0].mxu0
      %v5078 = vadd.f32 0.0, %v5077
      %5079 = vmatprep.mubr.bf16.mxu0 0
      %5080 = vmatmul.mubr.bf16.gmra.mrb[0].mxu0 %v4102
      %v5081 = vpop.f32.mrb[0].mxu0
      %v5082 = vadd.f32 0.0, %v5081
      %v5083 = vpop.f32.mrb[0].mxu0
      %v5084 = vadd.f32 0.0, %v5083
      %v5085 = vpop.f32.mrb[0].mxu0
      %v5086 = vadd.f32 0.0, %v5085
      %v5087 = vpop.f32.mrb[0].mxu0
      %v5088 = vadd.f32 0.0, %v5087
      %5089 = vmatprep.mubr.bf16.mxu0 0
      %5090 = vmatmul.mubr.bf16.gmra.mrb[0].mxu0 %v4105
      %v5091 = vpop.f32.mrb[0].mxu0
      %v5092 = vadd.f32 0.0, %v5091
      %v5093 = vpop.f32.mrb[0].mxu0
      %v5094 = vadd.f32 0.0, %v5093
      %v5095 = vpop.f32.mrb[0].mxu0
      %v5096 = vadd.f32 0.0, %v5095
      %v5097 = vpop.f32.mrb[0].mxu0
      %v5098 = vadd.f32 0.0, %v5097
      %5099 = vmatprep.mubr.bf16.mxu0 0
      %5100 = vmatmul.mubr.bf16.gmra.mrb[0].mxu0 %v4108
      %v5101 = vpop.f32.mrb[0].mxu0
      %v5102 = vadd.f32 0.0, %v5101
      %v5103 = vpop.f32.mrb[0].mxu0
      %v5104 = vadd.f32 0.0, %v5103
      %v5105 = vpop.f32.mrb[0].mxu0
      %v5106 = vadd.f32 0.0, %v5105
      %v5107 = vpop.f32.mrb[0].mxu0
      %v5108 = vadd.f32 0.0, %v5107
      %5109 = vmatprep.mubr.bf16.mxu0 0
      %5110 = vmatmul.mubr.bf16.gmra.mrb[0].mxu0 %v4111
      %v5111 = vpop.f32.mrb[0].mxu0
      %v5112 = vadd.f32 0.0, %v5111
      %v5113 = vpop.f32.mrb[0].mxu0
      %v5114 = vadd.f32 0.0, %v5113
      %v5115 = vpop.f32.mrb[0].mxu0
      %v5116 = vadd.f32 0.0, %v5115
      %v5117 = vpop.f32.mrb[0].mxu0
      %v5118 = vadd.f32 0.0, %v5117
      %5119 = vmatprep.mubr.bf16.mxu0 0
      %5120 = vmatmul.mubr.bf16.gmra.mrb[0].mxu0 %v4114
      %v5121 = vpop.f32.mrb[0].mxu0
      %v5122 = vadd.f32 0.0, %v5121
      %v5123 = vpop.f32.mrb[0].mxu0
      %v5124 = vadd.f32 0.0, %v5123
      %v5125 = vpop.f32.mrb[0].mxu0
      %v5126 = vadd.f32 0.0, %v5125
      %v5127 = vpop.f32.mrb[0].mxu0
      %v5128 = vadd.f32 0.0, %v5127
      %5129 = vmatprep.mubr.bf16.mxu0 0
      %5130 = vmatmul.mubr.bf16.gmra.mrb[0].mxu0 %v4521
      %v5131 = vpop.f32.mrb[0].mxu0
      %v5132 = vadd.f32 0.0, %v5131
      %v5133 = vpop.f32.mrb[0].mxu0
      %v5134 = vadd.f32 0.0, %v5133
      %v5135 = vpop.f32.mrb[0].mxu0
      %v5136 = vadd.f32 0.0, %v5135
      %v5137 = vpop.f32.mrb[0].mxu0
      %v5138 = vadd.f32 0.0, %v5137
      %5139 = vmatprep.mubr.bf16.mxu0 0
      %5140 = vmatmul.mubr.bf16.gmra.mrb[0].mxu0 %v4770
      %v5141 = vpop.f32.mrb[0].mxu0
      %v5142 = vadd.f32 0.0, %v5141
      %v5143 = vpop.f32.mrb[0].mxu0
      %v5144 = vadd.f32 0.0, %v5143
      %v5145 = vpop.f32.mrb[0].mxu0
      %v5146 = vadd.f32 0.0, %v5145
      %v5147 = vpop.f32.mrb[0].mxu0
      %v5148 = vadd.f32 0.0, %v5147
      %5149 = vmatprep.mubr.bf16.mxu0 0
      %5150 = vmatmul.mubr.bf16.gmra.mrb[0].mxu0 %v5019
      %v5151 = vpop.f32.mrb[0].mxu0
      %v5152 = vadd.f32 0.0, %v5151
      %v5153 = vpop.f32.mrb[0].mxu0
      %v5154 = vadd.f32 0.0, %v5153
      %v5155 = vpop.f32.mrb[0].mxu0
      %v5156 = vadd.f32 0.0, %v5155
      %v5157 = vpop.f32.mrb[0].mxu0
      %v5158 = vadd.f32 0.0, %v5157
      %5159 = vdwg.mxu0
      %v5160 = vadd.f32 %v4911, %v5062
      %v5161 = vadd.f32 %v4912, %v5064
      %v5162 = vadd.f32 %v4913, %v5066
      %v5163 = vadd.f32 %v4914, %v5068
      %v5164 = vadd.f32 %v4915, %v5072
      %v5165 = vadd.f32 %v4916, %v5074
      %v5166 = vadd.f32 %v4917, %v5076
      %v5167 = vadd.f32 %v4918, %v5078
      %v5168 = vadd.f32 %v4919, %v5082
      %v5169 = vadd.f32 %v4920, %v5084
      %v5170 = vadd.f32 %v4921, %v5086
      %v5171 = vadd.f32 %v4922, %v5088
      %v5172 = vadd.f32 %v4923, %v5092
      %v5173 = vadd.f32 %v4924, %v5094
      %v5174 = vadd.f32 %v4925, %v5096
      %v5175 = vadd.f32 %v4926, %v5098
      %v5176 = vadd.f32 %v4927, %v5102
      %v5177 = vadd.f32 %v4928, %v5104
      %v5178 = vadd.f32 %v4929, %v5106
      %v5179 = vadd.f32 %v4930, %v5108
      %v5180 = vadd.f32 %v4931, %v5112
      %v5181 = vadd.f32 %v4932, %v5114
      %v5182 = vadd.f32 %v4933, %v5116
      %v5183 = vadd.f32 %v4934, %v5118
      %v5184 = vadd.f32 %v4935, %v5122
      %v5185 = vadd.f32 %v4936, %v5124
      %v5186 = vadd.f32 %v4937, %v5126
      %v5187 = vadd.f32 %v4938, %v5128
      %v5188 = vadd.f32 %v4939, %v5132
      %v5189 = vadd.f32 %v4940, %v5134
      %v5190 = vadd.f32 %v4941, %v5136
      %v5191 = vadd.f32 %v4942, %v5138
      %v5192 = vadd.f32 %v4943, %v5142
      %v5193 = vadd.f32 %v4944, %v5144
      %v5194 = vadd.f32 %v4945, %v5146
      %v5195 = vadd.f32 %v4946, %v5148
      %v5196 = vadd.f32 %v4947, %v5152
      %v5197 = vadd.f32 %v4948, %v5154
      %v5198 = vadd.f32 %v4949, %v5156
      %v5199 = vadd.f32 %v4950, %v5158
      %v5200 = vld [vmem:[%s6] sm:$0x3]
      %v5202 = vlaneseq
      %v5203 = vshrl.u32 %v5202, 7
      %v5204 = vsub.s32 0, %v5203
      %v5205 = vrot.slane %v5200, %v5204
      %v5206 = vlaneseq
      %v5207 = vshrl.u32 %v5206, 7
      %v5208 = vsub.s32 1, %v5207
      %v5209 = vrot.slane %v5200, %v5208
      %v5212 = vadd.f32 %v5160, %v5205
      %v5213 = vadd.f32 %v5161, %v5209
      %v5214 = vadd.f32 %v5162, %v5205
      %v5215 = vadd.f32 %v5163, %v5209
      %v5216 = vadd.f32 %v5164, %v5205
      %v5217 = vadd.f32 %v5165, %v5209
      %v5218 = vadd.f32 %v5166, %v5205
      %v5219 = vadd.f32 %v5167, %v5209
      %v5220 = vadd.f32 %v5168, %v5205
      %v5221 = vadd.f32 %v5169, %v5209
      %v5222 = vadd.f32 %v5170, %v5205
      %v5223 = vadd.f32 %v5171, %v5209
      %v5224 = vadd.f32 %v5172, %v5205
      %v5225 = vadd.f32 %v5173, %v5209
      %v5226 = vadd.f32 %v5174, %v5205
      %v5227 = vadd.f32 %v5175, %v5209
      %v5228 = vadd.f32 %v5176, %v5205
      %v5229 = vadd.f32 %v5177, %v5209
      %v5230 = vadd.f32 %v5178, %v5205
      %v5231 = vadd.f32 %v5179, %v5209
      %v5232 = vadd.f32 %v5180, %v5205
      %v5233 = vadd.f32 %v5181, %v5209
      %v5234 = vadd.f32 %v5182, %v5205
      %v5235 = vadd.f32 %v5183, %v5209
      %v5236 = vadd.f32 %v5184, %v5205
      %v5237 = vadd.f32 %v5185, %v5209
      %v5238 = vadd.f32 %v5186, %v5205
      %v5239 = vadd.f32 %v5187, %v5209
      %v5240 = vadd.f32 %v5188, %v5205
      %v5241 = vadd.f32 %v5189, %v5209
      %v5242 = vadd.f32 %v5190, %v5205
      %v5243 = vadd.f32 %v5191, %v5209
      %v5244 = vadd.f32 %v5192, %v5205
      %v5245 = vadd.f32 %v5193, %v5209
      %v5246 = vadd.f32 %v5194, %v5205
      %v5247 = vadd.f32 %v5195, %v5209
      %v5248 = vadd.f32 %v5196, %v5205
      %v5249 = vadd.f32 %v5197, %v5209
      %v5250 = vadd.f32 %v5198, %v5205
      %v5251 = vadd.f32 %v5199, %v5209
      %v5252 = vmax.f32 %v5212, 0.0
      %v5253 = vmax.f32 %v5213, 0.0
      %v5254 = vmax.f32 %v5214, 0.0
      %v5255 = vmax.f32 %v5215, 0.0
      %v5256 = vmax.f32 %v5216, 0.0
      %v5257 = vmax.f32 %v5217, 0.0
      %v5258 = vmax.f32 %v5218, 0.0
      %v5259 = vmax.f32 %v5219, 0.0
      %v5260 = vmax.f32 %v5220, 0.0
      %v5261 = vmax.f32 %v5221, 0.0
      %v5262 = vmax.f32 %v5222, 0.0
      %v5263 = vmax.f32 %v5223, 0.0
      %v5264 = vmax.f32 %v5224, 0.0
      %v5265 = vmax.f32 %v5225, 0.0
      %v5266 = vmax.f32 %v5226, 0.0
      %v5267 = vmax.f32 %v5227, 0.0
      %v5268 = vmax.f32 %v5228, 0.0
      %v5269 = vmax.f32 %v5229, 0.0
      %v5270 = vmax.f32 %v5230, 0.0
      %v5271 = vmax.f32 %v5231, 0.0
      %v5272 = vmax.f32 %v5232, 0.0
      %v5273 = vmax.f32 %v5233, 0.0
      %v5274 = vmax.f32 %v5234, 0.0
      %v5275 = vmax.f32 %v5235, 0.0
      %v5276 = vmax.f32 %v5236, 0.0
      %v5277 = vmax.f32 %v5237, 0.0
      %v5278 = vmax.f32 %v5238, 0.0
      %v5279 = vmax.f32 %v5239, 0.0
      %v5280 = vmax.f32 %v5240, 0.0
      %v5281 = vmax.f32 %v5241, 0.0
      %v5282 = vmax.f32 %v5242, 0.0
      %v5283 = vmax.f32 %v5243, 0.0
      %v5284 = vmax.f32 %v5244, 0.0
      %v5285 = vmax.f32 %v5245, 0.0
      %v5286 = vmax.f32 %v5246, 0.0
      %v5287 = vmax.f32 %v5247, 0.0
      %v5288 = vmax.f32 %v5248, 0.0
      %v5289 = vmax.f32 %v5249, 0.0
      %v5290 = vmax.f32 %v5250, 0.0
      %v5291 = vmax.f32 %v5251, 0.0
      %v5292 = vmax.f32 %v5252, %v5256
      %v5293 = vmax.f32 %v5253, %v5257
      %v5294 = vmax.f32 %v5254, %v5258
      %v5295 = vmax.f32 %v5255, %v5259
      %v5296 = vmax.f32 %v5260, %v5264
      %v5297 = vmax.f32 %v5261, %v5265
      %v5298 = vmax.f32 %v5262, %v5266
      %v5299 = vmax.f32 %v5263, %v5267
      %v5300 = vmax.f32 %v5268, %v5272
      %v5301 = vmax.f32 %v5269, %v5273
      %v5302 = vmax.f32 %v5270, %v5274
      %v5303 = vmax.f32 %v5271, %v5275
      %v5304 = vmax.f32 %v5276, %v5280
      %v5305 = vmax.f32 %v5277, %v5281
      %v5306 = vmax.f32 %v5278, %v5282
      %v5307 = vmax.f32 %v5279, %v5283
      %v5308 = vmax.f32 %v5284, %v5288
      %v5309 = vmax.f32 %v5285, %v5289
      %v5310 = vmax.f32 %v5286, %v5290
      %v5311 = vmax.f32 %v5287, %v5291
      %v5312 = vpack.c.bf16 %v5294, %v5292
      %v5313 = vpack.c.bf16 %v5295, %v5293
      %v5314 = vpack.c.bf16 %v5298, %v5296
      %v5315 = vpack.c.bf16 %v5299, %v5297
      %v5316 = vpack.c.bf16 %v5302, %v5300
      %v5317 = vpack.c.bf16 %v5303, %v5301
      %v5318 = vpack.c.bf16 %v5306, %v5304
      %v5319 = vpack.c.bf16 %v5307, %v5305
      %v5320 = vpack.c.bf16 %v5310, %v5308
      %v5321 = vpack.c.bf16 %v5311, %v5309
      %v5322 = vld [vmem:[%s7] sm:$0xf]
      %v5323 = vld [vmem:[%s7 + $0x4] sm:$0xf]
      %v5324 = vld [vmem:[%s7 + $0x8] sm:$0xf]
      %v5325 = vld [vmem:[%s7 + $0xc] sm:$0xf]
      %v5326 = vld [vmem:[%s7 + $0x10] sm:$0xf]
      %v5327 = vld [vmem:[%s7 + $0x14] sm:$0xf]
      %v5328 = vld [vmem:[%s7 + $0x18] sm:$0xf]
      %v5329 = vld [vmem:[%s7 + $0x1c] sm:$0xf]
      %v5330 = vld [vmem:[%s7 + $0x20] sm:$0xf]
      %v5331 = vld [vmem:[%s7 + $0x24] sm:$0xf]
      %v5332 = vld [vmem:[%s7 + $0x28] sm:$0xf]
      %v5333 = vld [vmem:[%s7 + $0x2c] sm:$0xf]
      %v5334 = vld [vmem:[%s7 + $0x30] sm:$0xf]
      %v5335 = vld [vmem:[%s7 + $0x34] sm:$0xf]
      %v5336 = vld [vmem:[%s7 + $0x38] sm:$0xf]
      %v5337 = vld [vmem:[%s7 + $0x3c] sm:$0xf]
      %v5338 = vld [vmem:[%s7 + $0x40] sm:$0xf]
      %v5339 = vld [vmem:[%s7 + $0x44] sm:$0xf]
      %v5340 = vld [vmem:[%s7 + $0x48] sm:$0xf]
      %v5341 = vld [vmem:[%s7 + $0x4c] sm:$0xf]
      %v5362 = vunpack.c.l.b16 %v5322
      %v5363 = vunpack.c.l.b16 %v5323
      %v5364 = vunpack.c.l.b16 %v5324
      %v5365 = vunpack.c.l.b16 %v5325
      %v5366 = vunpack.c.l.b16 %v5326
      %v5367 = vunpack.c.l.b16 %v5327
      %v5368 = vunpack.c.l.b16 %v5328
      %v5369 = vunpack.c.l.b16 %v5329
      %v5370 = vunpack.c.l.b16 %v5330
      %v5371 = vunpack.c.l.b16 %v5331
      %v5372 = vunpack.c.l.b16 %v5332
      %v5373 = vunpack.c.l.b16 %v5333
      %v5374 = vunpack.c.l.b16 %v5334
      %v5375 = vunpack.c.l.b16 %v5335
      %v5376 = vunpack.c.l.b16 %v5336
      %v5377 = vunpack.c.l.b16 %v5337
      %v5378 = vunpack.c.l.b16 %v5338
      %v5379 = vunpack.c.l.b16 %v5339
      %v5380 = vunpack.c.l.b16 %v5340
      %v5381 = vunpack.c.l.b16 %v5341
      %v5382 = vpack.c.b16 %v5363, %v5362
      %v5383 = vpack.c.b16 %v5365, %v5364
      %v5384 = vpack.c.b16 %v5367, %v5366
      %v5385 = vpack.c.b16 %v5369, %v5368
      %v5386 = vpack.c.b16 %v5371, %v5370
      %v5387 = vpack.c.b16 %v5373, %v5372
      %v5388 = vpack.c.b16 %v5375, %v5374
      %v5389 = vpack.c.b16 %v5377, %v5376
      %v5390 = vpack.c.b16 %v5379, %v5378
      %v5391 = vpack.c.b16 %v5381, %v5380
      %vm5402 = vcmask 261120
      %v5404 = vsel %vm5402, %v5313, 0
      %v5407 = vsel %vm5402, %v5315, 0
      %v5410 = vsel %vm5402, %v5317, 0
      %v5413 = vsel %vm5402, %v5319, 0
      %v5416 = vsel %vm5402, %v5321, 0
      %5418 = vmatprep.subr.bf16.mxu0 0
      %5419 = vmatpush1.bf16.msra.mxu0 %v5382
      %5420 = vmatprep.subr.bf16.mxu0 0
      %5421 = vmatpush1.bf16.msra.mxu0 %v5383
      %5422 = vmatprep.subr.bf16.mxu0 0
      %5423 = vmatpush1.bf16.msra.mxu0 %v5384
      %5424 = vmatprep.subr.bf16.mxu0 0
      %5425 = vmatpush1.bf16.msra.mxu0 %v5385
      %5426 = vmatprep.subr.bf16.mxu0 0
      %5427 = vmatpush1.bf16.msra.mxu0 %v5386
      %5428 = vmatprep.subr.bf16.mxu0 0
      %5429 = vmatpush1.bf16.msra.mxu0 %v5387
      %5430 = vmatprep.subr.bf16.mxu0 0
      %5431 = vmatpush1.bf16.msra.mxu0 %v5388
      %5432 = vmatprep.subr.bf16.mxu0 0
      %5433 = vmatpush1.bf16.msra.mxu0 %v5389
      %5434 = vmatprep.subr.bf16.mxu0 0
      %5435 = vmatpush1.bf16.msra.mxu0 %v5390
      %5436 = vmatprep.subr.bf16.mxu0 0
      %5437 = vmatpush1.bf16.msra.mxu0 %v5391
      %5438 = vmatprep.subr.bf16.mxu0 0
      %5439 = vmatpush1.bf16.msra.mxu0 0
      %5440 = vmatprep.subr.bf16.mxu0 0
      %5441 = vmatpush1.bf16.msra.mxu0 0
      %5442 = vmatprep.subr.bf16.mxu0 0
      %5443 = vmatpush1.bf16.msra.mxu0 0
      %5444 = vmatprep.subr.bf16.mxu0 0
      %5445 = vmatpush1.bf16.msra.mxu0 0
      %5446 = vmatprep.subr.bf16.mxu0 0
      %5447 = vmatpush1.bf16.msra.mxu0 0
      %5448 = vmatprep.subr.bf16.mxu0 0
      %5449 = vmatpush1.bf16.msra.mxu0 0
      %5450 = vmatprep.mubr.bf16.mxu0 %v5404
      %5451 = vmatmul.mubr.bf16.gmra.mrb[0].mxu0 %v5312
      %v5452 = vpop.f32.mrb[0].mxu0
      %v5453 = vadd.f32 0.0, %v5452
      %v5454 = vpop.f32.mrb[0].mxu0
      %v5455 = vpop.f32.mrb[0].mxu0
      %v5456 = vadd.f32 0.0, %v5455
      %v5457 = vpop.f32.mrb[0].mxu0
      %5458 = vmatprep.mubr.bf16.mxu0 %v5407
      %5459 = vmatmul.mubr.bf16.gmra.mrb[0].mxu0 %v5314
      %v5460 = vpop.f32.mrb[0].mxu0
      %v5461 = vadd.f32 0.0, %v5460
      %v5462 = vpop.f32.mrb[0].mxu0
      %v5463 = vpop.f32.mrb[0].mxu0
      %v5464 = vadd.f32 0.0, %v5463
      %v5465 = vpop.f32.mrb[0].mxu0
      %5466 = vmatprep.mubr.bf16.mxu0 %v5410
      %5467 = vmatmul.mubr.bf16.gmra.mrb[0].mxu0 %v5316
      %v5468 = vpop.f32.mrb[0].mxu0
      %v5469 = vadd.f32 0.0, %v5468
      %v5470 = vpop.f32.mrb[0].mxu0
      %v5471 = vpop.f32.mrb[0].mxu0
      %v5472 = vadd.f32 0.0, %v5471
      %v5473 = vpop.f32.mrb[0].mxu0
      %5474 = vmatprep.mubr.bf16.mxu0 %v5413
      %5475 = vmatmul.mubr.bf16.gmra.mrb[0].mxu0 %v5318
      %v5476 = vpop.f32.mrb[0].mxu0
      %v5477 = vadd.f32 0.0, %v5476
      %v5478 = vpop.f32.mrb[0].mxu0
      %v5479 = vpop.f32.mrb[0].mxu0
      %v5480 = vadd.f32 0.0, %v5479
      %v5481 = vpop.f32.mrb[0].mxu0
      %5482 = vmatprep.mubr.bf16.mxu0 %v5416
      %5483 = vmatmul.mubr.bf16.gmra.mrb[0].mxu0 %v5320
      %v5484 = vpop.f32.mrb[0].mxu0
      %v5485 = vadd.f32 0.0, %v5484
      %v5486 = vpop.f32.mrb[0].mxu0
      %v5487 = vpop.f32.mrb[0].mxu0
      %v5488 = vadd.f32 0.0, %v5487
      %v5489 = vpop.f32.mrb[0].mxu0
      %5490 = vdwg.mxu0
      %v5491 = vld [vmem:[%s8] sm:$0xf]
      %v5492 = vld [vmem:[%s8 + $0x4] sm:$0xf]
      %v5493 = vld [vmem:[%s8 + $0x8] sm:$0xf]
      %v5494 = vld [vmem:[%s8 + $0xc] sm:$0xf]
      %v5495 = vld [vmem:[%s8 + $0x10] sm:$0xf]
      %v5496 = vld [vmem:[%s8 + $0x14] sm:$0xf]
      %v5497 = vld [vmem:[%s8 + $0x18] sm:$0xf]
      %v5498 = vld [vmem:[%s8 + $0x1c] sm:$0xf]
      %v5499 = vld [vmem:[%s8 + $0x20] sm:$0xf]
      %v5500 = vld [vmem:[%s8 + $0x24] sm:$0xf]
      %v5501 = vld [vmem:[%s8 + $0x28] sm:$0xf]
      %v5502 = vld [vmem:[%s8 + $0x2c] sm:$0xf]
      %v5503 = vld [vmem:[%s8 + $0x30] sm:$0xf]
      %v5504 = vld [vmem:[%s8 + $0x34] sm:$0xf]
      %v5505 = vld [vmem:[%s8 + $0x38] sm:$0xf]
      %v5506 = vld [vmem:[%s8 + $0x3c] sm:$0xf]
      %v5507 = vld [vmem:[%s8 + $0x40] sm:$0xf]
      %v5508 = vld [vmem:[%s8 + $0x44] sm:$0xf]
      %v5509 = vld [vmem:[%s8 + $0x48] sm:$0xf]
      %v5510 = vld [vmem:[%s8 + $0x4c] sm:$0xf]
      %v5531 = vunpack.c.l.b16 %v5491
      %v5532 = vunpack.c.l.b16 %v5492
      %v5533 = vunpack.c.l.b16 %v5493
      %v5534 = vunpack.c.l.b16 %v5494
      %v5535 = vunpack.c.l.b16 %v5495
      %v5536 = vunpack.c.l.b16 %v5496
      %v5537 = vunpack.c.l.b16 %v5497
      %v5538 = vunpack.c.l.b16 %v5498
      %v5539 = vunpack.c.l.b16 %v5499
      %v5540 = vunpack.c.l.b16 %v5500
      %v5541 = vunpack.c.l.b16 %v5501
      %v5542 = vunpack.c.l.b16 %v5502
      %v5543 = vunpack.c.l.b16 %v5503
      %v5544 = vunpack.c.l.b16 %v5504
      %v5545 = vunpack.c.l.b16 %v5505
      %v5546 = vunpack.c.l.b16 %v5506
      %v5547 = vunpack.c.l.b16 %v5507
      %v5548 = vunpack.c.l.b16 %v5508
      %v5549 = vunpack.c.l.b16 %v5509
      %v5550 = vunpack.c.l.b16 %v5510
      %v5551 = vpack.c.b16 %v5532, %v5531
      %v5552 = vpack.c.b16 %v5534, %v5533
      %v5553 = vpack.c.b16 %v5536, %v5535
      %v5554 = vpack.c.b16 %v5538, %v5537
      %v5555 = vpack.c.b16 %v5540, %v5539
      %v5556 = vpack.c.b16 %v5542, %v5541
      %v5557 = vpack.c.b16 %v5544, %v5543
      %v5558 = vpack.c.b16 %v5546, %v5545
      %v5559 = vpack.c.b16 %v5548, %v5547
      %v5560 = vpack.c.b16 %v5550, %v5549
      %5571 = vmatprep.subr.bf16.mxu0 0
      %5572 = vmatpush1.bf16.msra.mxu0 %v5551
      %5573 = vmatprep.subr.bf16.mxu0 0
      %5574 = vmatpush1.bf16.msra.mxu0 %v5552
      %5575 = vmatprep.subr.bf16.mxu0 0
      %5576 = vmatpush1.bf16.msra.mxu0 %v5553
      %5577 = vmatprep.subr.bf16.mxu0 0
      %5578 = vmatpush1.bf16.msra.mxu0 %v5554
      %5579 = vmatprep.subr.bf16.mxu0 0
      %5580 = vmatpush1.bf16.msra.mxu0 %v5555
      %5581 = vmatprep.subr.bf16.mxu0 0
      %5582 = vmatpush1.bf16.msra.mxu0 %v5556
      %5583 = vmatprep.subr.bf16.mxu0 0
      %5584 = vmatpush1.bf16.msra.mxu0 %v5557
      %5585 = vmatprep.subr.bf16.mxu0 0
      %5586 = vmatpush1.bf16.msra.mxu0 %v5558
      %5587 = vmatprep.subr.bf16.mxu0 0
      %5588 = vmatpush1.bf16.msra.mxu0 %v5559
      %5589 = vmatprep.subr.bf16.mxu0 0
      %5590 = vmatpush1.bf16.msra.mxu0 %v5560
      %5591 = vmatprep.subr.bf16.mxu0 0
      %5592 = vmatpush1.bf16.msra.mxu0 0
      %5593 = vmatprep.subr.bf16.mxu0 0
      %5594 = vmatpush1.bf16.msra.mxu0 0
      %5595 = vmatprep.subr.bf16.mxu0 0
      %5596 = vmatpush1.bf16.msra.mxu0 0
      %5597 = vmatprep.subr.bf16.mxu0 0
      %5598 = vmatpush1.bf16.msra.mxu0 0
      %5599 = vmatprep.subr.bf16.mxu0 0
      %5600 = vmatpush1.bf16.msra.mxu0 0
      %5601 = vmatprep.subr.bf16.mxu0 0
      %5602 = vmatpush1.bf16.msra.mxu0 0
      %5603 = vmatprep.mubr.bf16.mxu0 %v5404
      %5604 = vmatmul.mubr.bf16.gmra.mrb[0].mxu0 %v5312
      %v5605 = vpop.f32.mrb[0].mxu0
      %v5606 = vadd.f32 0.0, %v5605
      %v5607 = vpop.f32.mrb[0].mxu0
      %v5608 = vpop.f32.mrb[0].mxu0
      %v5609 = vadd.f32 0.0, %v5608
      %v5610 = vpop.f32.mrb[0].mxu0
      %5611 = vmatprep.mubr.bf16.mxu0 %v5407
      %5612 = vmatmul.mubr.bf16.gmra.mrb[0].mxu0 %v5314
      %v5613 = vpop.f32.mrb[0].mxu0
      %v5614 = vadd.f32 0.0, %v5613
      %v5615 = vpop.f32.mrb[0].mxu0
      %v5616 = vpop.f32.mrb[0].mxu0
      %v5617 = vadd.f32 0.0, %v5616
      %v5618 = vpop.f32.mrb[0].mxu0
      %5619 = vmatprep.mubr.bf16.mxu0 %v5410
      %5620 = vmatmul.mubr.bf16.gmra.mrb[0].mxu0 %v5316
      %v5621 = vpop.f32.mrb[0].mxu0
      %v5622 = vadd.f32 0.0, %v5621
      %v5623 = vpop.f32.mrb[0].mxu0
      %v5624 = vpop.f32.mrb[0].mxu0
      %v5625 = vadd.f32 0.0, %v5624
      %v5626 = vpop.f32.mrb[0].mxu0
      %5627 = vmatprep.mubr.bf16.mxu0 %v5413
      %5628 = vmatmul.mubr.bf16.gmra.mrb[0].mxu0 %v5318
      %v5629 = vpop.f32.mrb[0].mxu0
      %v5630 = vadd.f32 0.0, %v5629
      %v5631 = vpop.f32.mrb[0].mxu0
      %v5632 = vpop.f32.mrb[0].mxu0
      %v5633 = vadd.f32 0.0, %v5632
      %v5634 = vpop.f32.mrb[0].mxu0
      %5635 = vmatprep.mubr.bf16.mxu0 %v5416
      %5636 = vmatmul.mubr.bf16.gmra.mrb[0].mxu0 %v5320
      %v5637 = vpop.f32.mrb[0].mxu0
      %v5638 = vadd.f32 0.0, %v5637
      %v5639 = vpop.f32.mrb[0].mxu0
      %v5640 = vpop.f32.mrb[0].mxu0
      %v5641 = vadd.f32 0.0, %v5640
      %v5642 = vpop.f32.mrb[0].mxu0
      %5643 = vdwg.mxu0
      %v5644 = vmax.f32 %v5453, %v5606
      %v5645 = vmax.f32 %v5456, %v5609
      %v5646 = vmax.f32 %v5461, %v5614
      %v5647 = vmax.f32 %v5464, %v5617
      %v5648 = vmax.f32 %v5469, %v5622
      %v5649 = vmax.f32 %v5472, %v5625
      %v5650 = vmax.f32 %v5477, %v5630
      %v5651 = vmax.f32 %v5480, %v5633
      %v5652 = vmax.f32 %v5485, %v5638
      %v5653 = vmax.f32 %v5488, %v5641
      %v5654 = vpack.c.bf16 %v5645, %v5644
      %v5655 = vpack.c.bf16 %v5647, %v5646
      %v5656 = vpack.c.bf16 %v5649, %v5648
      %v5657 = vpack.c.bf16 %v5651, %v5650
      %v5658 = vpack.c.bf16 %v5653, %v5652
      %v5659 = vld [vmem:[%s9] sm:$0xf]
      %v5660 = vld [vmem:[%s9 + $0x4] sm:$0xf]
      %v5661 = vld [vmem:[%s9 + $0x8] sm:$0xf]
      %v5662 = vld [vmem:[%s9 + $0xc] sm:$0xf]
      %v5663 = vld [vmem:[%s9 + $0x10] sm:$0xf]
      %v5664 = vld [vmem:[%s9 + $0x14] sm:$0xf]
      %v5665 = vld [vmem:[%s9 + $0x18] sm:$0xf]
      %v5666 = vld [vmem:[%s9 + $0x1c] sm:$0xf]
      %v5667 = vld [vmem:[%s9 + $0x20] sm:$0xf]
      %v5668 = vld [vmem:[%s9 + $0x24] sm:$0xf]
      %s5669 = scalar_lea.vmem %s9, 40
      %v5670 = vld [vmem:[%s5669] sm:$0xf]
      %v5671 = vld [vmem:[%s5669 + $0x4] sm:$0xf]
      %v5672 = vld [vmem:[%s5669 + $0x8] sm:$0xf]
      %v5673 = vld [vmem:[%s5669 + $0xc] sm:$0xf]
      %v5674 = vld [vmem:[%s5669 + $0x10] sm:$0xf]
      %v5675 = vld [vmem:[%s5669 + $0x14] sm:$0xf]
      %v5676 = vld [vmem:[%s5669 + $0x18] sm:$0xf]
      %v5677 = vld [vmem:[%s5669 + $0x1c] sm:$0xf]
      %v5678 = vld [vmem:[%s5669 + $0x20] sm:$0xf]
      %v5679 = vld [vmem:[%s5669 + $0x24] sm:$0xf]
      %v5690 = vunpack.c.l.b16 %v5670
      %v5691 = vunpack.c.l.b16 %v5671
      %v5692 = vunpack.c.l.b16 %v5672
      %v5693 = vunpack.c.l.b16 %v5673
      %v5694 = vunpack.c.l.b16 %v5674
      %v5695 = vunpack.c.l.b16 %v5675
      %v5696 = vunpack.c.l.b16 %v5676
      %v5697 = vunpack.c.l.b16 %v5677
      %v5698 = vunpack.c.l.b16 %v5678
      %v5699 = vunpack.c.l.b16 %v5679
      %v5700 = vpack.c.b16 %v5691, %v5690
      %v5701 = vpack.c.b16 %v5693, %v5692
      %v5702 = vpack.c.b16 %v5695, %v5694
      %v5703 = vpack.c.b16 %v5697, %v5696
      %v5704 = vpack.c.b16 %v5699, %v5698
      %vm5710 = vcmask 654336
      %v5712 = vsel %vm5710, %v5655, 0
      %5714 = vmatprep.subr.bf16.mxu0 0
      %5715 = vmatpush1.bf16.msra.mxu0 %v5700
      %5716 = vmatprep.subr.bf16.mxu0 0
      %5717 = vmatpush1.bf16.msra.mxu0 %v5701
      %5718 = vmatprep.subr.bf16.mxu0 0
      %5719 = vmatpush1.bf16.msra.mxu0 %v5702
      %5720 = vmatprep.subr.bf16.mxu0 0
      %5721 = vmatpush1.bf16.msra.mxu0 %v5703
      %5722 = vmatprep.subr.bf16.mxu0 0
      %5723 = vmatpush1.bf16.msra.mxu0 %v5704
      %5724 = vmatprep.subr.bf16.mxu0 0
      %5725 = vmatpush1.bf16.msra.mxu0 0
      %5726 = vmatprep.subr.bf16.mxu0 0
      %5727 = vmatpush1.bf16.msra.mxu0 0
      %5728 = vmatprep.subr.bf16.mxu0 0
      %5729 = vmatpush1.bf16.msra.mxu0 0
      %5730 = vmatprep.subr.bf16.mxu0 0
      %5731 = vmatpush1.bf16.msra.mxu0 0
      %5732 = vmatprep.subr.bf16.mxu0 0
      %5733 = vmatpush1.bf16.msra.mxu0 0
      %5734 = vmatprep.subr.bf16.mxu0 0
      %5735 = vmatpush1.bf16.msra.mxu0 0
      %5736 = vmatprep.subr.bf16.mxu0 0
      %5737 = vmatpush1.bf16.msra.mxu0 0
      %5738 = vmatprep.subr.bf16.mxu0 0
      %5739 = vmatpush1.bf16.msra.mxu0 0
      %5740 = vmatprep.subr.bf16.mxu0 0
      %5741 = vmatpush1.bf16.msra.mxu0 0
      %5742 = vmatprep.subr.bf16.mxu0 0
      %5743 = vmatpush1.bf16.msra.mxu0 0
      %5744 = vmatprep.subr.bf16.mxu0 0
      %5745 = vmatpush1.bf16.msra.mxu0 0
      %5746 = vmatprep.mubr.bf16.mxu0 0
      %5747 = vmatmul.mubr.bf16.gmra.mrb[0].mxu0 %v5712
      %v5748 = vpop.f32.mrb[0].mxu0
      %v5749 = vadd.f32 0.0, %v5748
      %v5750 = vpop.f32.mrb[0].mxu0
      %v5751 = vpop.f32.mrb[0].mxu0
      %v5752 = vadd.f32 0.0, %v5751
      %v5753 = vpop.f32.mrb[0].mxu0
      %5754 = vdwg.mxu0
      %v5765 = vunpack.c.l.b16 %v5659
      %v5766 = vunpack.c.l.b16 %v5660
      %v5767 = vunpack.c.l.b16 %v5661
      %v5768 = vunpack.c.l.b16 %v5662
      %v5769 = vunpack.c.l.b16 %v5663
      %v5770 = vunpack.c.l.b16 %v5664
      %v5771 = vunpack.c.l.b16 %v5665
      %v5772 = vunpack.c.l.b16 %v5666
      %v5773 = vunpack.c.l.b16 %v5667
      %v5774 = vunpack.c.l.b16 %v5668
      %v5775 = vpack.c.b16 %v5766, %v5765
      %v5776 = vpack.c.b16 %v5768, %v5767
      %v5777 = vpack.c.b16 %v5770, %v5769
      %v5778 = vpack.c.b16 %v5772, %v5771
      %v5779 = vpack.c.b16 %v5774, %v5773
      %v5786 = vsel %vm5710, %v5654, 0
      %5788 = vmatprep.subr.bf16.mxu0 0
      %5789 = vmatpush1.bf16.msra.mxu0 %v5775
      %5790 = vmatprep.subr.bf16.mxu0 0
      %5791 = vmatpush1.bf16.msra.mxu0 %v5776
      %5792 = vmatprep.subr.bf16.mxu0 0
      %5793 = vmatpush1.bf16.msra.mxu0 %v5777
      %5794 = vmatprep.subr.bf16.mxu0 0
      %5795 = vmatpush1.bf16.msra.mxu0 %v5778
      %5796 = vmatprep.subr.bf16.mxu0 0
      %5797 = vmatpush1.bf16.msra.mxu0 %v5779
      %5798 = vmatprep.subr.bf16.mxu0 0
      %5799 = vmatpush1.bf16.msra.mxu0 0
      %5800 = vmatprep.subr.bf16.mxu0 0
      %5801 = vmatpush1.bf16.msra.mxu0 0
      %5802 = vmatprep.subr.bf16.mxu0 0
      %5803 = vmatpush1.bf16.msra.mxu0 0
      %5804 = vmatprep.subr.bf16.mxu0 0
      %5805 = vmatpush1.bf16.msra.mxu0 0
      %5806 = vmatprep.subr.bf16.mxu0 0
      %5807 = vmatpush1.bf16.msra.mxu0 0
      %5808 = vmatprep.subr.bf16.mxu0 0
      %5809 = vmatpush1.bf16.msra.mxu0 0
      %5810 = vmatprep.subr.bf16.mxu0 0
      %5811 = vmatpush1.bf16.msra.mxu0 0
      %5812 = vmatprep.subr.bf16.mxu0 0
      %5813 = vmatpush1.bf16.msra.mxu0 0
      %5814 = vmatprep.subr.bf16.mxu0 0
      %5815 = vmatpush1.bf16.msra.mxu0 0
      %5816 = vmatprep.subr.bf16.mxu0 0
      %5817 = vmatpush1.bf16.msra.mxu0 0
      %5818 = vmatprep.subr.bf16.mxu0 0
      %5819 = vmatpush1.bf16.msra.mxu0 0
      %5820 = vmatprep.mubr.bf16.mxu0 0
      %5821 = vmatmul.mubr.bf16.gmra.mrb[0].mxu0 %v5786
      %v5822 = vpop.f32.mrb[0].mxu0
      %v5823 = vadd.f32 %v5749, %v5822
      %v5824 = vpop.f32.mrb[0].mxu0
      %v5825 = vpop.f32.mrb[0].mxu0
      %v5826 = vadd.f32 %v5752, %v5825
      %v5827 = vpop.f32.mrb[0].mxu0
      %5828 = vdwg.mxu0
      %s5829 = scalar_lea.vmem %s9, 80
      %v5830 = vld [vmem:[%s5829] sm:$0xf]
      %v5831 = vld [vmem:[%s5829 + $0x4] sm:$0xf]
      %v5832 = vld [vmem:[%s5829 + $0x8] sm:$0xf]
      %v5833 = vld [vmem:[%s5829 + $0xc] sm:$0xf]
      %v5834 = vld [vmem:[%s5829 + $0x10] sm:$0xf]
      %v5835 = vld [vmem:[%s5829 + $0x14] sm:$0xf]
      %v5836 = vld [vmem:[%s5829 + $0x18] sm:$0xf]
      %v5837 = vld [vmem:[%s5829 + $0x1c] sm:$0xf]
      %v5838 = vld [vmem:[%s5829 + $0x20] sm:$0xf]
      %v5839 = vld [vmem:[%s5829 + $0x24] sm:$0xf]
      %v5850 = vunpack.c.l.b16 %v5830
      %v5851 = vunpack.c.l.b16 %v5831
      %v5852 = vunpack.c.l.b16 %v5832
      %v5853 = vunpack.c.l.b16 %v5833
      %v5854 = vunpack.c.l.b16 %v5834
      %v5855 = vunpack.c.l.b16 %v5835
      %v5856 = vunpack.c.l.b16 %v5836
      %v5857 = vunpack.c.l.b16 %v5837
      %v5858 = vunpack.c.l.b16 %v5838
      %v5859 = vunpack.c.l.b16 %v5839
      %v5860 = vpack.c.b16 %v5851, %v5850
      %v5861 = vpack.c.b16 %v5853, %v5852
      %v5862 = vpack.c.b16 %v5855, %v5854
      %v5863 = vpack.c.b16 %v5857, %v5856
      %v5864 = vpack.c.b16 %v5859, %v5858
      %v5871 = vsel %vm5710, %v5656, 0
      %5873 = vmatprep.subr.bf16.mxu0 0
      %5874 = vmatpush1.bf16.msra.mxu0 %v5860
      %5875 = vmatprep.subr.bf16.mxu0 0
      %5876 = vmatpush1.bf16.msra.mxu0 %v5861
      %5877 = vmatprep.subr.bf16.mxu0 0
      %5878 = vmatpush1.bf16.msra.mxu0 %v5862
      %5879 = vmatprep.subr.bf16.mxu0 0
      %5880 = vmatpush1.bf16.msra.mxu0 %v5863
      %5881 = vmatprep.subr.bf16.mxu0 0
      %5882 = vmatpush1.bf16.msra.mxu0 %v5864
      %5883 = vmatprep.subr.bf16.mxu0 0
      %5884 = vmatpush1.bf16.msra.mxu0 0
      %5885 = vmatprep.subr.bf16.mxu0 0
      %5886 = vmatpush1.bf16.msra.mxu0 0
      %5887 = vmatprep.subr.bf16.mxu0 0
      %5888 = vmatpush1.bf16.msra.mxu0 0
      %5889 = vmatprep.subr.bf16.mxu0 0
      %5890 = vmatpush1.bf16.msra.mxu0 0
      %5891 = vmatprep.subr.bf16.mxu0 0
      %5892 = vmatpush1.bf16.msra.mxu0 0
      %5893 = vmatprep.subr.bf16.mxu0 0
      %5894 = vmatpush1.bf16.msra.mxu0 0
      %5895 = vmatprep.subr.bf16.mxu0 0
      %5896 = vmatpush1.bf16.msra.mxu0 0
      %5897 = vmatprep.subr.bf16.mxu0 0
      %5898 = vmatpush1.bf16.msra.mxu0 0
      %5899 = vmatprep.subr.bf16.mxu0 0
      %5900 = vmatpush1.bf16.msra.mxu0 0
      %5901 = vmatprep.subr.bf16.mxu0 0
      %5902 = vmatpush1.bf16.msra.mxu0 0
      %5903 = vmatprep.subr.bf16.mxu0 0
      %5904 = vmatpush1.bf16.msra.mxu0 0
      %5905 = vmatprep.mubr.bf16.mxu0 0
      %5906 = vmatmul.mubr.bf16.gmra.mrb[0].mxu0 %v5871
      %v5907 = vpop.f32.mrb[0].mxu0
      %v5908 = vadd.f32 0.0, %v5907
      %v5909 = vpop.f32.mrb[0].mxu0
      %v5910 = vpop.f32.mrb[0].mxu0
      %v5911 = vadd.f32 0.0, %v5910
      %v5912 = vpop.f32.mrb[0].mxu0
      %5913 = vdwg.mxu0
      %v5914 = vadd.f32 %v5823, %v5908
      %v5915 = vadd.f32 %v5826, %v5911
      %s5916 = scalar_lea.vmem %s9, 120
      %v5917 = vld [vmem:[%s5916] sm:$0xf]
      %v5918 = vld [vmem:[%s5916 + $0x4] sm:$0xf]
      %v5919 = vld [vmem:[%s5916 + $0x8] sm:$0xf]
      %v5920 = vld [vmem:[%s5916 + $0xc] sm:$0xf]
      %v5921 = vld [vmem:[%s5916 + $0x10] sm:$0xf]
      %v5922 = vld [vmem:[%s5916 + $0x14] sm:$0xf]
      %v5923 = vld [vmem:[%s5916 + $0x18] sm:$0xf]
      %v5924 = vld [vmem:[%s5916 + $0x1c] sm:$0xf]
      %v5925 = vld [vmem:[%s5916 + $0x20] sm:$0xf]
      %v5926 = vld [vmem:[%s5916 + $0x24] sm:$0xf]
      %v5937 = vunpack.c.l.b16 %v5917
      %v5938 = vunpack.c.l.b16 %v5918
      %v5939 = vunpack.c.l.b16 %v5919
      %v5940 = vunpack.c.l.b16 %v5920
      %v5941 = vunpack.c.l.b16 %v5921
      %v5942 = vunpack.c.l.b16 %v5922
      %v5943 = vunpack.c.l.b16 %v5923
      %v5944 = vunpack.c.l.b16 %v5924
      %v5945 = vunpack.c.l.b16 %v5925
      %v5946 = vunpack.c.l.b16 %v5926
      %v5947 = vpack.c.b16 %v5938, %v5937
      %v5948 = vpack.c.b16 %v5940, %v5939
      %v5949 = vpack.c.b16 %v5942, %v5941
      %v5950 = vpack.c.b16 %v5944, %v5943
      %v5951 = vpack.c.b16 %v5946, %v5945
      %v5958 = vsel %vm5710, %v5657, 0
      %5960 = vmatprep.subr.bf16.mxu0 0
      %5961 = vmatpush1.bf16.msra.mxu0 %v5947
      %5962 = vmatprep.subr.bf16.mxu0 0
      %5963 = vmatpush1.bf16.msra.mxu0 %v5948
      %5964 = vmatprep.subr.bf16.mxu0 0
      %5965 = vmatpush1.bf16.msra.mxu0 %v5949
      %5966 = vmatprep.subr.bf16.mxu0 0
      %5967 = vmatpush1.bf16.msra.mxu0 %v5950
      %5968 = vmatprep.subr.bf16.mxu0 0
      %5969 = vmatpush1.bf16.msra.mxu0 %v5951
      %5970 = vmatprep.subr.bf16.mxu0 0
      %5971 = vmatpush1.bf16.msra.mxu0 0
      %5972 = vmatprep.subr.bf16.mxu0 0
      %5973 = vmatpush1.bf16.msra.mxu0 0
      %5974 = vmatprep.subr.bf16.mxu0 0
      %5975 = vmatpush1.bf16.msra.mxu0 0
      %5976 = vmatprep.subr.bf16.mxu0 0
      %5977 = vmatpush1.bf16.msra.mxu0 0
      %5978 = vmatprep.subr.bf16.mxu0 0
      %5979 = vmatpush1.bf16.msra.mxu0 0
      %5980 = vmatprep.subr.bf16.mxu0 0
      %5981 = vmatpush1.bf16.msra.mxu0 0
      %5982 = vmatprep.subr.bf16.mxu0 0
      %5983 = vmatpush1.bf16.msra.mxu0 0
      %5984 = vmatprep.subr.bf16.mxu0 0
      %5985 = vmatpush1.bf16.msra.mxu0 0
      %5986 = vmatprep.subr.bf16.mxu0 0
      %5987 = vmatpush1.bf16.msra.mxu0 0
      %5988 = vmatprep.subr.bf16.mxu0 0
      %5989 = vmatpush1.bf16.msra.mxu0 0
      %5990 = vmatprep.subr.bf16.mxu0 0
      %5991 = vmatpush1.bf16.msra.mxu0 0
      %5992 = vmatprep.mubr.bf16.mxu0 0
      %5993 = vmatmul.mubr.bf16.gmra.mrb[0].mxu0 %v5958
      %v5994 = vpop.f32.mrb[0].mxu0
      %v5995 = vadd.f32 0.0, %v5994
      %v5996 = vpop.f32.mrb[0].mxu0
      %v5997 = vpop.f32.mrb[0].mxu0
      %v5998 = vadd.f32 0.0, %v5997
      %v5999 = vpop.f32.mrb[0].mxu0
      %6000 = vdwg.mxu0
      %v6001 = vadd.f32 %v5914, %v5995
      %v6002 = vadd.f32 %v5915, %v5998
      %s6003 = scalar_lea.vmem %s9, 160
      %v6004 = vld [vmem:[%s6003] sm:$0xf]
      %v6005 = vld [vmem:[%s6003 + $0x4] sm:$0xf]
      %v6006 = vld [vmem:[%s6003 + $0x8] sm:$0xf]
      %v6007 = vld [vmem:[%s6003 + $0xc] sm:$0xf]
      %v6008 = vld [vmem:[%s6003 + $0x10] sm:$0xf]
      %v6009 = vld [vmem:[%s6003 + $0x14] sm:$0xf]
      %v6010 = vld [vmem:[%s6003 + $0x18] sm:$0xf]
      %v6011 = vld [vmem:[%s6003 + $0x1c] sm:$0xf]
      %v6012 = vld [vmem:[%s6003 + $0x20] sm:$0xf]
      %v6013 = vld [vmem:[%s6003 + $0x24] sm:$0xf]
      %v6024 = vunpack.c.l.b16 %v6004
      %v6025 = vunpack.c.l.b16 %v6005
      %v6026 = vunpack.c.l.b16 %v6006
      %v6027 = vunpack.c.l.b16 %v6007
      %v6028 = vunpack.c.l.b16 %v6008
      %v6029 = vunpack.c.l.b16 %v6009
      %v6030 = vunpack.c.l.b16 %v6010
      %v6031 = vunpack.c.l.b16 %v6011
      %v6032 = vunpack.c.l.b16 %v6012
      %v6033 = vunpack.c.l.b16 %v6013
      %v6034 = vpack.c.b16 %v6025, %v6024
      %v6035 = vpack.c.b16 %v6027, %v6026
      %v6036 = vpack.c.b16 %v6029, %v6028
      %v6037 = vpack.c.b16 %v6031, %v6030
      %v6038 = vpack.c.b16 %v6033, %v6032
      %v6045 = vsel %vm5710, %v5658, 0
      %6047 = vmatprep.subr.bf16.mxu0 0
      %6048 = vmatpush1.bf16.msra.mxu0 %v6034
      %6049 = vmatprep.subr.bf16.mxu0 0
      %6050 = vmatpush1.bf16.msra.mxu0 %v6035
      %6051 = vmatprep.subr.bf16.mxu0 0
      %6052 = vmatpush1.bf16.msra.mxu0 %v6036
      %6053 = vmatprep.subr.bf16.mxu0 0
      %6054 = vmatpush1.bf16.msra.mxu0 %v6037
      %6055 = vmatprep.subr.bf16.mxu0 0
      %6056 = vmatpush1.bf16.msra.mxu0 %v6038
      %6057 = vmatprep.subr.bf16.mxu0 0
      %6058 = vmatpush1.bf16.msra.mxu0 0
      %6059 = vmatprep.subr.bf16.mxu0 0
      %6060 = vmatpush1.bf16.msra.mxu0 0
      %6061 = vmatprep.subr.bf16.mxu0 0
      %6062 = vmatpush1.bf16.msra.mxu0 0
      %6063 = vmatprep.subr.bf16.mxu0 0
      %6064 = vmatpush1.bf16.msra.mxu0 0
      %6065 = vmatprep.subr.bf16.mxu0 0
      %6066 = vmatpush1.bf16.msra.mxu0 0
      %6067 = vmatprep.subr.bf16.mxu0 0
      %6068 = vmatpush1.bf16.msra.mxu0 0
      %6069 = vmatprep.subr.bf16.mxu0 0
      %6070 = vmatpush1.bf16.msra.mxu0 0
      %6071 = vmatprep.subr.bf16.mxu0 0
      %6072 = vmatpush1.bf16.msra.mxu0 0
      %6073 = vmatprep.subr.bf16.mxu0 0
      %6074 = vmatpush1.bf16.msra.mxu0 0
      %6075 = vmatprep.subr.bf16.mxu0 0
      %6076 = vmatpush1.bf16.msra.mxu0 0
      %6077 = vmatprep.subr.bf16.mxu0 0
      %6078 = vmatpush1.bf16.msra.mxu0 0
      %6079 = vmatprep.mubr.bf16.mxu0 0
      %6080 = vmatmul.mubr.bf16.gmra.mrb[0].mxu0 %v6045
      %v6081 = vpop.f32.mrb[0].mxu0
      %v6082 = vadd.f32 0.0, %v6081
      %v6083 = vpop.f32.mrb[0].mxu0
      %v6084 = vpop.f32.mrb[0].mxu0
      %v6085 = vadd.f32 0.0, %v6084
      %v6086 = vpop.f32.mrb[0].mxu0
      %6087 = vdwg.mxu0
      %v6088 = vadd.f32 %v6001, %v6082
      %v6089 = vadd.f32 %v6002, %v6085
      %v6090 = vld [vmem:[%s10] sm:$0x1]
      %v6092 = vlaneseq
      %v6093 = vshrl.u32 %v6092, 7
      %v6094 = vsub.s32 0, %v6093
      %v6095 = vrot.slane %v6090, %v6094
      %v6097 = vadd.f32 %v6088, %v6095
      %v6098 = vadd.f32 %v6089, %v6095
      %v6099 = vmax.f32 %v6097, 0.0
      %v6100 = vmax.f32 %v6098, 0.0
      %v6101 = vpack.c.bf16 %v6100, %v6099
      %v6102 = vld [vmem:[%s11] sm:$0xf]
      %v6103 = vld [vmem:[%s11 + $0x4] sm:$0xf]
      %v6104 = vld [vmem:[%s11 + $0x8] sm:$0xf]
      %v6105 = vld [vmem:[%s11 + $0xc] sm:$0xf]
      %v6106 = vld [vmem:[%s11 + $0x10] sm:$0xf]
      %v6107 = vld [vmem:[%s11 + $0x14] sm:$0xf]
      %v6108 = vld [vmem:[%s11 + $0x18] sm:$0xf]
      %v6109 = vld [vmem:[%s11 + $0x1c] sm:$0xf]
      %v6110 = vld [vmem:[%s11 + $0x20] sm:$0xf]
      %v6111 = vld [vmem:[%s11 + $0x24] sm:$0xf]
      %v6112 = vld [vmem:[%s11 + $0x28] sm:$0xf]
      %v6113 = vld [vmem:[%s11 + $0x2c] sm:$0xf]
      %v6114 = vld [vmem:[%s11 + $0x30] sm:$0xf]
      %v6115 = vld [vmem:[%s11 + $0x34] sm:$0xf]
      %v6116 = vld [vmem:[%s11 + $0x38] sm:$0xf]
      %v6117 = vld [vmem:[%s12] sm:$0x1]
      %v6119 = vlaneseq
      %v6120 = vshrl.u32 %v6119, 7
      %v6121 = vsub.s32 0, %v6120
      %v6122 = vrot.slane %v6117, %v6121
      %v6139 = vunpack.c.l.b16 %v6102
      %v6140 = vunpack.c.l.b16 %v6103
      %v6141 = vunpack.c.l.b16 %v6104
      %v6142 = vunpack.c.l.b16 %v6105
      %v6143 = vunpack.c.l.b16 %v6106
      %v6144 = vunpack.c.l.b16 %v6107
      %v6145 = vunpack.c.l.b16 %v6108
      %v6146 = vunpack.c.l.b16 %v6109
      %v6147 = vunpack.c.l.b16 %v6110
      %v6148 = vunpack.c.l.b16 %v6111
      %v6149 = vunpack.c.l.b16 %v6112
      %v6150 = vunpack.c.l.b16 %v6113
      %v6151 = vunpack.c.l.b16 %v6114
      %v6152 = vunpack.c.l.b16 %v6115
      %v6153 = vunpack.c.l.b16 %v6116
      %v6154 = vpack.c.b16 %v6140, %v6139
      %v6155 = vpack.c.b16 %v6142, %v6141
      %v6156 = vpack.c.b16 %v6144, %v6143
      %v6157 = vpack.c.b16 %v6146, %v6145
      %v6158 = vpack.c.b16 %v6148, %v6147
      %v6159 = vpack.c.b16 %v6150, %v6149
      %v6160 = vpack.c.b16 %v6152, %v6151
      %v6161 = vpack.c.b16 %v6153, %v6153
      %vm6169 = vcmask 982016
      %v6171 = vsel %vm6169, %v6101, 0
      %v6174 = vsel %vm3584, %v6161, 0
      %6176 = vmatprep.subr.bf16.mxu0 0
      %6177 = vmatpush1.bf16.msra.mxu0 %v6154
      %6178 = vmatprep.subr.bf16.mxu0 0
      %6179 = vmatpush1.bf16.msra.mxu0 %v6155
      %6180 = vmatprep.subr.bf16.mxu0 0
      %6181 = vmatpush1.bf16.msra.mxu0 %v6156
      %6182 = vmatprep.subr.bf16.mxu0 0
      %6183 = vmatpush1.bf16.msra.mxu0 %v6157
      %6184 = vmatprep.subr.bf16.mxu0 0
      %6185 = vmatpush1.bf16.msra.mxu0 %v6158
      %6186 = vmatprep.subr.bf16.mxu0 0
      %6187 = vmatpush1.bf16.msra.mxu0 %v6159
      %6188 = vmatprep.subr.bf16.mxu0 0
      %6189 = vmatpush1.bf16.msra.mxu0 %v6160
      %6190 = vmatprep.subr.bf16.mxu0 0
      %6191 = vmatpush1.bf16.msra.mxu0 %v6174
      %6192 = vmatprep.subr.bf16.mxu0 0
      %6193 = vmatpush1.bf16.msra.mxu0 0
      %6194 = vmatprep.subr.bf16.mxu0 0
      %6195 = vmatpush1.bf16.msra.mxu0 0
      %6196 = vmatprep.subr.bf16.mxu0 0
      %6197 = vmatpush1.bf16.msra.mxu0 0
      %6198 = vmatprep.subr.bf16.mxu0 0
      %6199 = vmatpush1.bf16.msra.mxu0 0
      %6200 = vmatprep.subr.bf16.mxu0 0
      %6201 = vmatpush1.bf16.msra.mxu0 0
      %6202 = vmatprep.subr.bf16.mxu0 0
      %6203 = vmatpush1.bf16.msra.mxu0 0
      %6204 = vmatprep.subr.bf16.mxu0 0
      %6205 = vmatpush1.bf16.msra.mxu0 0
      %6206 = vmatprep.subr.bf16.mxu0 0
      %6207 = vmatpush1.bf16.msra.mxu0 0
      %6208 = vmatprep.mubr.bf16.mxu0 0
      %6209 = vmatmul.mubr.bf16.gmra.mrb[0].mxu0 %v6171
      %v6210 = vpop.f32.mrb[0].mxu0
      %v6211 = vadd.f32 %v6122, %v6210
      %v6212 = vpop.f32.mrb[0].mxu0
      %v6213 = vpop.f32.mrb[0].mxu0
      %v6214 = vadd.f32 %v6122, %v6213
      %v6215 = vpop.f32.mrb[0].mxu0
      %6216 = vdwg.mxu0
      %v6217 = vmax.f32 %v6211, 0.0
      %v6218 = vmax.f32 %v6214, 0.0
      %v6219 = vpack.c.bf16 %v6218, %v6217
      %v6220 = vld [vmem:[%s13] sm:$0xf]
      %v6221 = vld [vmem:[%s13 + $0x4] sm:$0xf]
      %v6222 = vld [vmem:[%s13 + $0x8] sm:$0xf]
      %v6223 = vld [vmem:[%s13 + $0xc] sm:$0xf]
      %v6224 = vld [vmem:[%s13 + $0x10] sm:$0xf]
      %v6225 = vld [vmem:[%s13 + $0x14] sm:$0xf]
      %v6226 = vld [vmem:[%s13 + $0x18] sm:$0xf]
      %v6227 = vld [vmem:[%s13 + $0x1c] sm:$0xf]
      %v6228 = vld [vmem:[%s13 + $0x20] sm:$0xf]
      %v6229 = vld [vmem:[%s13 + $0x24] sm:$0xf]
      %v6230 = vld [vmem:[%s13 + $0x28] sm:$0x3]
      %v6231 = vld [vmem:[%s14] sm:$0x1]
      %v6233 = vlaneseq
      %v6234 = vshrl.u32 %v6233, 7
      %v6235 = vsub.s32 0, %v6234
      %v6236 = vrot.slane %v6231, %v6235
      %v6249 = vunpack.c.l.b16 %v6220
      %v6250 = vunpack.c.l.b16 %v6221
      %v6251 = vunpack.c.l.b16 %v6222
      %v6252 = vunpack.c.l.b16 %v6223
      %v6253 = vunpack.c.l.b16 %v6224
      %v6254 = vunpack.c.l.b16 %v6225
      %v6255 = vunpack.c.l.b16 %v6226
      %v6256 = vunpack.c.l.b16 %v6227
      %v6257 = vunpack.c.l.b16 %v6228
      %v6258 = vunpack.c.l.b16 %v6229
      %v6259 = vunpack.c.l.b16 %v6230
      %v6260 = vpack.c.b16 %v6250, %v6249
      %v6261 = vpack.c.b16 %v6252, %v6251
      %v6262 = vpack.c.b16 %v6254, %v6253
      %v6263 = vpack.c.b16 %v6256, %v6255
      %v6264 = vpack.c.b16 %v6258, %v6257
      %v6265 = vpack.c.b16 %v6259, %v6259
      %v6272 = vsel %vm4085, %v6219, 0
      %v6275 = vsel %vm4116, %v6265, 0
      %6277 = vmatprep.subr.bf16.mxu0 0
      %6278 = vmatpush1.bf16.msra.mxu0 %v6260
      %6279 = vmatprep.subr.bf16.mxu0 0
      %6280 = vmatpush1.bf16.msra.mxu0 %v6261
      %6281 = vmatprep.subr.bf16.mxu0 0
      %6282 = vmatpush1.bf16.msra.mxu0 %v6262
      %6283 = vmatprep.subr.bf16.mxu0 0
      %6284 = vmatpush1.bf16.msra.mxu0 %v6263
      %6285 = vmatprep.subr.bf16.mxu0 0
      %6286 = vmatpush1.bf16.msra.mxu0 %v6264
      %6287 = vmatprep.subr.bf16.mxu0 0
      %6288 = vmatpush1.bf16.msra.mxu0 %v6275
      %6289 = vmatprep.subr.bf16.mxu0 0
      %6290 = vmatpush1.bf16.msra.mxu0 0
      %6291 = vmatprep.subr.bf16.mxu0 0
      %6292 = vmatpush1.bf16.msra.mxu0 0
      %6293 = vmatprep.subr.bf16.mxu0 0
      %6294 = vmatpush1.bf16.msra.mxu0 0
      %6295 = vmatprep.subr.bf16.mxu0 0
      %6296 = vmatpush1.bf16.msra.mxu0 0
      %6297 = vmatprep.subr.bf16.mxu0 0
      %6298 = vmatpush1.bf16.msra.mxu0 0
      %6299 = vmatprep.subr.bf16.mxu0 0
      %6300 = vmatpush1.bf16.msra.mxu0 0
      %6301 = vmatprep.subr.bf16.mxu0 0
      %6302 = vmatpush1.bf16.msra.mxu0 0
      %6303 = vmatprep.subr.bf16.mxu0 0
      %6304 = vmatpush1.bf16.msra.mxu0 0
      %6305 = vmatprep.subr.bf16.mxu0 0
      %6306 = vmatpush1.bf16.msra.mxu0 0
      %6307 = vmatprep.subr.bf16.mxu0 0
      %6308 = vmatpush1.bf16.msra.mxu0 0
      %6309 = vmatprep.mubr.bf16.mxu0 0
      %6310 = vmatmul.mubr.bf16.gmra.mrb[0].mxu0 %v6272
      %v6311 = vpop.f32.mrb[0].mxu0
      %v6312 = vadd.f32 %v6236, %v6311
      %v6313 = vpop.f32.mrb[0].mxu0
      %v6314 = vpop.f32.mrb[0].mxu0
      %v6315 = vadd.f32 %v6236, %v6314
      %v6316 = vpop.f32.mrb[0].mxu0
      %6317 = vdwg.mxu0
      %6318 = vst [vmem:[%s494] sm:$0xff] %v6312
      %6319 = vst [vmem:[%s494 + $0x8] sm:$0xff] %v6315
      %p6320 = scmp.lt.s32.totalorder %s26, 1
      %s6321 = scalar_select %p6320, %s26, 1
      %s6322 = smul.addr %s6321, 2
      %s6323 = smul.addr %s6322, 8
      %s6324 = scalar_lea.vmem %s15, %s6323
      // Predicated region
      $region81: #{lenet_forward.1} parent=79 // pred_check
        %p6325 = pneg %p364
      $region82: #{lenet_forward.1} parent=79 // pred_check_branch
        %6327 = sbr.rel (%p6325) target = $region84
      $region83: #{lenet_forward.1} parent=79 // pred_region
        _
      $region84: #{lenet_forward.1} parent=79 // pred_fallthru
        _
    $region80: #{lenet_forward.1} parent=5 // pred_fallthru
      _
    %p6328 = scmp.le.s32.totalorder 2, %s21
    // Predicated region
    $region85: #{lenet_forward.1} parent=5 // pred_check
      %p6329 = pneg %p6328
    $region86: #{lenet_forward.1} parent=5 // pred_check_branch
      %6331 = sbr.rel (%p6329) target = $region88
    $region87: #{lenet_forward.1} parent=5 // pred_region
      %s6332 = ssub.s32 %s21, 2
      // Predicated region
      $region89: #{lenet_forward.1} parent=87 // pred_check
        %p6333 = pneg %p370
      $region90: #{lenet_forward.1} parent=87 // pred_check_branch
        %6335 = sbr.rel (%p6333) target = $region92
      $region91: #{lenet_forward.1} parent=87 // pred_region
        %p6336 = scmp.lt.s32.totalorder %s27, 1
        %s6337 = scalar_select %p6336, %s27, 1
        %s6338 = smul.addr %s6337, 2
        %s6339 = smul.addr %s6338, 8
        %s6340 = scalar_lea.vmem %s15, %s6339
      $region92: #{lenet_forward.1} parent=87 // pred_fallthru
        _
    $region88: #{lenet_forward.1} parent=5 // pred_fallthru
      _
  $region6: #{lenet_forward.1} parent=0 // loop_footer
    %s25 = sadd.s32 1, %s21
  $region7: #{lenet_forward.1} parent=0 // loop_footer_branch
    %20 = sbr.rel target = $region3
  $region8: #{lenet_forward.1} parent=0 // loop_exit
    _

</llo_original>
